<compile_context>
chip_gen: v7x
topology: tpu7x:2x2x1
jax: 0.10.0
libtpu: 0.0.40
codegen_flags: <defaults>
</compile_context>

<pallas_src>
import jax
import jax.numpy as jnp
from jax.experimental import pallas as pl
from jax.experimental.pallas import tpu as pltpu


# ----------------------------------------------------------------------------
# Small helpers.
# ----------------------------------------------------------------------------
def _round_up(x, m):
    return ((x + m - 1) // m) * m


def _device_caps():
    """Generation-dependent knobs: VMEM budget for pipelined blocks, the MXU
    row target (fill M = block_b*seq to at least this), whether bf16 operands
    pay off, and whether we must keep >=2 grid steps (2 TensorCores)."""
    kind = ""
    try:
        kind = jax.devices()[0].device_kind.lower()
    except Exception:
        pass
    if "v7" in kind:   # 64 MiB VMEM per TC, 2 TCs/chip
        return {"vmem_budget": 44 << 20, "mxu_rows": 256, "bf16": True, "min_blocks": 2}
    if "v6" in kind:   # 128 MiB VMEM, 2x256 MXU
        return {"vmem_budget": 96 << 20, "mxu_rows": 256, "bf16": True, "min_blocks": 1}
    if "v5" in kind:   # 128 MiB VMEM, 128x128 MXU, lowest HBM bandwidth
        return {"vmem_budget": 96 << 20, "mxu_rows": 128, "bf16": False, "min_blocks": 1}
    # Unknown chip: assume the tightest VMEM (v7x-like) and stay in f32.
    return {"vmem_budget": 44 << 20, "mxu_rows": 256, "bf16": False, "min_blocks": 2}


# ----------------------------------------------------------------------------
# Pallas kernel: fused self-attention over a block of batch rows.
#   outp_ref  : [B, S, H]        (B = block_b, H = 2*nhid), compute dtype
#   mask_ref  : [B, 1, S]        f32, 1.0 where token == <pad>
#   ws1t_ref  : [H, A_pad]       pre-transposed + zero-padded Ws1
#   ws2t_ref  : [A_pad, K_pad]   pre-transposed + zero-padded Ws2
#   out_ref   : [B, K_pad*H]     lane-dense slab (reshaped/sliced outside)
#   alphas_ref: [B, K_pad*S]     lane-dense slab (reshaped/sliced outside)
# ----------------------------------------------------------------------------
def _self_attn_kernel(outp_ref, mask_ref, ws1t_ref, ws2t_ref, out_ref, alphas_ref):
    x = outp_ref[...]                                     # [B, S, H]
    B, S, H = x.shape
    Kp = ws2t_ref.shape[1]

    # hbar = tanh(x @ Ws1^T): one [B*S, H] @ [H, A_pad] MXU matmul per block.
    x2 = x.reshape(B * S, H)
    hbar = jnp.tanh(
        jnp.dot(x2, ws1t_ref[...], preferred_element_type=jnp.float32)
    )                                                     # [B*S, A_pad] f32

    # scores = hbar @ Ws2^T
    scores = jnp.dot(
        hbar.astype(ws2t_ref.dtype), ws2t_ref[...],
        preferred_element_type=jnp.float32,
    )                                                     # [B*S, K_pad] f32
    # One small transpose on the score tile only (K_pad sublane-aligned).
    scores = jnp.swapaxes(scores.reshape(B, S, Kp), 1, 2)  # [B, K_pad, S]

    # Penalize pad positions, masked softmax over the seq axis (f32 throughout).
    pen = scores + (-10000.0) * mask_ref[...]             # [B,1,S] broadcasts over K_pad
    m = jnp.max(pen, axis=-1, keepdims=True)
    e = jnp.exp(pen - m)
    denom = jnp.sum(e, axis=-1, keepdims=True)
    alphas = e * pl.reciprocal(denom, approx=True)        # EUP reciprocal (free slot)
    # Lane-dense store of alphas: flatten (K_pad, S) -> K_pad*S.
    alphas_ref[...] = alphas.reshape(B, Kp * S).astype(alphas_ref.dtype)

    # out = alphas @ x : batched contraction over the seq axis (no transposes
    # on the big tile).
    out = jnp.einsum(
        "bks,bsh->bkh", alphas.astype(x.dtype), x,
        preferred_element_type=jnp.float32,
    )                                                     # [B, K_pad, H] f32
    # Lane-dense store: flatten (K_pad, H) -> K_pad*H.
    out_ref[...] = out.reshape(B, Kp * H).astype(out_ref.dtype)


def self_attention_pallas(outp, mask, ws1, ws2, *, block_b=None, compute_dtype=None):
    """outp: [bsz, seq, H]; mask: [bsz, 1, seq] (1.0 at <pad>);
    ws1: [A, H]; ws2: [hops, A].  Returns (out [bsz,hops,H], alphas [bsz,hops,seq])."""
    bsz, seq, H = outp.shape
    A = ws1.shape[0]
    hops = ws2.shape[0]
    caps = _device_caps()

    if compute_dtype is None:
        compute_dtype = jnp.bfloat16 if caps["bf16"] else jnp.float32
    cbytes = jnp.dtype(compute_dtype).itemsize

    # --- pad the small A / hops dims so MXU tiles are full (numerically exact:
    #     tanh(0) = 0 and zero rows/cols contribute nothing). ---------------
    A_pad = _round_up(A, 128)
    K_pad = _round_up(hops, 8)
    ws1t = jnp.zeros((H, A_pad), compute_dtype).at[:, :A].set(ws1.T.astype(compute_dtype))
    ws2t = jnp.zeros((A_pad, K_pad), compute_dtype).at[:A, :hops].set(ws2.T.astype(compute_dtype))
    outp_c = outp.astype(compute_dtype)
    mask = mask.astype(jnp.float32)

    # --- block_b: fill the MXU (block_b*seq >= mxu_rows rows), cap by VMEM. --
    def step_bytes(bb):
        in_b = bb * seq * H * cbytes + bb * 1 * seq * 4            # outp + mask blocks
        out_b = bb * K_pad * H * 4 + bb * K_pad * seq * 4          # out + alphas slabs
        w_b = H * A_pad * cbytes + A_pad * K_pad * cbytes          # weights
        return 2 * (in_b + out_b) + 2 * w_b                        # double-buffered

    if block_b is None:
        block_b = _round_up(max(8, -(-caps["mxu_rows"] // seq)), 8)
        while block_b > 8 and step_bytes(block_b) > caps["vmem_budget"]:
            block_b -= 8

    if bsz <= block_b:
        block_b = bsz
    else:
        block_b = _round_up(block_b, 8)

    # >=2 grid steps feed both TensorCores on v7x (free ~2x on small batches).
    if caps["min_blocks"] >= 2 and bsz >= 16 and pl.cdiv(bsz, block_b) < 2:
        block_b = _round_up(-(-bsz // 2), 8)

    n_blocks = pl.cdiv(bsz, block_b)
    padded = n_blocks * block_b
    if padded != bsz:
        outp_c = jnp.pad(outp_c, ((0, padded - bsz), (0, 0), (0, 0)))
        mask = jnp.pad(mask, ((0, padded - bsz), (0, 0), (0, 0)))

    vmem_limit = int(min(caps["vmem_budget"], max(32 << 20, 2 * step_bytes(block_b))))

    out_shape = (
        jax.ShapeDtypeStruct((padded, K_pad * H), jnp.float32),    # lane-dense slab
        jax.ShapeDtypeStruct((padded, K_pad * seq), jnp.float32),  # lane-dense slab
    )
    out_flat, alphas_flat = pl.pallas_call(
        _self_attn_kernel,
        out_shape=out_shape,
        grid=(n_blocks,),
        in_specs=[
            pl.BlockSpec((block_b, seq, H), lambda b: (b, 0, 0)),
            pl.BlockSpec((block_b, 1, seq), lambda b: (b, 0, 0)),
            pl.BlockSpec((H, A_pad), lambda b: (0, 0)),
            pl.BlockSpec((A_pad, K_pad), lambda b: (0, 0)),
        ],
        out_specs=(
            pl.BlockSpec((block_b, K_pad * H), lambda b: (b, 0)),
            pl.BlockSpec((block_b, K_pad * seq), lambda b: (b, 0)),
        ),
        compiler_params=pltpu.CompilerParams(
            dimension_semantics=("parallel",),
            vmem_limit_bytes=vmem_limit,
        ),
    )(outp_c, mask, ws1t, ws2t)

    out = out_flat.reshape(padded, K_pad, H)[:bsz, :hops]
    alphas = alphas_flat.reshape(padded, K_pad, seq)[:bsz, :hops]
    return out, alphas


# ----------------------------------------------------------------------------
# BiLSTM encoder in plain JAX (glue / sequential recurrence).
# ----------------------------------------------------------------------------
def _lstm_direction(x, h0, c0, w_ih, w_hh, b_ih, b_hh, reverse=False):
    """x: [seq, bsz, in_dim] -> hs: [seq, bsz, nhid]. PyTorch gate order i,f,g,o."""
    seq, bsz, in_dim = x.shape
    # Hoist the input-side projection out of the scan: one big MXU matmul over
    # the whole [seq*bsz, in_dim] slab instead of seq tiny ones.
    xw = (x.reshape(seq * bsz, in_dim) @ w_ih.T + (b_ih + b_hh)).reshape(seq, bsz, -1)
    if reverse:
        xw = xw[::-1]

    def step(carry, xw_t):
        h, c = carry
        gates = xw_t + h @ w_hh.T
        i, f, g, o = jnp.split(gates, 4, axis=-1)
        i = jax.nn.sigmoid(i)
        f = jax.nn.sigmoid(f)
        g = jnp.tanh(g)
        o = jax.nn.sigmoid(o)
        c = f * c + i * g
        h = o * jnp.tanh(c)
        return (h, c), h

    _, hs = jax.lax.scan(step, (h0, c0), xw)
    if reverse:
        hs = hs[::-1]
    return hs


def bilstm_forward(inp, hidden, params):
    """inp: [seq, bsz] int32 tokens. Returns outp [bsz, seq, 2*nhid] (pooling='all')."""
    h0, c0 = hidden                       # [nlayers*2, bsz, nhid]
    emb = params["embedding"][inp]        # [seq, bsz, ninp]  (dropout = identity, eval)
    x = emb
    for layer_idx, layer in enumerate(params["lstm"]):
        hf = _lstm_direction(
            x, h0[2 * layer_idx], c0[2 * layer_idx], *layer["fwd"], reverse=False
        )
        hb = _lstm_direction(
            x, h0[2 * layer_idx + 1], c0[2 * layer_idx + 1], *layer["bwd"], reverse=True
        )
        x = jnp.concatenate([hf, hb], axis=-1)   # [seq, bsz, 2*nhid]
    # pooling == 'all': transpose to [bsz, seq, 2*nhid]
    return jnp.transpose(x, (1, 0, 2))


# ----------------------------------------------------------------------------
# Full SelfAttentiveEncoder forward.
# ----------------------------------------------------------------------------
def self_attentive_encoder_forward(inp, hidden, params, pad_idx, *, block_b=None,
                                   compute_dtype=None):
    outp = bilstm_forward(inp, hidden, params)                  # [bsz, seq, 2*nhid]
    inp_t = jnp.transpose(inp, (1, 0))                          # [bsz, seq]
    mask = (inp_t == pad_idx).astype(jnp.float32)[:, None, :]   # [bsz, 1, seq]
    out, alphas = self_attention_pallas(
        outp, mask, params["ws1"], params["ws2"],
        block_b=block_b, compute_dtype=compute_dtype,
    )
    return out, alphas, outp


# ----------------------------------------------------------------------------
# Deterministic parameter construction + test harness.
# ----------------------------------------------------------------------------
def make_params(key, ntoken, ninp, nhid, nlayers, attn_unit, attn_hops, pad_idx):
    def u(k, shape, scale=0.1):
        return jax.random.uniform(k, shape, jnp.float32, -scale, scale)

    keys = jax.random.split(key, 3 + 8 * nlayers)
    emb = u(keys[0], (ntoken, ninp))
    emb = emb.at[pad_idx].set(0.0)                # encoder.weight.data[<pad>] = 0

    lstm_layers = []
    kidx = 3
    for layer in range(nlayers):
        in_dim = ninp if layer == 0 else 2 * nhid
        layer_p = {}
        for dname in ("fwd", "bwd"):
            w_ih = u(keys[kidx + 0], (4 * nhid, in_dim))
            w_hh = u(keys[kidx + 1], (4 * nhid, nhid))
            b_ih = u(keys[kidx + 2], (4 * nhid,))
            b_hh = u(keys[kidx + 3], (4 * nhid,))
            layer_p[dname] = (w_ih, w_hh, b_ih, b_hh)
            kidx += 4
        lstm_layers.append(layer_p)

    ws1 = u(keys[1], (attn_unit, 2 * nhid))       # nn.Linear(2*nhid, attn_unit, bias=False)
    ws2 = u(keys[2], (attn_hops, attn_unit))      # nn.Linear(attn_unit, hops, bias=False)

    return {"embedding": emb, "lstm": lstm_layers, "ws1": ws1, "ws2": ws2}


def _reference_attention(outp, mask, ws1, ws2):
    """Pure-JAX reference for the Pallas part (mirrors the PyTorch code)."""
    bsz, seq, H = outp.shape
    hops = ws2.shape[0]
    comp = outp.reshape(-1, H)
    hbar = jnp.tanh(comp @ ws1.T)
    alphas = (hbar @ ws2.T).reshape(bsz, seq, hops)
    alphas = jnp.transpose(alphas, (0, 2, 1))                        # [bsz, hops, seq]
    pen = alphas + (-10000.0) * jnp.broadcast_to(mask, alphas.shape)
    alphas = jax.nn.softmax(pen.reshape(-1, seq), axis=1).reshape(bsz, hops, seq)
    return jnp.einsum("bhs,bsd->bhd", alphas, outp), alphas


if __name__ == "__main__":
    # Small configuration consistent with the module's __init__.
    ntoken, ninp, nhid, nlayers = 50, 32, 64, 1        # H = 2*nhid = 128 (lane-aligned)
    attn_unit, attn_hops = 16, 4                       # padded to 128 / 8 in the wrapper
    seq_len, bsz = 16, 64                              # block_b*seq fills the MXU; grid >= 2
    pad_idx = 0

    key = jax.random.PRNGKey(0)
    pkey, ikey = jax.random.split(key)
    params = make_params(pkey, ntoken, ninp, nhid, nlayers, attn_unit, attn_hops, pad_idx)

    # Token input [seq_len, bsz]; make the last three positions <pad> to exercise masking.
    inp = jax.random.randint(ikey, (seq_len, bsz), 1, ntoken, dtype=jnp.int32)
    inp = inp.at[-3:, :].set(pad_idx)

    # init_hidden(bsz)
    h0 = jnp.zeros((nlayers * 2, bsz, nhid), jnp.float32)
    c0 = jnp.zeros((nlayers * 2, bsz, nhid), jnp.float32)

    out, alphas, outp = self_attentive_encoder_forward(
        inp, (h0, c0), params, pad_idx, compute_dtype=None  # auto: bf16 on v6e/v7x
    )
    out = jax.block_until_ready(out)
    alphas = jax.block_until_ready(alphas)

    # Cross-check the Pallas kernel against a pure-JAX f32 reference.
    mask = (jnp.transpose(inp, (1, 0)) == pad_idx).astype(jnp.float32)[:, None, :]
    ref_out, ref_alphas = _reference_attention(outp, mask, params["ws1"], params["ws2"])
    assert out.shape == (bsz, attn_hops, 2 * nhid)
    assert alphas.shape == (bsz, attn_hops, seq_len)

    # Tolerance: approx EUP reciprocal always; bf16 MXU operands on v6e/v7x.
    used_bf16 = _device_caps()["bf16"]
    tol = 2e-2 if used_bf16 else 2e-3
    assert jnp.allclose(out, ref_out, atol=tol, rtol=tol), float(
        jnp.max(jnp.abs(out - ref_out))
    )
    assert jnp.allclose(alphas, ref_alphas, atol=tol, rtol=tol), float(
        jnp.max(jnp.abs(alphas - ref_alphas))
    )

    print("KERNEL_OK")
</pallas_src>

<mosaic_0001>
module attributes {stable_mosaic.version = 11 : i64} {
  func.func @_self_attn_kernel(%arg0: i32, %arg1: memref<16x16x128xf32, #tpu.memory_space<vmem>>, %arg2: memref<16x1x16xf32, #tpu.memory_space<vmem>>, %arg3: memref<128x128xf32, #tpu.memory_space<vmem>>, %arg4: memref<128x8xf32, #tpu.memory_space<vmem>>, %arg5: memref<16x1024xf32, #tpu.memory_space<vmem>>, %arg6: memref<16x128xf32, #tpu.memory_space<vmem>>) attributes {dimension_semantics = [#tpu.dimension_semantics<parallel>], iteration_bounds = array<i64: 4>, scalar_prefetch = 0 : i64, scratch_operands = 0 : i64, tpu.core_type = #tpu.core_type<tc>, window_params = [{transform_indices = @transform_0, window_bounds = array<i64: 16, 16, 128>}, {transform_indices = @transform_1, window_bounds = array<i64: 16, 1, 16>}, {pipeline_mode = #tpu.pipeline_mode<synchronous>, transform_indices = @transform_2, window_bounds = array<i64: 128, 128>}, {pipeline_mode = #tpu.pipeline_mode<synchronous>, transform_indices = @transform_3, window_bounds = array<i64: 128, 8>}, {transform_indices = @transform_4, window_bounds = array<i64: 16, 1024>}, {transform_indices = @transform_5, window_bounds = array<i64: 16, 128>}]} {
    %c0 = arith.constant 0 : index
    %c0_0 = arith.constant 0 : index
    %c0_1 = arith.constant 0 : index
    %0 = vector.load %arg1[%c0, %c0_0, %c0_1] : memref<16x16x128xf32, #tpu.memory_space<vmem>>, vector<16x16x128xf32>
    %1 = vector.shape_cast %0 : vector<16x16x128xf32> to vector<256x128xf32>
    %c0_2 = arith.constant 0 : index
    %c0_3 = arith.constant 0 : index
    %2 = vector.load %arg3[%c0_2, %c0_3] : memref<128x128xf32, #tpu.memory_space<vmem>>, vector<128x128xf32>
    %cst = arith.constant dense<0.000000e+00> : vector<256x128xf32>
    %3 = tpu.matmul %1, %2, %cst {dimension_numbers = #tpu.dot_dimension_numbers<[1], [0], [0], [1], [0, 0, 1, 1], [], []>} : vector<256x128xf32>, vector<128x128xf32>, vector<256x128xf32> -> vector<256x128xf32>
    %4 = math.tanh %3 : vector<256x128xf32>
    %c0_4 = arith.constant 0 : index
    %c0_5 = arith.constant 0 : index
    %5 = vector.load %arg4[%c0_4, %c0_5] : memref<128x8xf32, #tpu.memory_space<vmem>>, vector<128x8xf32>
    %cst_6 = arith.constant dense<0.000000e+00> : vector<256x8xf32>
    %6 = tpu.matmul %4, %5, %cst_6 {dimension_numbers = #tpu.dot_dimension_numbers<[1], [0], [0], [1], [0, 0, 1, 1], [], []>} : vector<256x128xf32>, vector<128x8xf32>, vector<256x8xf32> -> vector<256x8xf32>
    %7 = vector.shape_cast %6 : vector<256x8xf32> to vector<16x16x8xf32>
    %8 = tpu.transpose %7, [0, 2, 1] : vector<16x16x8xf32> -> vector<16x8x16xf32>
    %c0_7 = arith.constant 0 : index
    %c0_8 = arith.constant 0 : index
    %c0_9 = arith.constant 0 : index
    %9 = vector.load %arg2[%c0_7, %c0_8, %c0_9] : memref<16x1x16xf32, #tpu.memory_space<vmem>>, vector<16x1x16xf32>
    %cst_10 = arith.constant -1.000000e+04 : f32
    %10 = vector.broadcast %cst_10 : f32 to vector<16x1x16xf32>
    %11 = arith.mulf %10, %9 : vector<16x1x16xf32>
    %12 = vector.broadcast %11 : vector<16x1x16xf32> to vector<16x8x16xf32>
    %13 = arith.addf %8, %12 : vector<16x8x16xf32>
    %cst_11 = arith.constant dense<0xFF800000> : vector<16x8xf32>
    %14 = vector.multi_reduction <maximumf>, %13, %cst_11 [2] : vector<16x8x16xf32> to vector<16x8xf32>
    %15 = vector.shape_cast %14 : vector<16x8xf32> to vector<16x8x1xf32>
    %16 = vector.broadcast %15 : vector<16x8x1xf32> to vector<16x8x16xf32>
    %17 = arith.subf %13, %16 : vector<16x8x16xf32>
    %18 = math.exp %17 : vector<16x8x16xf32>
    %cst_12 = arith.constant dense<0.000000e+00> : vector<16x8xf32>
    %19 = vector.multi_reduction <add>, %18, %cst_12 [2] : vector<16x8x16xf32> to vector<16x8xf32>
    %20 = vector.shape_cast %19 : vector<16x8xf32> to vector<16x8x1xf32>
    %21 = tpu.reciprocal %20 {approx = true} : vector<16x8x1xf32> -> vector<16x8x1xf32>
    %22 = vector.broadcast %21 : vector<16x8x1xf32> to vector<16x8x16xf32>
    %23 = arith.mulf %18, %22 : vector<16x8x16xf32>
    %24 = vector.shape_cast %23 : vector<16x8x16xf32> to vector<16x128xf32>
    %c0_13 = arith.constant 0 : index
    %c0_14 = arith.constant 0 : index
    %25 = vector.load %arg6[%c0_13, %c0_14] : memref<16x128xf32, #tpu.memory_space<vmem>>, vector<16x128xf32>
    tpu.vector_store %arg6[%c0_13, %c0_14], %24 {strides = array<i32>} : memref<16x128xf32, #tpu.memory_space<vmem>>, vector<16x128xf32>,
    "tpu.trace_start"() <{level = 10 : i32, message = "bks,bsh->bkh"}> : () -> ()
    %cst_15 = arith.constant dense<0.000000e+00> : vector<16x8x128xf32>
    %26 = tpu.matmul %23, %0, %cst_15 {dimension_numbers = #tpu.dot_dimension_numbers<[2], [1], [1], [2], [0, 0, 0, 1, 1, 2], [0], [0]>} : vector<16x8x16xf32>, vector<16x16x128xf32>, vector<16x8x128xf32> -> vector<16x8x128xf32>
    "tpu.trace_stop"() : () -> ()
    %27 = vector.shape_cast %26 : vector<16x8x128xf32> to vector<16x1024xf32>
    %c0_16 = arith.constant 0 : index
    %c0_17 = arith.constant 0 : index
    %28 = vector.load %arg5[%c0_16, %c0_17] : memref<16x1024xf32, #tpu.memory_space<vmem>>, vector<16x1024xf32>
    tpu.vector_store %arg5[%c0_16, %c0_17], %27 {strides = array<i32>} : memref<16x1024xf32, #tpu.memory_space<vmem>>, vector<16x1024xf32>,
    return
  }
  func.func @transform_0(%arg0: i32) -> (i32, i32, i32) {
    %c0_i32 = arith.constant 0 : i32
    %c0_i32_0 = arith.constant 0 : i32
    %c0_i32_1 = arith.constant 0 : i32
    return %arg0, %c0_i32, %c0_i32_0 : i32, i32, i32
  }
  func.func @transform_1(%arg0: i32) -> (i32, i32, i32) {
    %c0_i32 = arith.constant 0 : i32
    %c0_i32_0 = arith.constant 0 : i32
    %c0_i32_1 = arith.constant 0 : i32
    return %arg0, %c0_i32, %c0_i32_0 : i32, i32, i32
  }
  func.func @transform_2(%arg0: i32) -> (i32, i32) {
    %c0_i32 = arith.constant 0 : i32
    %c0_i32_0 = arith.constant 0 : i32
    %c0_i32_1 = arith.constant 0 : i32
    return %c0_i32, %c0_i32_0 : i32, i32
  }
  func.func @transform_3(%arg0: i32) -> (i32, i32) {
    %c0_i32 = arith.constant 0 : i32
    %c0_i32_0 = arith.constant 0 : i32
    %c0_i32_1 = arith.constant 0 : i32
    return %c0_i32, %c0_i32_0 : i32, i32
  }
  func.func @transform_4(%arg0: i32) -> (i32, i32) {
    %c0_i32 = arith.constant 0 : i32
    %c0_i32_0 = arith.constant 0 : i32
    return %arg0, %c0_i32 : i32, i32
  }
  func.func @transform_5(%arg0: i32) -> (i32, i32) {
    %c0_i32 = arith.constant 0 : i32
    %c0_i32_0 = arith.constant 0 : i32
    return %arg0, %c0_i32 : i32, i32
  }
}

</mosaic_0001>

<llo_original>
// kernel: tpu_custom_call.1
$region0: #{tpu_custom_call.1}
  #allocation0 [shape = 'u32[]', space=smem, size = 0x4, offset = 0x4, fixed_abs, tag = 'smem constant byte address 0x4 - core index']
  #allocation1 [shape = 'u32[144,128]{1,0:T(1,128)}', space=vmem, size = 0x12000, scoped, tag = 'internal scratch']
  %s0 = inlined_call_operand.hbm [shape: f32[64,16,128], index: 0, kind: input, shape index: {}]
  %s1 = inlined_call_operand.vmem [shape: f32[64,1,16], index: 1, kind: input, shape index: {}]
  %s2 = inlined_call_operand.vmem [shape: f32[128,128], index: 2, kind: input, shape index: {}]
  %s3 = inlined_call_operand.vmem [shape: f32[128,8], index: 3, kind: input, shape index: {}]
  %s4 = inlined_call_operand.hbm [shape: f32[64,1024], index: 4, kind: output, shape index: {0}]
  %s5 = inlined_call_operand.hbm [shape: f32[64,128], index: 5, kind: output, shape index: {1}]
  %6 = xla_tuple %s4, %s5
  %s7 = sld [smem:[#allocation0]]
  $region61: #{tpu_custom_call.1} parent=0
    _
  %s9 = ssub.s32 1, %s7
  %s10 = scalar_select 0, %s9, %s7
  $region1: #{tpu_custom_call.1} parent=0
    #allocation2 [shape = 'u8[262144]{0}', space=vmem, size = 0x40000, scoped, tag = 'input window, operand 0']
    #allocation3 [shape = 's32[2]{0}', space=sflag, size = 0x8, scoped, tag = 'scoped memory for tpu_custom_call.1']
    #allocation4 [shape = 's32[2]{0}', space=sflag, size = 0x8, scoped, tag = 'scoped memory for tpu_custom_call.1']
    #allocation5 [shape = 'u8[131072]{0}', space=vmem, size = 0x20000, scoped, tag = 'output window, operand 0']
    #allocation6 [shape = 'u8[16384]{0}', space=vmem, size = 0x4000, scoped, tag = 'output window, operand 1']
    #allocation7 [shape = 's32[2]{0}', space=sflag, size = 0x8, scoped, tag = 'scoped memory for tpu_custom_call.1']
    %11 = vsyncpa [#allocation3], 0
    %s12 = scalar_lea.sflag [#allocation3], 1
    %13 = vsyncpa %s12, 0
    %14 = vsyncpa [#allocation4], 0
    %s15 = scalar_lea.sflag [#allocation4], 1
    %16 = vsyncpa %s15, 0
    %17 = vsyncpa [#allocation7], 0
    %s18 = scalar_lea.sflag [#allocation7], 1
    %19 = vsyncpa %s18, 0
    loop: start=0, step=1, limit=6
    $region2: #{tpu_custom_call.1} parent=1 // loop_pre_header
      _
    $region3: #{tpu_custom_call.1} parent=1 // loop_header
      %s21 = sphi 0, %s25
      %p22 = scmp.ge.s32.totalorder %s21, 6
      %s31 = sphi 0, %s33
      %s34 = sphi 0, %s31
      %s35 = sphi 0, %s34
      %s51 = sphi 0, %s35
      %s57 = sphi 0, %s59
      %s60 = sphi 0, %s57
      %s61 = sphi 0, %s60
      %s77 = sphi 0, %s61
      %s81 = sphi 0, %s81
      %s83 = sphi 0, %s81
      %s84 = sphi 0, %s83
      %s98 = sphi 0, %s84
      %s102 = sphi 0, %s102
      %s104 = sphi 0, %s102
      %s105 = sphi 0, %s104
      %s119 = sphi 0, %s105
      %s125 = sphi 0, %s127
      %s128 = sphi 0, %s125
      %s129 = sphi 0, %s128
      %s145 = sphi 0, %s129
      %s151 = sphi 0, %s153
      %s154 = sphi 0, %s151
      %s155 = sphi 0, %s154
      %s171 = sphi 0, %s155
    $region4: #{tpu_custom_call.1} parent=1 // loop_header_branch
      %24 = sbr.rel (%p22) target = $region8
    $region5: #{tpu_custom_call.1} parent=1 // loop_body
      %s26 = ssub.s32 %s21, 1
      %s27 = ssub.s32 %s21, 2
      %s28 = sadd.s32 %s21, 1
      %s29 = ssub.s32 %s21, %s28
      %p30 = scmp.eq.s32.totalorder %s29, 0
      %s32 = sadd.s32 %s31, 1
      %s33 = scalar_select %p30, %s31, %s32
      %p36 = pneg %p30
      %p37 = scmp.eq.s32.totalorder %s21, 3
      %p38 = por %p36, %p37
      %p39 = scmp.ne.s32.totalorder %s31, %s34
      %p40 = scmp.eq.s32.totalorder %s21, 0
      %p41 = por %p39, %p40
      %p42 = scmp.ne.s32.totalorder %s31, %s34
      %p43 = scmp.eq.s32.totalorder %s26, 3
      %p44 = por %p42, %p43
      %p45 = scmp.ne.s32.totalorder %s34, %s35
      %p46 = scmp.eq.s32.totalorder %s26, 0
      %p47 = por %p45, %p46
      %p48 = scmp.ne.s32.totalorder %s34, %s35
      %p49 = scmp.eq.s32.totalorder %s27, 3
      %p50 = por %p48, %p49
      %p52 = scmp.ne.s32.totalorder %s35, %s51
      %p53 = scmp.eq.s32.totalorder %s27, 0
      %p54 = por %p52, %p53
      %s55 = ssub.s32 %s21, %s28
      %p56 = scmp.eq.s32.totalorder %s55, 0
      %s58 = sadd.s32 %s57, 1
      %s59 = scalar_select %p56, %s57, %s58
      %p62 = pneg %p56
      %p63 = scmp.eq.s32.totalorder %s21, 3
      %p64 = por %p62, %p63
      %p65 = scmp.ne.s32.totalorder %s57, %s60
      %p66 = scmp.eq.s32.totalorder %s21, 0
      %p67 = por %p65, %p66
      %p68 = scmp.ne.s32.totalorder %s57, %s60
      %p69 = scmp.eq.s32.totalorder %s26, 3
      %p70 = por %p68, %p69
      %p71 = scmp.ne.s32.totalorder %s60, %s61
      %p72 = scmp.eq.s32.totalorder %s26, 0
      %p73 = por %p71, %p72
      %p74 = scmp.ne.s32.totalorder %s60, %s61
      %p75 = scmp.eq.s32.totalorder %s27, 3
      %p76 = por %p74, %p75
      %p78 = scmp.ne.s32.totalorder %s61, %s77
      %p79 = scmp.eq.s32.totalorder %s27, 0
      %p80 = por %p78, %p79
      %s82 = sadd.s32 %s81, 1
      %p85 = scmp.eq.s32.totalorder %s21, 3
      %p86 = scmp.ne.s32.totalorder %s81, %s83
      %p87 = scmp.eq.s32.totalorder %s21, 0
      %p88 = por %p86, %p87
      %p89 = scmp.ne.s32.totalorder %s81, %s83
      %p90 = scmp.eq.s32.totalorder %s26, 3
      %p91 = por %p89, %p90
      %p92 = scmp.ne.s32.totalorder %s83, %s84
      %p93 = scmp.eq.s32.totalorder %s26, 0
      %p94 = por %p92, %p93
      %p95 = scmp.ne.s32.totalorder %s83, %s84
      %p96 = scmp.eq.s32.totalorder %s27, 3
      %p97 = por %p95, %p96
      %p99 = scmp.ne.s32.totalorder %s84, %s98
      %p100 = scmp.eq.s32.totalorder %s27, 0
      %p101 = por %p99, %p100
      %s103 = sadd.s32 %s102, 1
      %p106 = scmp.eq.s32.totalorder %s21, 3
      %p107 = scmp.ne.s32.totalorder %s102, %s104
      %p108 = scmp.eq.s32.totalorder %s21, 0
      %p109 = por %p107, %p108
      %p110 = scmp.ne.s32.totalorder %s102, %s104
      %p111 = scmp.eq.s32.totalorder %s26, 3
      %p112 = por %p110, %p111
      %p113 = scmp.ne.s32.totalorder %s104, %s105
      %p114 = scmp.eq.s32.totalorder %s26, 0
      %p115 = por %p113, %p114
      %p116 = scmp.ne.s32.totalorder %s104, %s105
      %p117 = scmp.eq.s32.totalorder %s27, 3
      %p118 = por %p116, %p117
      %p120 = scmp.ne.s32.totalorder %s105, %s119
      %p121 = scmp.eq.s32.totalorder %s27, 0
      %p122 = por %p120, %p121
      %s123 = ssub.s32 %s21, %s28
      %p124 = scmp.eq.s32.totalorder %s123, 0
      %s126 = sadd.s32 %s125, 1
      %s127 = scalar_select %p124, %s125, %s126
      %p130 = pneg %p124
      %p131 = scmp.eq.s32.totalorder %s21, 3
      %p132 = por %p130, %p131
      %p133 = scmp.ne.s32.totalorder %s125, %s128
      %p134 = scmp.eq.s32.totalorder %s21, 0
      %p135 = por %p133, %p134
      %p136 = scmp.ne.s32.totalorder %s125, %s128
      %p137 = scmp.eq.s32.totalorder %s26, 3
      %p138 = por %p136, %p137
      %p139 = scmp.ne.s32.totalorder %s128, %s129
      %p140 = scmp.eq.s32.totalorder %s26, 0
      %p141 = por %p139, %p140
      %p142 = scmp.ne.s32.totalorder %s128, %s129
      %p143 = scmp.eq.s32.totalorder %s27, 3
      %p144 = por %p142, %p143
      %p146 = scmp.ne.s32.totalorder %s129, %s145
      %p147 = scmp.eq.s32.totalorder %s27, 0
      %p148 = por %p146, %p147
      %s149 = ssub.s32 %s21, %s28
      %p150 = scmp.eq.s32.totalorder %s149, 0
      %s152 = sadd.s32 %s151, 1
      %s153 = scalar_select %p150, %s151, %s152
      %p156 = pneg %p150
      %p157 = scmp.eq.s32.totalorder %s21, 3
      %p158 = por %p156, %p157
      %p159 = scmp.ne.s32.totalorder %s151, %s154
      %p160 = scmp.eq.s32.totalorder %s21, 0
      %p161 = por %p159, %p160
      %p162 = scmp.ne.s32.totalorder %s151, %s154
      %p163 = scmp.eq.s32.totalorder %s26, 3
      %p164 = por %p162, %p163
      %p165 = scmp.ne.s32.totalorder %s154, %s155
      %p166 = scmp.eq.s32.totalorder %s26, 0
      %p167 = por %p165, %p166
      %p168 = scmp.ne.s32.totalorder %s154, %s155
      %p169 = scmp.eq.s32.totalorder %s27, 3
      %p170 = por %p168, %p169
      %p172 = scmp.ne.s32.totalorder %s155, %s171
      %p173 = scmp.eq.s32.totalorder %s27, 0
      %p174 = por %p172, %p173
      %p175 = scmp.le.s32.totalorder 1, %s21
      %p176 = scmp.lt.s32.totalorder %s21, 5
      %p177 = pnand %p175, %p176
      %p178 = pneg %p177
      // Predicated region
      $region9: #{tpu_custom_call.1} parent=5 // pred_check
        _
      $region10: #{tpu_custom_call.1} parent=5 // pred_check_branch
        %180 = sbr.rel (%p177) target = $region12
      $region11: #{tpu_custom_call.1} parent=5 // pred_region
        %s181 = ssub.s32 %s21, 1
        // Predicated region
        $region13: #{tpu_custom_call.1} parent=11 // pred_check
          %p182 = pneg %p94
        $region14: #{tpu_custom_call.1} parent=11 // pred_check_branch
          %184 = sbr.rel (%p182) target = $region16
        $region15: #{tpu_custom_call.1} parent=11 // pred_region
          _
        $region16: #{tpu_custom_call.1} parent=11 // pred_fallthru
          _
        // Predicated region
        $region17: #{tpu_custom_call.1} parent=11 // pred_check
          %p185 = pneg %p115
        $region18: #{tpu_custom_call.1} parent=11 // pred_check_branch
          %187 = sbr.rel (%p185) target = $region20
        $region19: #{tpu_custom_call.1} parent=11 // pred_region
          _
        $region20: #{tpu_custom_call.1} parent=11 // pred_fallthru
          _
      $region12: #{tpu_custom_call.1} parent=5 // pred_fallthru
        _
      %p188 = scmp.lt.s32.totalorder %s21, 4
      // Predicated region
      $region21: #{tpu_custom_call.1} parent=5 // pred_check
        %p189 = pneg %p188
      $region22: #{tpu_custom_call.1} parent=5 // pred_check_branch
        %191 = sbr.rel (%p189) target = $region24
      $region23: #{tpu_custom_call.1} parent=5 // pred_region
        // Predicated region
        $region25: #{tpu_custom_call.1} parent=23 // pred_check
          %p192 = pneg %p41
        $region26: #{tpu_custom_call.1} parent=23 // pred_check_branch
          %194 = sbr.rel (%p192) target = $region28
        $region27: #{tpu_custom_call.1} parent=23 // pred_region
          %s195 = sand.u32 %s31, 1
          %s196 = scalar_lea.sflag [#allocation3], %s195
          %s197 = sand.u32 %s31, 1
          %s198 = smul.addr %s197, 256
          %s199 = scalar_lea.vmem [#allocation2], %s198
          %s200 = smul.u32 16, %s21
          %s202 = ssub.s32 4096, 4096
          %203 = vsyncadd %s196, %s202
          %s204 = smul.addr %s200, 2
          %s205 = smul.addr %s204, 128
          %s206 = scalar_lea.hbm %s0, %s205
          %s207 = sshll.u32 %s199, 4
          %s208 = int_to_ptr.vmem [resolvable:$true] %s207
          %213 = dma.hbm_to_vmem [thread:$0]  %s206, 4096, %s208, %s196, 128, 128, 8
        $region28: #{tpu_custom_call.1} parent=23 // pred_fallthru
          _
        // Predicated region
        $region29: #{tpu_custom_call.1} parent=23 // pred_check
          %p214 = pneg %p67
        $region30: #{tpu_custom_call.1} parent=23 // pred_check_branch
          %216 = sbr.rel (%p214) target = $region32
        $region31: #{tpu_custom_call.1} parent=23 // pred_region
          %s217 = smul.u32 16, %s21
          %p218 = scmp.lt.s32.totalorder %s217, 63
          %s219 = scalar_select %p218, %s217, 63
          %s220 = scalar_lea.vmem %s1, %s219
          %s221 = smul.u32 16, %s21
        $region32: #{tpu_custom_call.1} parent=23 // pred_fallthru
          _
      $region24: #{tpu_custom_call.1} parent=5 // pred_fallthru
        _
      %p222 = scmp.le.s32.totalorder 1, %s21
      %p223 = scmp.lt.s32.totalorder %s21, 5
      %p224 = pnand %p222, %p223
      %p225 = pneg %p224
      // Predicated region
      $region33: #{tpu_custom_call.1} parent=5 // pred_check
        _
      $region34: #{tpu_custom_call.1} parent=5 // pred_check_branch
        %227 = sbr.rel (%p224) target = $region36
      $region35: #{tpu_custom_call.1} parent=5 // pred_region
        %s228 = ssub.s32 %s21, 1
        %s229 = sand.u32 %s34, 1
        %s230 = scalar_lea.sflag [#allocation3], %s229
        %s231 = sand.u32 %s34, 1
        %s232 = smul.addr %s231, 256
        %s233 = scalar_lea.vmem [#allocation2], %s232
        // Predicated region
        $region37: #{tpu_custom_call.1} parent=35 // pred_check
          %p234 = pneg %p47
        $region38: #{tpu_custom_call.1} parent=35 // pred_check_branch
          %236 = sbr.rel (%p234) target = $region40
        $region39: #{tpu_custom_call.1} parent=35 // pred_region
          %237 = dma.done %s230, 4096
        $region40: #{tpu_custom_call.1} parent=35 // pred_fallthru
          _
        %s238 = sand.u32 %s34, 1
        %s239 = scalar_lea.sflag [#allocation3], %s238
        %s240 = sand.u32 %s34, 1
        %s241 = smul.addr %s240, 256
        %s242 = scalar_lea.vmem [#allocation2], %s241
        %p243 = pneg %p47
        %p244 = pneg %p44
        %s245 = smul.u32 16, %s26
        %p246 = scmp.lt.s32.totalorder %s245, 63
        %s247 = scalar_select %p246, %s245, 63
        %s248 = scalar_lea.vmem %s1, %s247
        %p249 = pneg %p73
        %p250 = pneg %p70
        %p251 = pneg %p94
        %p252 = pneg %p91
        %p253 = pneg %p115
        %p254 = pneg %p112
        %p255 = pneg %p141
        %p256 = pneg %p138
        %s257 = sand.u32 %s128, 1
        %s258 = scalar_lea.sflag [#allocation4], %s257
        %s259 = sand.u32 %s128, 1
        %s260 = smul.addr %s259, 128
        %s261 = scalar_lea.vmem [#allocation5], %s260
        %p262 = pneg %p167
        %p263 = pneg %p164
        %s264 = sand.u32 %s154, 1
        %s265 = scalar_lea.sflag [#allocation7], %s264
        %s266 = sand.u32 %s154, 1
        %s267 = smul.addr %s266, 16
        %s268 = scalar_lea.vmem [#allocation6], %s267
        %s269 = smul.u32 16, %s26
        %s270 = smul.u32 16, %s26
        %p271 = scmp.lt.s32.totalorder %s270, 63
        %s272 = scalar_select %p271, %s270, 63
        %s273 = scalar_lea.vmem %s1, %s272
        %s274 = smul.u32 16, %s26
        %s275 = smul.u32 2, %s26
        %s276 = smul.u32 2, %s26
        %v277 = vld [vmem:[%s233] sm:$0xff]
        %v278 = vld [vmem:[%s233 + $0x8] sm:$0xff]
        %v279 = vld [vmem:[%s233 + $0x10] sm:$0xff]
        %v280 = vld [vmem:[%s233 + $0x18] sm:$0xff]
        %v281 = vld [vmem:[%s233 + $0x20] sm:$0xff]
        %v282 = vld [vmem:[%s233 + $0x28] sm:$0xff]
        %v283 = vld [vmem:[%s233 + $0x30] sm:$0xff]
        %v284 = vld [vmem:[%s233 + $0x38] sm:$0xff]
        %v285 = vld [vmem:[%s233 + $0x40] sm:$0xff]
        %v286 = vld [vmem:[%s233 + $0x48] sm:$0xff]
        %v287 = vld [vmem:[%s233 + $0x50] sm:$0xff]
        %v288 = vld [vmem:[%s233 + $0x58] sm:$0xff]
        %v289 = vld [vmem:[%s233 + $0x60] sm:$0xff]
        %v290 = vld [vmem:[%s233 + $0x68] sm:$0xff]
        %v291 = vld [vmem:[%s233 + $0x70] sm:$0xff]
        %v292 = vld [vmem:[%s233 + $0x78] sm:$0xff]
        %v293 = vld [vmem:[%s233 + $0x80] sm:$0xff]
        %v294 = vld [vmem:[%s233 + $0x88] sm:$0xff]
        %v295 = vld [vmem:[%s233 + $0x90] sm:$0xff]
        %v296 = vld [vmem:[%s233 + $0x98] sm:$0xff]
        %v297 = vld [vmem:[%s233 + $0xa0] sm:$0xff]
        %v298 = vld [vmem:[%s233 + $0xa8] sm:$0xff]
        %v299 = vld [vmem:[%s233 + $0xb0] sm:$0xff]
        %v300 = vld [vmem:[%s233 + $0xb8] sm:$0xff]
        %v301 = vld [vmem:[%s233 + $0xc0] sm:$0xff]
        %v302 = vld [vmem:[%s233 + $0xc8] sm:$0xff]
        %v303 = vld [vmem:[%s233 + $0xd0] sm:$0xff]
        %v304 = vld [vmem:[%s233 + $0xd8] sm:$0xff]
        %v305 = vld [vmem:[%s233 + $0xe0] sm:$0xff]
        %v306 = vld [vmem:[%s233 + $0xe8] sm:$0xff]
        %v307 = vld [vmem:[%s233 + $0xf0] sm:$0xff]
        %v308 = vld [vmem:[%s233 + $0xf8] sm:$0xff]
        %v309 = vld [vmem:[%s2] sm:$0xff]
        %v310 = vld [vmem:[%s2 + $0x8] sm:$0xff]
        %v311 = vld [vmem:[%s2 + $0x10] sm:$0xff]
        %v312 = vld [vmem:[%s2 + $0x18] sm:$0xff]
        %v313 = vld [vmem:[%s2 + $0x20] sm:$0xff]
        %v314 = vld [vmem:[%s2 + $0x28] sm:$0xff]
        %v315 = vld [vmem:[%s2 + $0x30] sm:$0xff]
        %v316 = vld [vmem:[%s2 + $0x38] sm:$0xff]
        %v317 = vld [vmem:[%s2 + $0x40] sm:$0xff]
        %v318 = vld [vmem:[%s2 + $0x48] sm:$0xff]
        %v319 = vld [vmem:[%s2 + $0x50] sm:$0xff]
        %v320 = vld [vmem:[%s2 + $0x58] sm:$0xff]
        %v321 = vld [vmem:[%s2 + $0x60] sm:$0xff]
        %v322 = vld [vmem:[%s2 + $0x68] sm:$0xff]
        %v323 = vld [vmem:[%s2 + $0x70] sm:$0xff]
        %v324 = vld [vmem:[%s2 + $0x78] sm:$0xff]
        %325 = vmatprep.subr.mxu0 0.0
        %326 = vmatpush1.msra.mxu0 %v309
        %327 = vmatprep.subr.mxu0 0.0
        %328 = vmatpush1.msra.mxu0 %v310
        %329 = vmatprep.subr.mxu0 0.0
        %330 = vmatpush1.msra.mxu0 %v311
        %331 = vmatprep.subr.mxu0 0.0
        %332 = vmatpush1.msra.mxu0 %v312
        %333 = vmatprep.subr.mxu0 0.0
        %334 = vmatpush1.msra.mxu0 %v313
        %335 = vmatprep.subr.mxu0 0.0
        %336 = vmatpush1.msra.mxu0 %v314
        %337 = vmatprep.subr.mxu0 0.0
        %338 = vmatpush1.msra.mxu0 %v315
        %339 = vmatprep.subr.mxu0 0.0
        %340 = vmatpush1.msra.mxu0 %v316
        %341 = vmatprep.subr.mxu0 0.0
        %342 = vmatpush1.msra.mxu0 %v317
        %343 = vmatprep.subr.mxu0 0.0
        %344 = vmatpush1.msra.mxu0 %v318
        %345 = vmatprep.subr.mxu0 0.0
        %346 = vmatpush1.msra.mxu0 %v319
        %347 = vmatprep.subr.mxu0 0.0
        %348 = vmatpush1.msra.mxu0 %v320
        %349 = vmatprep.subr.mxu0 0.0
        %350 = vmatpush1.msra.mxu0 %v321
        %351 = vmatprep.subr.mxu0 0.0
        %352 = vmatpush1.msra.mxu0 %v322
        %353 = vmatprep.subr.mxu0 0.0
        %354 = vmatpush1.msra.mxu0 %v323
        %355 = vmatprep.subr.mxu0 0.0
        %356 = vmatpush1.msra.mxu0 %v324
        %357 = vmatprep.subr.mxu0 0.0
        %358 = vmatpush1.msra.mxu0 0.0
        %359 = vmatprep.subr.mxu0 0.0
        %360 = vmatpush1.msra.mxu0 0.0
        %361 = vmatprep.subr.mxu0 0.0
        %362 = vmatpush1.msra.mxu0 0.0
        %363 = vmatprep.subr.mxu0 0.0
        %364 = vmatpush1.msra.mxu0 0.0
        %365 = vmatprep.subr.mxu0 0.0
        %366 = vmatpush1.msra.mxu0 0.0
        %367 = vmatprep.subr.mxu0 0.0
        %368 = vmatpush1.msra.mxu0 0.0
        %369 = vmatprep.subr.mxu0 0.0
        %370 = vmatpush1.msra.mxu0 0.0
        %371 = vmatprep.subr.mxu0 0.0
        %372 = vmatpush1.msra.mxu0 0.0
        %373 = vmatprep.subr.mxu0 0.0
        %374 = vmatpush1.msra.mxu0 0.0
        %375 = vmatprep.subr.mxu0 0.0
        %376 = vmatpush1.msra.mxu0 0.0
        %377 = vmatprep.subr.mxu0 0.0
        %378 = vmatpush1.msra.mxu0 0.0
        %379 = vmatprep.subr.mxu0 0.0
        %380 = vmatpush1.msra.mxu0 0.0
        %381 = vmatprep.subr.mxu0 0.0
        %382 = vmatpush1.msra.mxu0 0.0
        %383 = vmatprep.subr.mxu0 0.0
        %384 = vmatpush1.msra.mxu0 0.0
        %385 = vmatprep.subr.mxu0 0.0
        %386 = vmatpush1.msra.mxu0 0.0
        %387 = vmatprep.subr.mxu0 0.0
        %388 = vmatpush1.msra.mxu0 0.0
        %389 = vmatprep.mubr.f32.mxu0 0.0
        %390 = vmatmul.mubr.f32.gmra.mrb[0].mxu0 %v277
        %v391 = vpop.f32.mrb[0].mxu0
        %v392 = vadd.f32 0.0, %v391
        %v393 = vpop.f32.mrb[0].mxu0
        %394 = vmatprep.mubr.f32.mxu0 0.0
        %395 = vmatmul.mubr.f32.gmra.mrb[0].mxu0 %v278
        %v396 = vpop.f32.mrb[0].mxu0
        %v397 = vadd.f32 0.0, %v396
        %v398 = vpop.f32.mrb[0].mxu0
        %399 = vmatprep.mubr.f32.mxu0 0.0
        %400 = vmatmul.mubr.f32.gmra.mrb[0].mxu0 %v279
        %v401 = vpop.f32.mrb[0].mxu0
        %v402 = vadd.f32 0.0, %v401
        %v403 = vpop.f32.mrb[0].mxu0
        %404 = vmatprep.mubr.f32.mxu0 0.0
        %405 = vmatmul.mubr.f32.gmra.mrb[0].mxu0 %v280
        %v406 = vpop.f32.mrb[0].mxu0
        %v407 = vadd.f32 0.0, %v406
        %v408 = vpop.f32.mrb[0].mxu0
        %409 = vmatprep.mubr.f32.mxu0 0.0
        %410 = vmatmul.mubr.f32.gmra.mrb[0].mxu0 %v281
        %v411 = vpop.f32.mrb[0].mxu0
        %v412 = vadd.f32 0.0, %v411
        %v413 = vpop.f32.mrb[0].mxu0
        %414 = vmatprep.mubr.f32.mxu0 0.0
        %415 = vmatmul.mubr.f32.gmra.mrb[0].mxu0 %v282
        %v416 = vpop.f32.mrb[0].mxu0
        %v417 = vadd.f32 0.0, %v416
        %v418 = vpop.f32.mrb[0].mxu0
        %419 = vmatprep.mubr.f32.mxu0 0.0
        %420 = vmatmul.mubr.f32.gmra.mrb[0].mxu0 %v283
        %v421 = vpop.f32.mrb[0].mxu0
        %v422 = vadd.f32 0.0, %v421
        %v423 = vpop.f32.mrb[0].mxu0
        %424 = vmatprep.mubr.f32.mxu0 0.0
        %425 = vmatmul.mubr.f32.gmra.mrb[0].mxu0 %v284
        %v426 = vpop.f32.mrb[0].mxu0
        %v427 = vadd.f32 0.0, %v426
        %v428 = vpop.f32.mrb[0].mxu0
        %429 = vmatprep.mubr.f32.mxu0 0.0
        %430 = vmatmul.mubr.f32.gmra.mrb[0].mxu0 %v285
        %v431 = vpop.f32.mrb[0].mxu0
        %v432 = vadd.f32 0.0, %v431
        %v433 = vpop.f32.mrb[0].mxu0
        %434 = vmatprep.mubr.f32.mxu0 0.0
        %435 = vmatmul.mubr.f32.gmra.mrb[0].mxu0 %v286
        %v436 = vpop.f32.mrb[0].mxu0
        %v437 = vadd.f32 0.0, %v436
        %v438 = vpop.f32.mrb[0].mxu0
        %439 = vmatprep.mubr.f32.mxu0 0.0
        %440 = vmatmul.mubr.f32.gmra.mrb[0].mxu0 %v287
        %v441 = vpop.f32.mrb[0].mxu0
        %v442 = vadd.f32 0.0, %v441
        %v443 = vpop.f32.mrb[0].mxu0
        %444 = vmatprep.mubr.f32.mxu0 0.0
        %445 = vmatmul.mubr.f32.gmra.mrb[0].mxu0 %v288
        %v446 = vpop.f32.mrb[0].mxu0
        %v447 = vadd.f32 0.0, %v446
        %v448 = vpop.f32.mrb[0].mxu0
        %449 = vmatprep.mubr.f32.mxu0 0.0
        %450 = vmatmul.mubr.f32.gmra.mrb[0].mxu0 %v289
        %v451 = vpop.f32.mrb[0].mxu0
        %v452 = vadd.f32 0.0, %v451
        %v453 = vpop.f32.mrb[0].mxu0
        %454 = vmatprep.mubr.f32.mxu0 0.0
        %455 = vmatmul.mubr.f32.gmra.mrb[0].mxu0 %v290
        %v456 = vpop.f32.mrb[0].mxu0
        %v457 = vadd.f32 0.0, %v456
        %v458 = vpop.f32.mrb[0].mxu0
        %459 = vmatprep.mubr.f32.mxu0 0.0
        %460 = vmatmul.mubr.f32.gmra.mrb[0].mxu0 %v291
        %v461 = vpop.f32.mrb[0].mxu0
        %v462 = vadd.f32 0.0, %v461
        %v463 = vpop.f32.mrb[0].mxu0
        %464 = vmatprep.mubr.f32.mxu0 0.0
        %465 = vmatmul.mubr.f32.gmra.mrb[0].mxu0 %v292
        %v466 = vpop.f32.mrb[0].mxu0
        %v467 = vadd.f32 0.0, %v466
        %v468 = vpop.f32.mrb[0].mxu0
        %469 = vmatprep.mubr.f32.mxu0 0.0
        %470 = vmatmul.mubr.f32.gmra.mrb[0].mxu0 %v293
        %v471 = vpop.f32.mrb[0].mxu0
        %v472 = vadd.f32 0.0, %v471
        %v473 = vpop.f32.mrb[0].mxu0
        %474 = vmatprep.mubr.f32.mxu0 0.0
        %475 = vmatmul.mubr.f32.gmra.mrb[0].mxu0 %v294
        %v476 = vpop.f32.mrb[0].mxu0
        %v477 = vadd.f32 0.0, %v476
        %v478 = vpop.f32.mrb[0].mxu0
        %479 = vmatprep.mubr.f32.mxu0 0.0
        %480 = vmatmul.mubr.f32.gmra.mrb[0].mxu0 %v295
        %v481 = vpop.f32.mrb[0].mxu0
        %v482 = vadd.f32 0.0, %v481
        %v483 = vpop.f32.mrb[0].mxu0
        %484 = vmatprep.mubr.f32.mxu0 0.0
        %485 = vmatmul.mubr.f32.gmra.mrb[0].mxu0 %v296
        %v486 = vpop.f32.mrb[0].mxu0
        %v487 = vadd.f32 0.0, %v486
        %v488 = vpop.f32.mrb[0].mxu0
        %489 = vmatprep.mubr.f32.mxu0 0.0
        %490 = vmatmul.mubr.f32.gmra.mrb[0].mxu0 %v297
        %v491 = vpop.f32.mrb[0].mxu0
        %v492 = vadd.f32 0.0, %v491
        %v493 = vpop.f32.mrb[0].mxu0
        %494 = vmatprep.mubr.f32.mxu0 0.0
        %495 = vmatmul.mubr.f32.gmra.mrb[0].mxu0 %v298
        %v496 = vpop.f32.mrb[0].mxu0
        %v497 = vadd.f32 0.0, %v496
        %v498 = vpop.f32.mrb[0].mxu0
        %499 = vmatprep.mubr.f32.mxu0 0.0
        %500 = vmatmul.mubr.f32.gmra.mrb[0].mxu0 %v299
        %v501 = vpop.f32.mrb[0].mxu0
        %v502 = vadd.f32 0.0, %v501
        %v503 = vpop.f32.mrb[0].mxu0
        %504 = vmatprep.mubr.f32.mxu0 0.0
        %505 = vmatmul.mubr.f32.gmra.mrb[0].mxu0 %v300
        %v506 = vpop.f32.mrb[0].mxu0
        %v507 = vadd.f32 0.0, %v506
        %v508 = vpop.f32.mrb[0].mxu0
        %509 = vmatprep.mubr.f32.mxu0 0.0
        %510 = vmatmul.mubr.f32.gmra.mrb[0].mxu0 %v301
        %v511 = vpop.f32.mrb[0].mxu0
        %v512 = vadd.f32 0.0, %v511
        %v513 = vpop.f32.mrb[0].mxu0
        %514 = vmatprep.mubr.f32.mxu0 0.0
        %515 = vmatmul.mubr.f32.gmra.mrb[0].mxu0 %v302
        %v516 = vpop.f32.mrb[0].mxu0
        %v517 = vadd.f32 0.0, %v516
        %v518 = vpop.f32.mrb[0].mxu0
        %519 = vmatprep.mubr.f32.mxu0 0.0
        %520 = vmatmul.mubr.f32.gmra.mrb[0].mxu0 %v303
        %v521 = vpop.f32.mrb[0].mxu0
        %v522 = vadd.f32 0.0, %v521
        %v523 = vpop.f32.mrb[0].mxu0
        %524 = vmatprep.mubr.f32.mxu0 0.0
        %525 = vmatmul.mubr.f32.gmra.mrb[0].mxu0 %v304
        %v526 = vpop.f32.mrb[0].mxu0
        %v527 = vadd.f32 0.0, %v526
        %v528 = vpop.f32.mrb[0].mxu0
        %529 = vmatprep.mubr.f32.mxu0 0.0
        %530 = vmatmul.mubr.f32.gmra.mrb[0].mxu0 %v305
        %v531 = vpop.f32.mrb[0].mxu0
        %v532 = vadd.f32 0.0, %v531
        %v533 = vpop.f32.mrb[0].mxu0
        %534 = vmatprep.mubr.f32.mxu0 0.0
        %535 = vmatmul.mubr.f32.gmra.mrb[0].mxu0 %v306
        %v536 = vpop.f32.mrb[0].mxu0
        %v537 = vadd.f32 0.0, %v536
        %v538 = vpop.f32.mrb[0].mxu0
        %539 = vmatprep.mubr.f32.mxu0 0.0
        %540 = vmatmul.mubr.f32.gmra.mrb[0].mxu0 %v307
        %v541 = vpop.f32.mrb[0].mxu0
        %v542 = vadd.f32 0.0, %v541
        %v543 = vpop.f32.mrb[0].mxu0
        %544 = vmatprep.mubr.f32.mxu0 0.0
        %545 = vmatmul.mubr.f32.gmra.mrb[0].mxu0 %v308
        %v546 = vpop.f32.mrb[0].mxu0
        %v547 = vadd.f32 0.0, %v546
        %v548 = vpop.f32.mrb[0].mxu0
        %549 = vdwg.mxu0
        %v550 = vtanh.pop %v392
        %v551 = vtanh.pop %v397
        %v552 = vtanh.pop %v402
        %v553 = vtanh.pop %v407
        %v554 = vtanh.pop %v412
        %v555 = vtanh.pop %v417
        %v556 = vtanh.pop %v422
        %v557 = vtanh.pop %v427
        %v558 = vtanh.pop %v432
        %v559 = vtanh.pop %v437
        %v560 = vtanh.pop %v442
        %v561 = vtanh.pop %v447
        %v562 = vtanh.pop %v452
        %v563 = vtanh.pop %v457
        %v564 = vtanh.pop %v462
        %v565 = vtanh.pop %v467
        %v566 = vtanh.pop %v472
        %v567 = vtanh.pop %v477
        %v568 = vtanh.pop %v482
        %v569 = vtanh.pop %v487
        %v570 = vtanh.pop %v492
        %v571 = vtanh.pop %v497
        %v572 = vtanh.pop %v502
        %v573 = vtanh.pop %v507
        %v574 = vtanh.pop %v512
        %v575 = vtanh.pop %v517
        %v576 = vtanh.pop %v522
        %v577 = vtanh.pop %v527
        %v578 = vtanh.pop %v532
        %v579 = vtanh.pop %v537
        %v580 = vtanh.pop %v542
        %v581 = vtanh.pop %v547
        %v582 = vld [vmem:[%s3] sm:$0xff]
        %v583 = vld [vmem:[%s3 + $0x8] sm:$0xff]
        %v584 = vld [vmem:[%s3 + $0x10] sm:$0xff]
        %v585 = vld [vmem:[%s3 + $0x18] sm:$0xff]
        %v586 = vld [vmem:[%s3 + $0x20] sm:$0xff]
        %v587 = vld [vmem:[%s3 + $0x28] sm:$0xff]
        %v588 = vld [vmem:[%s3 + $0x30] sm:$0xff]
        %v589 = vld [vmem:[%s3 + $0x38] sm:$0xff]
        %v590 = vld [vmem:[%s3 + $0x40] sm:$0xff]
        %v591 = vld [vmem:[%s3 + $0x48] sm:$0xff]
        %v592 = vld [vmem:[%s3 + $0x50] sm:$0xff]
        %v593 = vld [vmem:[%s3 + $0x58] sm:$0xff]
        %v594 = vld [vmem:[%s3 + $0x60] sm:$0xff]
        %v595 = vld [vmem:[%s3 + $0x68] sm:$0xff]
        %v596 = vld [vmem:[%s3 + $0x70] sm:$0xff]
        %v597 = vld [vmem:[%s3 + $0x78] sm:$0xff]
        %598 = vmatprep.subr.mxu0 0.0
        %599 = vmatpush1.msra.mxu0 %v582
        %600 = vmatprep.subr.mxu0 0.0
        %601 = vmatpush1.msra.mxu0 %v583
        %602 = vmatprep.subr.mxu0 0.0
        %603 = vmatpush1.msra.mxu0 %v584
        %604 = vmatprep.subr.mxu0 0.0
        %605 = vmatpush1.msra.mxu0 %v585
        %606 = vmatprep.subr.mxu0 0.0
        %607 = vmatpush1.msra.mxu0 %v586
        %608 = vmatprep.subr.mxu0 0.0
        %609 = vmatpush1.msra.mxu0 %v587
        %610 = vmatprep.subr.mxu0 0.0
        %611 = vmatpush1.msra.mxu0 %v588
        %612 = vmatprep.subr.mxu0 0.0
        %613 = vmatpush1.msra.mxu0 %v589
        %614 = vmatprep.subr.mxu0 0.0
        %615 = vmatpush1.msra.mxu0 %v590
        %616 = vmatprep.subr.mxu0 0.0
        %617 = vmatpush1.msra.mxu0 %v591
        %618 = vmatprep.subr.mxu0 0.0
        %619 = vmatpush1.msra.mxu0 %v592
        %620 = vmatprep.subr.mxu0 0.0
        %621 = vmatpush1.msra.mxu0 %v593
        %622 = vmatprep.subr.mxu0 0.0
        %623 = vmatpush1.msra.mxu0 %v594
        %624 = vmatprep.subr.mxu0 0.0
        %625 = vmatpush1.msra.mxu0 %v595
        %626 = vmatprep.subr.mxu0 0.0
        %627 = vmatpush1.msra.mxu0 %v596
        %628 = vmatprep.subr.mxu0 0.0
        %629 = vmatpush1.msra.mxu0 %v597
        %630 = vmatprep.subr.mxu0 0.0
        %631 = vmatpush1.msra.mxu0 0.0
        %632 = vmatprep.subr.mxu0 0.0
        %633 = vmatpush1.msra.mxu0 0.0
        %634 = vmatprep.subr.mxu0 0.0
        %635 = vmatpush1.msra.mxu0 0.0
        %636 = vmatprep.subr.mxu0 0.0
        %637 = vmatpush1.msra.mxu0 0.0
        %638 = vmatprep.subr.mxu0 0.0
        %639 = vmatpush1.msra.mxu0 0.0
        %640 = vmatprep.subr.mxu0 0.0
        %641 = vmatpush1.msra.mxu0 0.0
        %642 = vmatprep.subr.mxu0 0.0
        %643 = vmatpush1.msra.mxu0 0.0
        %644 = vmatprep.subr.mxu0 0.0
        %645 = vmatpush1.msra.mxu0 0.0
        %646 = vmatprep.subr.mxu0 0.0
        %647 = vmatpush1.msra.mxu0 0.0
        %648 = vmatprep.subr.mxu0 0.0
        %649 = vmatpush1.msra.mxu0 0.0
        %650 = vmatprep.subr.mxu0 0.0
        %651 = vmatpush1.msra.mxu0 0.0
        %652 = vmatprep.subr.mxu0 0.0
        %653 = vmatpush1.msra.mxu0 0.0
        %654 = vmatprep.subr.mxu0 0.0
        %655 = vmatpush1.msra.mxu0 0.0
        %656 = vmatprep.subr.mxu0 0.0
        %657 = vmatpush1.msra.mxu0 0.0
        %658 = vmatprep.subr.mxu0 0.0
        %659 = vmatpush1.msra.mxu0 0.0
        %660 = vmatprep.subr.mxu0 0.0
        %661 = vmatpush1.msra.mxu0 0.0
        %662 = vmatprep.mubr.f32.mxu0 0.0
        %663 = vmatmul.mubr.f32.gmra.mrb[0].mxu0 %v550
        %v664 = vpop.f32.mrb[0].mxu0
        %v665 = vadd.f32 0.0, %v664
        %v666 = vpop.f32.mrb[0].mxu0
        %667 = vmatprep.mubr.f32.mxu0 0.0
        %668 = vmatmul.mubr.f32.gmra.mrb[0].mxu0 %v551
        %v669 = vpop.f32.mrb[0].mxu0
        %v670 = vadd.f32 0.0, %v669
        %v671 = vpop.f32.mrb[0].mxu0
        %672 = vmatprep.mubr.f32.mxu0 0.0
        %673 = vmatmul.mubr.f32.gmra.mrb[0].mxu0 %v552
        %v674 = vpop.f32.mrb[0].mxu0
        %v675 = vadd.f32 0.0, %v674
        %v676 = vpop.f32.mrb[0].mxu0
        %677 = vmatprep.mubr.f32.mxu0 0.0
        %678 = vmatmul.mubr.f32.gmra.mrb[0].mxu0 %v553
        %v679 = vpop.f32.mrb[0].mxu0
        %v680 = vadd.f32 0.0, %v679
        %v681 = vpop.f32.mrb[0].mxu0
        %682 = vmatprep.mubr.f32.mxu0 0.0
        %683 = vmatmul.mubr.f32.gmra.mrb[0].mxu0 %v554
        %v684 = vpop.f32.mrb[0].mxu0
        %v685 = vadd.f32 0.0, %v684
        %v686 = vpop.f32.mrb[0].mxu0
        %687 = vmatprep.mubr.f32.mxu0 0.0
        %688 = vmatmul.mubr.f32.gmra.mrb[0].mxu0 %v555
        %v689 = vpop.f32.mrb[0].mxu0
        %v690 = vadd.f32 0.0, %v689
        %v691 = vpop.f32.mrb[0].mxu0
        %692 = vmatprep.mubr.f32.mxu0 0.0
        %693 = vmatmul.mubr.f32.gmra.mrb[0].mxu0 %v556
        %v694 = vpop.f32.mrb[0].mxu0
        %v695 = vadd.f32 0.0, %v694
        %v696 = vpop.f32.mrb[0].mxu0
        %697 = vmatprep.mubr.f32.mxu0 0.0
        %698 = vmatmul.mubr.f32.gmra.mrb[0].mxu0 %v557
        %v699 = vpop.f32.mrb[0].mxu0
        %v700 = vadd.f32 0.0, %v699
        %v701 = vpop.f32.mrb[0].mxu0
        %702 = vmatprep.mubr.f32.mxu0 0.0
        %703 = vmatmul.mubr.f32.gmra.mrb[0].mxu0 %v558
        %v704 = vpop.f32.mrb[0].mxu0
        %v705 = vadd.f32 0.0, %v704
        %v706 = vpop.f32.mrb[0].mxu0
        %707 = vmatprep.mubr.f32.mxu0 0.0
        %708 = vmatmul.mubr.f32.gmra.mrb[0].mxu0 %v559
        %v709 = vpop.f32.mrb[0].mxu0
        %v710 = vadd.f32 0.0, %v709
        %v711 = vpop.f32.mrb[0].mxu0
        %712 = vmatprep.mubr.f32.mxu0 0.0
        %713 = vmatmul.mubr.f32.gmra.mrb[0].mxu0 %v560
        %v714 = vpop.f32.mrb[0].mxu0
        %v715 = vadd.f32 0.0, %v714
        %v716 = vpop.f32.mrb[0].mxu0
        %717 = vmatprep.mubr.f32.mxu0 0.0
        %718 = vmatmul.mubr.f32.gmra.mrb[0].mxu0 %v561
        %v719 = vpop.f32.mrb[0].mxu0
        %v720 = vadd.f32 0.0, %v719
        %v721 = vpop.f32.mrb[0].mxu0
        %722 = vmatprep.mubr.f32.mxu0 0.0
        %723 = vmatmul.mubr.f32.gmra.mrb[0].mxu0 %v562
        %v724 = vpop.f32.mrb[0].mxu0
        %v725 = vadd.f32 0.0, %v724
        %v726 = vpop.f32.mrb[0].mxu0
        %727 = vmatprep.mubr.f32.mxu0 0.0
        %728 = vmatmul.mubr.f32.gmra.mrb[0].mxu0 %v563
        %v729 = vpop.f32.mrb[0].mxu0
        %v730 = vadd.f32 0.0, %v729
        %v731 = vpop.f32.mrb[0].mxu0
        %732 = vmatprep.mubr.f32.mxu0 0.0
        %733 = vmatmul.mubr.f32.gmra.mrb[0].mxu0 %v564
        %v734 = vpop.f32.mrb[0].mxu0
        %v735 = vadd.f32 0.0, %v734
        %v736 = vpop.f32.mrb[0].mxu0
        %737 = vmatprep.mubr.f32.mxu0 0.0
        %738 = vmatmul.mubr.f32.gmra.mrb[0].mxu0 %v565
        %v739 = vpop.f32.mrb[0].mxu0
        %v740 = vadd.f32 0.0, %v739
        %v741 = vpop.f32.mrb[0].mxu0
        %742 = vmatprep.mubr.f32.mxu0 0.0
        %743 = vmatmul.mubr.f32.gmra.mrb[0].mxu0 %v566
        %v744 = vpop.f32.mrb[0].mxu0
        %v745 = vadd.f32 0.0, %v744
        %v746 = vpop.f32.mrb[0].mxu0
        %747 = vmatprep.mubr.f32.mxu0 0.0
        %748 = vmatmul.mubr.f32.gmra.mrb[0].mxu0 %v567
        %v749 = vpop.f32.mrb[0].mxu0
        %v750 = vadd.f32 0.0, %v749
        %v751 = vpop.f32.mrb[0].mxu0
        %752 = vmatprep.mubr.f32.mxu0 0.0
        %753 = vmatmul.mubr.f32.gmra.mrb[0].mxu0 %v568
        %v754 = vpop.f32.mrb[0].mxu0
        %v755 = vadd.f32 0.0, %v754
        %v756 = vpop.f32.mrb[0].mxu0
        %757 = vmatprep.mubr.f32.mxu0 0.0
        %758 = vmatmul.mubr.f32.gmra.mrb[0].mxu0 %v569
        %v759 = vpop.f32.mrb[0].mxu0
        %v760 = vadd.f32 0.0, %v759
        %v761 = vpop.f32.mrb[0].mxu0
        %762 = vmatprep.mubr.f32.mxu0 0.0
        %763 = vmatmul.mubr.f32.gmra.mrb[0].mxu0 %v570
        %v764 = vpop.f32.mrb[0].mxu0
        %v765 = vadd.f32 0.0, %v764
        %v766 = vpop.f32.mrb[0].mxu0
        %767 = vmatprep.mubr.f32.mxu0 0.0
        %768 = vmatmul.mubr.f32.gmra.mrb[0].mxu0 %v571
        %v769 = vpop.f32.mrb[0].mxu0
        %v770 = vadd.f32 0.0, %v769
        %v771 = vpop.f32.mrb[0].mxu0
        %772 = vmatprep.mubr.f32.mxu0 0.0
        %773 = vmatmul.mubr.f32.gmra.mrb[0].mxu0 %v572
        %v774 = vpop.f32.mrb[0].mxu0
        %v775 = vadd.f32 0.0, %v774
        %v776 = vpop.f32.mrb[0].mxu0
        %777 = vmatprep.mubr.f32.mxu0 0.0
        %778 = vmatmul.mubr.f32.gmra.mrb[0].mxu0 %v573
        %v779 = vpop.f32.mrb[0].mxu0
        %v780 = vadd.f32 0.0, %v779
        %v781 = vpop.f32.mrb[0].mxu0
        %782 = vmatprep.mubr.f32.mxu0 0.0
        %783 = vmatmul.mubr.f32.gmra.mrb[0].mxu0 %v574
        %v784 = vpop.f32.mrb[0].mxu0
        %v785 = vadd.f32 0.0, %v784
        %v786 = vpop.f32.mrb[0].mxu0
        %787 = vmatprep.mubr.f32.mxu0 0.0
        %788 = vmatmul.mubr.f32.gmra.mrb[0].mxu0 %v575
        %v789 = vpop.f32.mrb[0].mxu0
        %v790 = vadd.f32 0.0, %v789
        %v791 = vpop.f32.mrb[0].mxu0
        %792 = vmatprep.mubr.f32.mxu0 0.0
        %793 = vmatmul.mubr.f32.gmra.mrb[0].mxu0 %v576
        %v794 = vpop.f32.mrb[0].mxu0
        %v795 = vadd.f32 0.0, %v794
        %v796 = vpop.f32.mrb[0].mxu0
        %797 = vmatprep.mubr.f32.mxu0 0.0
        %798 = vmatmul.mubr.f32.gmra.mrb[0].mxu0 %v577
        %v799 = vpop.f32.mrb[0].mxu0
        %v800 = vadd.f32 0.0, %v799
        %v801 = vpop.f32.mrb[0].mxu0
        %802 = vmatprep.mubr.f32.mxu0 0.0
        %803 = vmatmul.mubr.f32.gmra.mrb[0].mxu0 %v578
        %v804 = vpop.f32.mrb[0].mxu0
        %v805 = vadd.f32 0.0, %v804
        %v806 = vpop.f32.mrb[0].mxu0
        %807 = vmatprep.mubr.f32.mxu0 0.0
        %808 = vmatmul.mubr.f32.gmra.mrb[0].mxu0 %v579
        %v809 = vpop.f32.mrb[0].mxu0
        %v810 = vadd.f32 0.0, %v809
        %v811 = vpop.f32.mrb[0].mxu0
        %812 = vmatprep.mubr.f32.mxu0 0.0
        %813 = vmatmul.mubr.f32.gmra.mrb[0].mxu0 %v580
        %v814 = vpop.f32.mrb[0].mxu0
        %v815 = vadd.f32 0.0, %v814
        %v816 = vpop.f32.mrb[0].mxu0
        %817 = vmatprep.mubr.f32.mxu0 0.0
        %818 = vmatmul.mubr.f32.gmra.mrb[0].mxu0 %v581
        %v819 = vpop.f32.mrb[0].mxu0
        %v820 = vadd.f32 0.0, %v819
        %v821 = vpop.f32.mrb[0].mxu0
        %822 = vdwg.mxu0
        %823 = vxpose.xlu0.b32.start [1/16] %v665, 128
        %824 = vxpose.xlu0.b32.cont [2/16] %v670, 128
        %825 = vxpose.xlu0.b32.cont [3/16] 0.0, 128
        %826 = vxpose.xlu0.b32.cont [4/16] 0.0, 128
        %827 = vxpose.xlu0.b32.cont [5/16] 0.0, 128
        %828 = vxpose.xlu0.b32.cont [6/16] 0.0, 128
        %829 = vxpose.xlu0.b32.cont [7/16] 0.0, 128
        %830 = vxpose.xlu0.b32.cont [8/16] 0.0, 128
        %831 = vxpose.xlu0.b32.cont [9/16] 0.0, 128
        %832 = vxpose.xlu0.b32.cont [10/16] 0.0, 128
        %833 = vxpose.xlu0.b32.cont [11/16] 0.0, 128
        %834 = vxpose.xlu0.b32.cont [12/16] 0.0, 128
        %835 = vxpose.xlu0.b32.cont [13/16] 0.0, 128
        %836 = vxpose.xlu0.b32.cont [14/16] 0.0, 128
        %837 = vxpose.xlu0.b32.cont [15/16] 0.0, 128
        %838 = vxpose.xlu0.b32.end [16/16] 0.0, 128
        %v839 = vpop.trf.xlu0
        %v840 = vpop.trf.xlu0
        %v841 = vpop.trf.xlu0
        %v842 = vpop.trf.xlu0
        %v843 = vpop.trf.xlu0
        %v844 = vpop.trf.xlu0
        %v845 = vpop.trf.xlu0
        %v846 = vpop.trf.xlu0
        %v847 = vpop.trf.xlu0
        %v848 = vpop.trf.xlu0
        %v849 = vpop.trf.xlu0
        %v850 = vpop.trf.xlu0
        %v851 = vpop.trf.xlu0
        %v852 = vpop.trf.xlu0
        %v853 = vpop.trf.xlu0
        %v854 = vpop.trf.xlu0
        %855 = vxpose.xlu0.b32.start [1/16] %v675, 128
        %856 = vxpose.xlu0.b32.cont [2/16] %v680, 128
        %857 = vxpose.xlu0.b32.cont [3/16] 0.0, 128
        %858 = vxpose.xlu0.b32.cont [4/16] 0.0, 128
        %859 = vxpose.xlu0.b32.cont [5/16] 0.0, 128
        %860 = vxpose.xlu0.b32.cont [6/16] 0.0, 128
        %861 = vxpose.xlu0.b32.cont [7/16] 0.0, 128
        %862 = vxpose.xlu0.b32.cont [8/16] 0.0, 128
        %863 = vxpose.xlu0.b32.cont [9/16] 0.0, 128
        %864 = vxpose.xlu0.b32.cont [10/16] 0.0, 128
        %865 = vxpose.xlu0.b32.cont [11/16] 0.0, 128
        %866 = vxpose.xlu0.b32.cont [12/16] 0.0, 128
        %867 = vxpose.xlu0.b32.cont [13/16] 0.0, 128
        %868 = vxpose.xlu0.b32.cont [14/16] 0.0, 128
        %869 = vxpose.xlu0.b32.cont [15/16] 0.0, 128
        %870 = vxpose.xlu0.b32.end [16/16] 0.0, 128
        %v871 = vpop.trf.xlu0
        %v872 = vpop.trf.xlu0
        %v873 = vpop.trf.xlu0
        %v874 = vpop.trf.xlu0
        %v875 = vpop.trf.xlu0
        %v876 = vpop.trf.xlu0
        %v877 = vpop.trf.xlu0
        %v878 = vpop.trf.xlu0
        %v879 = vpop.trf.xlu0
        %v880 = vpop.trf.xlu0
        %v881 = vpop.trf.xlu0
        %v882 = vpop.trf.xlu0
        %v883 = vpop.trf.xlu0
        %v884 = vpop.trf.xlu0
        %v885 = vpop.trf.xlu0
        %v886 = vpop.trf.xlu0
        %887 = vxpose.xlu0.b32.start [1/16] %v685, 128
        %888 = vxpose.xlu0.b32.cont [2/16] %v690, 128
        %889 = vxpose.xlu0.b32.cont [3/16] 0.0, 128
        %890 = vxpose.xlu0.b32.cont [4/16] 0.0, 128
        %891 = vxpose.xlu0.b32.cont [5/16] 0.0, 128
        %892 = vxpose.xlu0.b32.cont [6/16] 0.0, 128
        %893 = vxpose.xlu0.b32.cont [7/16] 0.0, 128
        %894 = vxpose.xlu0.b32.cont [8/16] 0.0, 128
        %895 = vxpose.xlu0.b32.cont [9/16] 0.0, 128
        %896 = vxpose.xlu0.b32.cont [10/16] 0.0, 128
        %897 = vxpose.xlu0.b32.cont [11/16] 0.0, 128
        %898 = vxpose.xlu0.b32.cont [12/16] 0.0, 128
        %899 = vxpose.xlu0.b32.cont [13/16] 0.0, 128
        %900 = vxpose.xlu0.b32.cont [14/16] 0.0, 128
        %901 = vxpose.xlu0.b32.cont [15/16] 0.0, 128
        %902 = vxpose.xlu0.b32.end [16/16] 0.0, 128
        %v903 = vpop.trf.xlu0
        %v904 = vpop.trf.xlu0
        %v905 = vpop.trf.xlu0
        %v906 = vpop.trf.xlu0
        %v907 = vpop.trf.xlu0
        %v908 = vpop.trf.xlu0
        %v909 = vpop.trf.xlu0
        %v910 = vpop.trf.xlu0
        %v911 = vpop.trf.xlu0
        %v912 = vpop.trf.xlu0
        %v913 = vpop.trf.xlu0
        %v914 = vpop.trf.xlu0
        %v915 = vpop.trf.xlu0
        %v916 = vpop.trf.xlu0
        %v917 = vpop.trf.xlu0
        %v918 = vpop.trf.xlu0
        %919 = vxpose.xlu0.b32.start [1/16] %v695, 128
        %920 = vxpose.xlu0.b32.cont [2/16] %v700, 128
        %921 = vxpose.xlu0.b32.cont [3/16] 0.0, 128
        %922 = vxpose.xlu0.b32.cont [4/16] 0.0, 128
        %923 = vxpose.xlu0.b32.cont [5/16] 0.0, 128
        %924 = vxpose.xlu0.b32.cont [6/16] 0.0, 128
        %925 = vxpose.xlu0.b32.cont [7/16] 0.0, 128
        %926 = vxpose.xlu0.b32.cont [8/16] 0.0, 128
        %927 = vxpose.xlu0.b32.cont [9/16] 0.0, 128
        %928 = vxpose.xlu0.b32.cont [10/16] 0.0, 128
        %929 = vxpose.xlu0.b32.cont [11/16] 0.0, 128
        %930 = vxpose.xlu0.b32.cont [12/16] 0.0, 128
        %931 = vxpose.xlu0.b32.cont [13/16] 0.0, 128
        %932 = vxpose.xlu0.b32.cont [14/16] 0.0, 128
        %933 = vxpose.xlu0.b32.cont [15/16] 0.0, 128
        %934 = vxpose.xlu0.b32.end [16/16] 0.0, 128
        %v935 = vpop.trf.xlu0
        %v936 = vpop.trf.xlu0
        %v937 = vpop.trf.xlu0
        %v938 = vpop.trf.xlu0
        %v939 = vpop.trf.xlu0
        %v940 = vpop.trf.xlu0
        %v941 = vpop.trf.xlu0
        %v942 = vpop.trf.xlu0
        %v943 = vpop.trf.xlu0
        %v944 = vpop.trf.xlu0
        %v945 = vpop.trf.xlu0
        %v946 = vpop.trf.xlu0
        %v947 = vpop.trf.xlu0
        %v948 = vpop.trf.xlu0
        %v949 = vpop.trf.xlu0
        %v950 = vpop.trf.xlu0
        %951 = vxpose.xlu0.b32.start [1/16] %v705, 128
        %952 = vxpose.xlu0.b32.cont [2/16] %v710, 128
        %953 = vxpose.xlu0.b32.cont [3/16] 0.0, 128
        %954 = vxpose.xlu0.b32.cont [4/16] 0.0, 128
        %955 = vxpose.xlu0.b32.cont [5/16] 0.0, 128
        %956 = vxpose.xlu0.b32.cont [6/16] 0.0, 128
        %957 = vxpose.xlu0.b32.cont [7/16] 0.0, 128
        %958 = vxpose.xlu0.b32.cont [8/16] 0.0, 128
        %959 = vxpose.xlu0.b32.cont [9/16] 0.0, 128
        %960 = vxpose.xlu0.b32.cont [10/16] 0.0, 128
        %961 = vxpose.xlu0.b32.cont [11/16] 0.0, 128
        %962 = vxpose.xlu0.b32.cont [12/16] 0.0, 128
        %963 = vxpose.xlu0.b32.cont [13/16] 0.0, 128
        %964 = vxpose.xlu0.b32.cont [14/16] 0.0, 128
        %965 = vxpose.xlu0.b32.cont [15/16] 0.0, 128
        %966 = vxpose.xlu0.b32.end [16/16] 0.0, 128
        %v967 = vpop.trf.xlu0
        %v968 = vpop.trf.xlu0
        %v969 = vpop.trf.xlu0
        %v970 = vpop.trf.xlu0
        %v971 = vpop.trf.xlu0
        %v972 = vpop.trf.xlu0
        %v973 = vpop.trf.xlu0
        %v974 = vpop.trf.xlu0
        %v975 = vpop.trf.xlu0
        %v976 = vpop.trf.xlu0
        %v977 = vpop.trf.xlu0
        %v978 = vpop.trf.xlu0
        %v979 = vpop.trf.xlu0
        %v980 = vpop.trf.xlu0
        %v981 = vpop.trf.xlu0
        %v982 = vpop.trf.xlu0
        %983 = vxpose.xlu0.b32.start [1/16] %v715, 128
        %984 = vxpose.xlu0.b32.cont [2/16] %v720, 128
        %985 = vxpose.xlu0.b32.cont [3/16] 0.0, 128
        %986 = vxpose.xlu0.b32.cont [4/16] 0.0, 128
        %987 = vxpose.xlu0.b32.cont [5/16] 0.0, 128
        %988 = vxpose.xlu0.b32.cont [6/16] 0.0, 128
        %989 = vxpose.xlu0.b32.cont [7/16] 0.0, 128
        %990 = vxpose.xlu0.b32.cont [8/16] 0.0, 128
        %991 = vxpose.xlu0.b32.cont [9/16] 0.0, 128
        %992 = vxpose.xlu0.b32.cont [10/16] 0.0, 128
        %993 = vxpose.xlu0.b32.cont [11/16] 0.0, 128
        %994 = vxpose.xlu0.b32.cont [12/16] 0.0, 128
        %995 = vxpose.xlu0.b32.cont [13/16] 0.0, 128
        %996 = vxpose.xlu0.b32.cont [14/16] 0.0, 128
        %997 = vxpose.xlu0.b32.cont [15/16] 0.0, 128
        %998 = vxpose.xlu0.b32.end [16/16] 0.0, 128
        %v999 = vpop.trf.xlu0
        %v1000 = vpop.trf.xlu0
        %v1001 = vpop.trf.xlu0
        %v1002 = vpop.trf.xlu0
        %v1003 = vpop.trf.xlu0
        %v1004 = vpop.trf.xlu0
        %v1005 = vpop.trf.xlu0
        %v1006 = vpop.trf.xlu0
        %v1007 = vpop.trf.xlu0
        %v1008 = vpop.trf.xlu0
        %v1009 = vpop.trf.xlu0
        %v1010 = vpop.trf.xlu0
        %v1011 = vpop.trf.xlu0
        %v1012 = vpop.trf.xlu0
        %v1013 = vpop.trf.xlu0
        %v1014 = vpop.trf.xlu0
        %1015 = vxpose.xlu0.b32.start [1/16] %v725, 128
        %1016 = vxpose.xlu0.b32.cont [2/16] %v730, 128
        %1017 = vxpose.xlu0.b32.cont [3/16] 0.0, 128
        %1018 = vxpose.xlu0.b32.cont [4/16] 0.0, 128
        %1019 = vxpose.xlu0.b32.cont [5/16] 0.0, 128
        %1020 = vxpose.xlu0.b32.cont [6/16] 0.0, 128
        %1021 = vxpose.xlu0.b32.cont [7/16] 0.0, 128
        %1022 = vxpose.xlu0.b32.cont [8/16] 0.0, 128
        %1023 = vxpose.xlu0.b32.cont [9/16] 0.0, 128
        %1024 = vxpose.xlu0.b32.cont [10/16] 0.0, 128
        %1025 = vxpose.xlu0.b32.cont [11/16] 0.0, 128
        %1026 = vxpose.xlu0.b32.cont [12/16] 0.0, 128
        %1027 = vxpose.xlu0.b32.cont [13/16] 0.0, 128
        %1028 = vxpose.xlu0.b32.cont [14/16] 0.0, 128
        %1029 = vxpose.xlu0.b32.cont [15/16] 0.0, 128
        %1030 = vxpose.xlu0.b32.end [16/16] 0.0, 128
        %v1031 = vpop.trf.xlu0
        %v1032 = vpop.trf.xlu0
        %v1033 = vpop.trf.xlu0
        %v1034 = vpop.trf.xlu0
        %v1035 = vpop.trf.xlu0
        %v1036 = vpop.trf.xlu0
        %v1037 = vpop.trf.xlu0
        %v1038 = vpop.trf.xlu0
        %v1039 = vpop.trf.xlu0
        %v1040 = vpop.trf.xlu0
        %v1041 = vpop.trf.xlu0
        %v1042 = vpop.trf.xlu0
        %v1043 = vpop.trf.xlu0
        %v1044 = vpop.trf.xlu0
        %v1045 = vpop.trf.xlu0
        %v1046 = vpop.trf.xlu0
        %1047 = vxpose.xlu0.b32.start [1/16] %v735, 128
        %1048 = vxpose.xlu0.b32.cont [2/16] %v740, 128
        %1049 = vxpose.xlu0.b32.cont [3/16] 0.0, 128
        %1050 = vxpose.xlu0.b32.cont [4/16] 0.0, 128
        %1051 = vxpose.xlu0.b32.cont [5/16] 0.0, 128
        %1052 = vxpose.xlu0.b32.cont [6/16] 0.0, 128
        %1053 = vxpose.xlu0.b32.cont [7/16] 0.0, 128
        %1054 = vxpose.xlu0.b32.cont [8/16] 0.0, 128
        %1055 = vxpose.xlu0.b32.cont [9/16] 0.0, 128
        %1056 = vxpose.xlu0.b32.cont [10/16] 0.0, 128
        %1057 = vxpose.xlu0.b32.cont [11/16] 0.0, 128
        %1058 = vxpose.xlu0.b32.cont [12/16] 0.0, 128
        %1059 = vxpose.xlu0.b32.cont [13/16] 0.0, 128
        %1060 = vxpose.xlu0.b32.cont [14/16] 0.0, 128
        %1061 = vxpose.xlu0.b32.cont [15/16] 0.0, 128
        %1062 = vxpose.xlu0.b32.end [16/16] 0.0, 128
        %v1063 = vpop.trf.xlu0
        %v1064 = vpop.trf.xlu0
        %v1065 = vpop.trf.xlu0
        %v1066 = vpop.trf.xlu0
        %v1067 = vpop.trf.xlu0
        %v1068 = vpop.trf.xlu0
        %v1069 = vpop.trf.xlu0
        %v1070 = vpop.trf.xlu0
        %v1071 = vpop.trf.xlu0
        %v1072 = vpop.trf.xlu0
        %v1073 = vpop.trf.xlu0
        %v1074 = vpop.trf.xlu0
        %v1075 = vpop.trf.xlu0
        %v1076 = vpop.trf.xlu0
        %v1077 = vpop.trf.xlu0
        %v1078 = vpop.trf.xlu0
        %1079 = vxpose.xlu0.b32.start [1/16] %v745, 128
        %1080 = vxpose.xlu0.b32.cont [2/16] %v750, 128
        %1081 = vxpose.xlu0.b32.cont [3/16] 0.0, 128
        %1082 = vxpose.xlu0.b32.cont [4/16] 0.0, 128
        %1083 = vxpose.xlu0.b32.cont [5/16] 0.0, 128
        %1084 = vxpose.xlu0.b32.cont [6/16] 0.0, 128
        %1085 = vxpose.xlu0.b32.cont [7/16] 0.0, 128
        %1086 = vxpose.xlu0.b32.cont [8/16] 0.0, 128
        %1087 = vxpose.xlu0.b32.cont [9/16] 0.0, 128
        %1088 = vxpose.xlu0.b32.cont [10/16] 0.0, 128
        %1089 = vxpose.xlu0.b32.cont [11/16] 0.0, 128
        %1090 = vxpose.xlu0.b32.cont [12/16] 0.0, 128
        %1091 = vxpose.xlu0.b32.cont [13/16] 0.0, 128
        %1092 = vxpose.xlu0.b32.cont [14/16] 0.0, 128
        %1093 = vxpose.xlu0.b32.cont [15/16] 0.0, 128
        %1094 = vxpose.xlu0.b32.end [16/16] 0.0, 128
        %v1095 = vpop.trf.xlu0
        %v1096 = vpop.trf.xlu0
        %v1097 = vpop.trf.xlu0
        %v1098 = vpop.trf.xlu0
        %v1099 = vpop.trf.xlu0
        %v1100 = vpop.trf.xlu0
        %v1101 = vpop.trf.xlu0
        %v1102 = vpop.trf.xlu0
        %v1103 = vpop.trf.xlu0
        %v1104 = vpop.trf.xlu0
        %v1105 = vpop.trf.xlu0
        %v1106 = vpop.trf.xlu0
        %v1107 = vpop.trf.xlu0
        %v1108 = vpop.trf.xlu0
        %v1109 = vpop.trf.xlu0
        %v1110 = vpop.trf.xlu0
        %1111 = vxpose.xlu0.b32.start [1/16] %v755, 128
        %1112 = vxpose.xlu0.b32.cont [2/16] %v760, 128
        %1113 = vxpose.xlu0.b32.cont [3/16] 0.0, 128
        %1114 = vxpose.xlu0.b32.cont [4/16] 0.0, 128
        %1115 = vxpose.xlu0.b32.cont [5/16] 0.0, 128
        %1116 = vxpose.xlu0.b32.cont [6/16] 0.0, 128
        %1117 = vxpose.xlu0.b32.cont [7/16] 0.0, 128
        %1118 = vxpose.xlu0.b32.cont [8/16] 0.0, 128
        %1119 = vxpose.xlu0.b32.cont [9/16] 0.0, 128
        %1120 = vxpose.xlu0.b32.cont [10/16] 0.0, 128
        %1121 = vxpose.xlu0.b32.cont [11/16] 0.0, 128
        %1122 = vxpose.xlu0.b32.cont [12/16] 0.0, 128
        %1123 = vxpose.xlu0.b32.cont [13/16] 0.0, 128
        %1124 = vxpose.xlu0.b32.cont [14/16] 0.0, 128
        %1125 = vxpose.xlu0.b32.cont [15/16] 0.0, 128
        %1126 = vxpose.xlu0.b32.end [16/16] 0.0, 128
        %v1127 = vpop.trf.xlu0
        %v1128 = vpop.trf.xlu0
        %v1129 = vpop.trf.xlu0
        %v1130 = vpop.trf.xlu0
        %v1131 = vpop.trf.xlu0
        %v1132 = vpop.trf.xlu0
        %v1133 = vpop.trf.xlu0
        %v1134 = vpop.trf.xlu0
        %v1135 = vpop.trf.xlu0
        %v1136 = vpop.trf.xlu0
        %v1137 = vpop.trf.xlu0
        %v1138 = vpop.trf.xlu0
        %v1139 = vpop.trf.xlu0
        %v1140 = vpop.trf.xlu0
        %v1141 = vpop.trf.xlu0
        %v1142 = vpop.trf.xlu0
        %1143 = vxpose.xlu0.b32.start [1/16] %v765, 128
        %1144 = vxpose.xlu0.b32.cont [2/16] %v770, 128
        %1145 = vxpose.xlu0.b32.cont [3/16] 0.0, 128
        %1146 = vxpose.xlu0.b32.cont [4/16] 0.0, 128
        %1147 = vxpose.xlu0.b32.cont [5/16] 0.0, 128
        %1148 = vxpose.xlu0.b32.cont [6/16] 0.0, 128
        %1149 = vxpose.xlu0.b32.cont [7/16] 0.0, 128
        %1150 = vxpose.xlu0.b32.cont [8/16] 0.0, 128
        %1151 = vxpose.xlu0.b32.cont [9/16] 0.0, 128
        %1152 = vxpose.xlu0.b32.cont [10/16] 0.0, 128
        %1153 = vxpose.xlu0.b32.cont [11/16] 0.0, 128
        %1154 = vxpose.xlu0.b32.cont [12/16] 0.0, 128
        %1155 = vxpose.xlu0.b32.cont [13/16] 0.0, 128
        %1156 = vxpose.xlu0.b32.cont [14/16] 0.0, 128
        %1157 = vxpose.xlu0.b32.cont [15/16] 0.0, 128
        %1158 = vxpose.xlu0.b32.end [16/16] 0.0, 128
        %v1159 = vpop.trf.xlu0
        %v1160 = vpop.trf.xlu0
        %v1161 = vpop.trf.xlu0
        %v1162 = vpop.trf.xlu0
        %v1163 = vpop.trf.xlu0
        %v1164 = vpop.trf.xlu0
        %v1165 = vpop.trf.xlu0
        %v1166 = vpop.trf.xlu0
        %v1167 = vpop.trf.xlu0
        %v1168 = vpop.trf.xlu0
        %v1169 = vpop.trf.xlu0
        %v1170 = vpop.trf.xlu0
        %v1171 = vpop.trf.xlu0
        %v1172 = vpop.trf.xlu0
        %v1173 = vpop.trf.xlu0
        %v1174 = vpop.trf.xlu0
        %1175 = vxpose.xlu0.b32.start [1/16] %v775, 128
        %1176 = vxpose.xlu0.b32.cont [2/16] %v780, 128
        %1177 = vxpose.xlu0.b32.cont [3/16] 0.0, 128
        %1178 = vxpose.xlu0.b32.cont [4/16] 0.0, 128
        %1179 = vxpose.xlu0.b32.cont [5/16] 0.0, 128
        %1180 = vxpose.xlu0.b32.cont [6/16] 0.0, 128
        %1181 = vxpose.xlu0.b32.cont [7/16] 0.0, 128
        %1182 = vxpose.xlu0.b32.cont [8/16] 0.0, 128
        %1183 = vxpose.xlu0.b32.cont [9/16] 0.0, 128
        %1184 = vxpose.xlu0.b32.cont [10/16] 0.0, 128
        %1185 = vxpose.xlu0.b32.cont [11/16] 0.0, 128
        %1186 = vxpose.xlu0.b32.cont [12/16] 0.0, 128
        %1187 = vxpose.xlu0.b32.cont [13/16] 0.0, 128
        %1188 = vxpose.xlu0.b32.cont [14/16] 0.0, 128
        %1189 = vxpose.xlu0.b32.cont [15/16] 0.0, 128
        %1190 = vxpose.xlu0.b32.end [16/16] 0.0, 128
        %v1191 = vpop.trf.xlu0
        %v1192 = vpop.trf.xlu0
        %v1193 = vpop.trf.xlu0
        %v1194 = vpop.trf.xlu0
        %v1195 = vpop.trf.xlu0
        %v1196 = vpop.trf.xlu0
        %v1197 = vpop.trf.xlu0
        %v1198 = vpop.trf.xlu0
        %v1199 = vpop.trf.xlu0
        %v1200 = vpop.trf.xlu0
        %v1201 = vpop.trf.xlu0
        %v1202 = vpop.trf.xlu0
        %v1203 = vpop.trf.xlu0
        %v1204 = vpop.trf.xlu0
        %v1205 = vpop.trf.xlu0
        %v1206 = vpop.trf.xlu0
        %1207 = vxpose.xlu0.b32.start [1/16] %v785, 128
        %1208 = vxpose.xlu0.b32.cont [2/16] %v790, 128
        %1209 = vxpose.xlu0.b32.cont [3/16] 0.0, 128
        %1210 = vxpose.xlu0.b32.cont [4/16] 0.0, 128
        %1211 = vxpose.xlu0.b32.cont [5/16] 0.0, 128
        %1212 = vxpose.xlu0.b32.cont [6/16] 0.0, 128
        %1213 = vxpose.xlu0.b32.cont [7/16] 0.0, 128
        %1214 = vxpose.xlu0.b32.cont [8/16] 0.0, 128
        %1215 = vxpose.xlu0.b32.cont [9/16] 0.0, 128
        %1216 = vxpose.xlu0.b32.cont [10/16] 0.0, 128
        %1217 = vxpose.xlu0.b32.cont [11/16] 0.0, 128
        %1218 = vxpose.xlu0.b32.cont [12/16] 0.0, 128
        %1219 = vxpose.xlu0.b32.cont [13/16] 0.0, 128
        %1220 = vxpose.xlu0.b32.cont [14/16] 0.0, 128
        %1221 = vxpose.xlu0.b32.cont [15/16] 0.0, 128
        %1222 = vxpose.xlu0.b32.end [16/16] 0.0, 128
        %v1223 = vpop.trf.xlu0
        %v1224 = vpop.trf.xlu0
        %v1225 = vpop.trf.xlu0
        %v1226 = vpop.trf.xlu0
        %v1227 = vpop.trf.xlu0
        %v1228 = vpop.trf.xlu0
        %v1229 = vpop.trf.xlu0
        %v1230 = vpop.trf.xlu0
        %v1231 = vpop.trf.xlu0
        %v1232 = vpop.trf.xlu0
        %v1233 = vpop.trf.xlu0
        %v1234 = vpop.trf.xlu0
        %v1235 = vpop.trf.xlu0
        %v1236 = vpop.trf.xlu0
        %v1237 = vpop.trf.xlu0
        %v1238 = vpop.trf.xlu0
        %1239 = vxpose.xlu0.b32.start [1/16] %v795, 128
        %1240 = vxpose.xlu0.b32.cont [2/16] %v800, 128
        %1241 = vxpose.xlu0.b32.cont [3/16] 0.0, 128
        %1242 = vxpose.xlu0.b32.cont [4/16] 0.0, 128
        %1243 = vxpose.xlu0.b32.cont [5/16] 0.0, 128
        %1244 = vxpose.xlu0.b32.cont [6/16] 0.0, 128
        %1245 = vxpose.xlu0.b32.cont [7/16] 0.0, 128
        %1246 = vxpose.xlu0.b32.cont [8/16] 0.0, 128
        %1247 = vxpose.xlu0.b32.cont [9/16] 0.0, 128
        %1248 = vxpose.xlu0.b32.cont [10/16] 0.0, 128
        %1249 = vxpose.xlu0.b32.cont [11/16] 0.0, 128
        %1250 = vxpose.xlu0.b32.cont [12/16] 0.0, 128
        %1251 = vxpose.xlu0.b32.cont [13/16] 0.0, 128
        %1252 = vxpose.xlu0.b32.cont [14/16] 0.0, 128
        %1253 = vxpose.xlu0.b32.cont [15/16] 0.0, 128
        %1254 = vxpose.xlu0.b32.end [16/16] 0.0, 128
        %v1255 = vpop.trf.xlu0
        %v1256 = vpop.trf.xlu0
        %v1257 = vpop.trf.xlu0
        %v1258 = vpop.trf.xlu0
        %v1259 = vpop.trf.xlu0
        %v1260 = vpop.trf.xlu0
        %v1261 = vpop.trf.xlu0
        %v1262 = vpop.trf.xlu0
        %v1263 = vpop.trf.xlu0
        %v1264 = vpop.trf.xlu0
        %v1265 = vpop.trf.xlu0
        %v1266 = vpop.trf.xlu0
        %v1267 = vpop.trf.xlu0
        %v1268 = vpop.trf.xlu0
        %v1269 = vpop.trf.xlu0
        %v1270 = vpop.trf.xlu0
        %1271 = vxpose.xlu0.b32.start [1/16] %v805, 128
        %1272 = vxpose.xlu0.b32.cont [2/16] %v810, 128
        %1273 = vxpose.xlu0.b32.cont [3/16] 0.0, 128
        %1274 = vxpose.xlu0.b32.cont [4/16] 0.0, 128
        %1275 = vxpose.xlu0.b32.cont [5/16] 0.0, 128
        %1276 = vxpose.xlu0.b32.cont [6/16] 0.0, 128
        %1277 = vxpose.xlu0.b32.cont [7/16] 0.0, 128
        %1278 = vxpose.xlu0.b32.cont [8/16] 0.0, 128
        %1279 = vxpose.xlu0.b32.cont [9/16] 0.0, 128
        %1280 = vxpose.xlu0.b32.cont [10/16] 0.0, 128
        %1281 = vxpose.xlu0.b32.cont [11/16] 0.0, 128
        %1282 = vxpose.xlu0.b32.cont [12/16] 0.0, 128
        %1283 = vxpose.xlu0.b32.cont [13/16] 0.0, 128
        %1284 = vxpose.xlu0.b32.cont [14/16] 0.0, 128
        %1285 = vxpose.xlu0.b32.cont [15/16] 0.0, 128
        %1286 = vxpose.xlu0.b32.end [16/16] 0.0, 128
        %v1287 = vpop.trf.xlu0
        %v1288 = vpop.trf.xlu0
        %v1289 = vpop.trf.xlu0
        %v1290 = vpop.trf.xlu0
        %v1291 = vpop.trf.xlu0
        %v1292 = vpop.trf.xlu0
        %v1293 = vpop.trf.xlu0
        %v1294 = vpop.trf.xlu0
        %v1295 = vpop.trf.xlu0
        %v1296 = vpop.trf.xlu0
        %v1297 = vpop.trf.xlu0
        %v1298 = vpop.trf.xlu0
        %v1299 = vpop.trf.xlu0
        %v1300 = vpop.trf.xlu0
        %v1301 = vpop.trf.xlu0
        %v1302 = vpop.trf.xlu0
        %1303 = vxpose.xlu0.b32.start [1/16] %v815, 128
        %1304 = vxpose.xlu0.b32.cont [2/16] %v820, 128
        %1305 = vxpose.xlu0.b32.cont [3/16] 0.0, 128
        %1306 = vxpose.xlu0.b32.cont [4/16] 0.0, 128
        %1307 = vxpose.xlu0.b32.cont [5/16] 0.0, 128
        %1308 = vxpose.xlu0.b32.cont [6/16] 0.0, 128
        %1309 = vxpose.xlu0.b32.cont [7/16] 0.0, 128
        %1310 = vxpose.xlu0.b32.cont [8/16] 0.0, 128
        %1311 = vxpose.xlu0.b32.cont [9/16] 0.0, 128
        %1312 = vxpose.xlu0.b32.cont [10/16] 0.0, 128
        %1313 = vxpose.xlu0.b32.cont [11/16] 0.0, 128
        %1314 = vxpose.xlu0.b32.cont [12/16] 0.0, 128
        %1315 = vxpose.xlu0.b32.cont [13/16] 0.0, 128
        %1316 = vxpose.xlu0.b32.cont [14/16] 0.0, 128
        %1317 = vxpose.xlu0.b32.cont [15/16] 0.0, 128
        %1318 = vxpose.xlu0.b32.end [16/16] 0.0, 128
        %v1319 = vpop.trf.xlu0
        %v1320 = vpop.trf.xlu0
        %v1321 = vpop.trf.xlu0
        %v1322 = vpop.trf.xlu0
        %v1323 = vpop.trf.xlu0
        %v1324 = vpop.trf.xlu0
        %v1325 = vpop.trf.xlu0
        %v1326 = vpop.trf.xlu0
        %v1327 = vpop.trf.xlu0
        %v1328 = vpop.trf.xlu0
        %v1329 = vpop.trf.xlu0
        %v1330 = vpop.trf.xlu0
        %v1331 = vpop.trf.xlu0
        %v1332 = vpop.trf.xlu0
        %v1333 = vpop.trf.xlu0
        %v1334 = vpop.trf.xlu0
        %v1335 = vld [vmem:[%s273] sm:$0x1]
        %v1336 = vld [vmem:[%s273 + $0x1] sm:$0x1]
        %v1337 = vld [vmem:[%s273 + $0x2] sm:$0x1]
        %v1338 = vld [vmem:[%s273 + $0x3] sm:$0x1]
        %v1339 = vld [vmem:[%s273 + $0x4] sm:$0x1]
        %v1340 = vld [vmem:[%s273 + $0x5] sm:$0x1]
        %v1341 = vld [vmem:[%s273 + $0x6] sm:$0x1]
        %v1342 = vld [vmem:[%s273 + $0x7] sm:$0x1]
        %v1343 = vld [vmem:[%s273 + $0x8] sm:$0x1]
        %v1344 = vld [vmem:[%s273 + $0x9] sm:$0x1]
        %v1345 = vld [vmem:[%s273 + $0xa] sm:$0x1]
        %v1346 = vld [vmem:[%s273 + $0xb] sm:$0x1]
        %v1347 = vld [vmem:[%s273 + $0xc] sm:$0x1]
        %v1348 = vld [vmem:[%s273 + $0xd] sm:$0x1]
        %v1349 = vld [vmem:[%s273 + $0xe] sm:$0x1]
        %v1350 = vld [vmem:[%s273 + $0xf] sm:$0x1]
        %v1351 = vmul.f32 %v1335, -10000.0
        %v1352 = vmul.f32 %v1336, -10000.0
        %v1353 = vmul.f32 %v1337, -10000.0
        %v1354 = vmul.f32 %v1338, -10000.0
        %v1355 = vmul.f32 %v1339, -10000.0
        %v1356 = vmul.f32 %v1340, -10000.0
        %v1357 = vmul.f32 %v1341, -10000.0
        %v1358 = vmul.f32 %v1342, -10000.0
        %v1359 = vmul.f32 %v1343, -10000.0
        %v1360 = vmul.f32 %v1344, -10000.0
        %v1361 = vmul.f32 %v1345, -10000.0
        %v1362 = vmul.f32 %v1346, -10000.0
        %v1363 = vmul.f32 %v1347, -10000.0
        %v1364 = vmul.f32 %v1348, -10000.0
        %v1365 = vmul.f32 %v1349, -10000.0
        %v1366 = vmul.f32 %v1350, -10000.0
        %v1383 = vlaneseq
        %v1384 = vshrl.u32 %v1383, 7
        %v1385 = vsub.s32 0, %v1384
        %v1386 = vrot.slane %v1351, %v1385
        %v1387 = vlaneseq
        %v1388 = vshrl.u32 %v1387, 7
        %v1389 = vsub.s32 0, %v1388
        %v1390 = vrot.slane %v1352, %v1389
        %v1391 = vlaneseq
        %v1392 = vshrl.u32 %v1391, 7
        %v1393 = vsub.s32 0, %v1392
        %v1394 = vrot.slane %v1353, %v1393
        %v1395 = vlaneseq
        %v1396 = vshrl.u32 %v1395, 7
        %v1397 = vsub.s32 0, %v1396
        %v1398 = vrot.slane %v1354, %v1397
        %v1399 = vlaneseq
        %v1400 = vshrl.u32 %v1399, 7
        %v1401 = vsub.s32 0, %v1400
        %v1402 = vrot.slane %v1355, %v1401
        %v1403 = vlaneseq
        %v1404 = vshrl.u32 %v1403, 7
        %v1405 = vsub.s32 0, %v1404
        %v1406 = vrot.slane %v1356, %v1405
        %v1407 = vlaneseq
        %v1408 = vshrl.u32 %v1407, 7
        %v1409 = vsub.s32 0, %v1408
        %v1410 = vrot.slane %v1357, %v1409
        %v1411 = vlaneseq
        %v1412 = vshrl.u32 %v1411, 7
        %v1413 = vsub.s32 0, %v1412
        %v1414 = vrot.slane %v1358, %v1413
        %v1415 = vlaneseq
        %v1416 = vshrl.u32 %v1415, 7
        %v1417 = vsub.s32 0, %v1416
        %v1418 = vrot.slane %v1359, %v1417
        %v1419 = vlaneseq
        %v1420 = vshrl.u32 %v1419, 7
        %v1421 = vsub.s32 0, %v1420
        %v1422 = vrot.slane %v1360, %v1421
        %v1423 = vlaneseq
        %v1424 = vshrl.u32 %v1423, 7
        %v1425 = vsub.s32 0, %v1424
        %v1426 = vrot.slane %v1361, %v1425
        %v1427 = vlaneseq
        %v1428 = vshrl.u32 %v1427, 7
        %v1429 = vsub.s32 0, %v1428
        %v1430 = vrot.slane %v1362, %v1429
        %v1431 = vlaneseq
        %v1432 = vshrl.u32 %v1431, 7
        %v1433 = vsub.s32 0, %v1432
        %v1434 = vrot.slane %v1363, %v1433
        %v1435 = vlaneseq
        %v1436 = vshrl.u32 %v1435, 7
        %v1437 = vsub.s32 0, %v1436
        %v1438 = vrot.slane %v1364, %v1437
        %v1439 = vlaneseq
        %v1440 = vshrl.u32 %v1439, 7
        %v1441 = vsub.s32 0, %v1440
        %v1442 = vrot.slane %v1365, %v1441
        %v1443 = vlaneseq
        %v1444 = vshrl.u32 %v1443, 7
        %v1445 = vsub.s32 0, %v1444
        %v1446 = vrot.slane %v1366, %v1445
        %v1463 = vadd.f32 %v839, %v1386
        %v1464 = vadd.f32 %v871, %v1390
        %v1465 = vadd.f32 %v903, %v1394
        %v1466 = vadd.f32 %v935, %v1398
        %v1467 = vadd.f32 %v967, %v1402
        %v1468 = vadd.f32 %v999, %v1406
        %v1469 = vadd.f32 %v1031, %v1410
        %v1470 = vadd.f32 %v1063, %v1414
        %v1471 = vadd.f32 %v1095, %v1418
        %v1472 = vadd.f32 %v1127, %v1422
        %v1473 = vadd.f32 %v1159, %v1426
        %v1474 = vadd.f32 %v1191, %v1430
        %v1475 = vadd.f32 %v1223, %v1434
        %v1476 = vadd.f32 %v1255, %v1438
        %v1477 = vadd.f32 %v1287, %v1442
        %v1478 = vadd.f32 %v1319, %v1446
        %vm1479 = vcmask 130048
        %v1480 = vsel %vm1479, %v1463, -inf
        %1481 = vmax.xlane.f32.xlu0 %v1480
        %v1482 = vpop.xlane.xlu0 %1481
        %v1483 = vsel %vm1479, %v1464, -inf
        %1484 = vmax.xlane.f32.xlu0 %v1483
        %v1485 = vpop.xlane.xlu0 %1484
        %v1486 = vsel %vm1479, %v1465, -inf
        %1487 = vmax.xlane.f32.xlu0 %v1486
        %v1488 = vpop.xlane.xlu0 %1487
        %v1489 = vsel %vm1479, %v1466, -inf
        %1490 = vmax.xlane.f32.xlu0 %v1489
        %v1491 = vpop.xlane.xlu0 %1490
        %v1492 = vsel %vm1479, %v1467, -inf
        %1493 = vmax.xlane.f32.xlu0 %v1492
        %v1494 = vpop.xlane.xlu0 %1493
        %v1495 = vsel %vm1479, %v1468, -inf
        %1496 = vmax.xlane.f32.xlu0 %v1495
        %v1497 = vpop.xlane.xlu0 %1496
        %v1498 = vsel %vm1479, %v1469, -inf
        %1499 = vmax.xlane.f32.xlu0 %v1498
        %v1500 = vpop.xlane.xlu0 %1499
        %v1501 = vsel %vm1479, %v1470, -inf
        %1502 = vmax.xlane.f32.xlu0 %v1501
        %v1503 = vpop.xlane.xlu0 %1502
        %v1504 = vsel %vm1479, %v1471, -inf
        %1505 = vmax.xlane.f32.xlu0 %v1504
        %v1506 = vpop.xlane.xlu0 %1505
        %v1507 = vsel %vm1479, %v1472, -inf
        %1508 = vmax.xlane.f32.xlu0 %v1507
        %v1509 = vpop.xlane.xlu0 %1508
        %v1510 = vsel %vm1479, %v1473, -inf
        %1511 = vmax.xlane.f32.xlu0 %v1510
        %v1512 = vpop.xlane.xlu0 %1511
        %v1513 = vsel %vm1479, %v1474, -inf
        %1514 = vmax.xlane.f32.xlu0 %v1513
        %v1515 = vpop.xlane.xlu0 %1514
        %v1516 = vsel %vm1479, %v1475, -inf
        %1517 = vmax.xlane.f32.xlu0 %v1516
        %v1518 = vpop.xlane.xlu0 %1517
        %v1519 = vsel %vm1479, %v1476, -inf
        %1520 = vmax.xlane.f32.xlu0 %v1519
        %v1521 = vpop.xlane.xlu0 %1520
        %v1522 = vsel %vm1479, %v1477, -inf
        %1523 = vmax.xlane.f32.xlu0 %v1522
        %v1524 = vpop.xlane.xlu0 %1523
        %v1525 = vsel %vm1479, %v1478, -inf
        %1526 = vmax.xlane.f32.xlu0 %v1525
        %v1527 = vpop.xlane.xlu0 %1526
        %v1528 = vsub.f32 %v1463, %v1482
        %v1529 = vsub.f32 %v1464, %v1485
        %v1530 = vsub.f32 %v1465, %v1488
        %v1531 = vsub.f32 %v1466, %v1491
        %v1532 = vsub.f32 %v1467, %v1494
        %v1533 = vsub.f32 %v1468, %v1497
        %v1534 = vsub.f32 %v1469, %v1500
        %v1535 = vsub.f32 %v1470, %v1503
        %v1536 = vsub.f32 %v1471, %v1506
        %v1537 = vsub.f32 %v1472, %v1509
        %v1538 = vsub.f32 %v1473, %v1512
        %v1539 = vsub.f32 %v1474, %v1515
        %v1540 = vsub.f32 %v1475, %v1518
        %v1541 = vsub.f32 %v1476, %v1521
        %v1542 = vsub.f32 %v1477, %v1524
        %v1543 = vsub.f32 %v1478, %v1527
        %v1544 = vmul.f32 %v1528, 1.442695
        %v1545 = vpow.pop %v1544
        %v1546 = vmul.f32 %v1529, 1.442695
        %v1547 = vpow.pop %v1546
        %v1548 = vmul.f32 %v1530, 1.442695
        %v1549 = vpow.pop %v1548
        %v1550 = vmul.f32 %v1531, 1.442695
        %v1551 = vpow.pop %v1550
        %v1552 = vmul.f32 %v1532, 1.442695
        %v1553 = vpow.pop %v1552
        %v1554 = vmul.f32 %v1533, 1.442695
        %v1555 = vpow.pop %v1554
        %v1556 = vmul.f32 %v1534, 1.442695
        %v1557 = vpow.pop %v1556
        %v1558 = vmul.f32 %v1535, 1.442695
        %v1559 = vpow.pop %v1558
        %v1560 = vmul.f32 %v1536, 1.442695
        %v1561 = vpow.pop %v1560
        %v1562 = vmul.f32 %v1537, 1.442695
        %v1563 = vpow.pop %v1562
        %v1564 = vmul.f32 %v1538, 1.442695
        %v1565 = vpow.pop %v1564
        %v1566 = vmul.f32 %v1539, 1.442695
        %v1567 = vpow.pop %v1566
        %v1568 = vmul.f32 %v1540, 1.442695
        %v1569 = vpow.pop %v1568
        %v1570 = vmul.f32 %v1541, 1.442695
        %v1571 = vpow.pop %v1570
        %v1572 = vmul.f32 %v1542, 1.442695
        %v1573 = vpow.pop %v1572
        %v1574 = vmul.f32 %v1543, 1.442695
        %v1575 = vpow.pop %v1574
        %v1576 = vsel %vm1479, %v1545, 0.0
        %1577 = vadd.xlane.f32.xlu0 %v1576
        %v1578 = vpop.xlane.xlu0 %1577
        %v1579 = vsel %vm1479, %v1547, 0.0
        %1580 = vadd.xlane.f32.xlu0 %v1579
        %v1581 = vpop.xlane.xlu0 %1580
        %v1582 = vsel %vm1479, %v1549, 0.0
        %1583 = vadd.xlane.f32.xlu0 %v1582
        %v1584 = vpop.xlane.xlu0 %1583
        %v1585 = vsel %vm1479, %v1551, 0.0
        %1586 = vadd.xlane.f32.xlu0 %v1585
        %v1587 = vpop.xlane.xlu0 %1586
        %v1588 = vsel %vm1479, %v1553, 0.0
        %1589 = vadd.xlane.f32.xlu0 %v1588
        %v1590 = vpop.xlane.xlu0 %1589
        %v1591 = vsel %vm1479, %v1555, 0.0
        %1592 = vadd.xlane.f32.xlu0 %v1591
        %v1593 = vpop.xlane.xlu0 %1592
        %v1594 = vsel %vm1479, %v1557, 0.0
        %1595 = vadd.xlane.f32.xlu0 %v1594
        %v1596 = vpop.xlane.xlu0 %1595
        %v1597 = vsel %vm1479, %v1559, 0.0
        %1598 = vadd.xlane.f32.xlu0 %v1597
        %v1599 = vpop.xlane.xlu0 %1598
        %v1600 = vsel %vm1479, %v1561, 0.0
        %1601 = vadd.xlane.f32.xlu0 %v1600
        %v1602 = vpop.xlane.xlu0 %1601
        %v1603 = vsel %vm1479, %v1563, 0.0
        %1604 = vadd.xlane.f32.xlu0 %v1603
        %v1605 = vpop.xlane.xlu0 %1604
        %v1606 = vsel %vm1479, %v1565, 0.0
        %1607 = vadd.xlane.f32.xlu0 %v1606
        %v1608 = vpop.xlane.xlu0 %1607
        %v1609 = vsel %vm1479, %v1567, 0.0
        %1610 = vadd.xlane.f32.xlu0 %v1609
        %v1611 = vpop.xlane.xlu0 %1610
        %v1612 = vsel %vm1479, %v1569, 0.0
        %1613 = vadd.xlane.f32.xlu0 %v1612
        %v1614 = vpop.xlane.xlu0 %1613
        %v1615 = vsel %vm1479, %v1571, 0.0
        %1616 = vadd.xlane.f32.xlu0 %v1615
        %v1617 = vpop.xlane.xlu0 %1616
        %v1618 = vsel %vm1479, %v1573, 0.0
        %1619 = vadd.xlane.f32.xlu0 %v1618
        %v1620 = vpop.xlane.xlu0 %1619
        %v1621 = vsel %vm1479, %v1575, 0.0
        %1622 = vadd.xlane.f32.xlu0 %v1621
        %v1623 = vpop.xlane.xlu0 %1622
        %v1624 = vrcp.pop %v1578
        %v1625 = vrcp.pop %v1581
        %v1626 = vrcp.pop %v1584
        %v1627 = vrcp.pop %v1587
        %v1628 = vrcp.pop %v1590
        %v1629 = vrcp.pop %v1593
        %v1630 = vrcp.pop %v1596
        %v1631 = vrcp.pop %v1599
        %v1632 = vrcp.pop %v1602
        %v1633 = vrcp.pop %v1605
        %v1634 = vrcp.pop %v1608
        %v1635 = vrcp.pop %v1611
        %v1636 = vrcp.pop %v1614
        %v1637 = vrcp.pop %v1617
        %v1638 = vrcp.pop %v1620
        %v1639 = vrcp.pop %v1623
        %v1640 = vmul.f32 %v1545, %v1624
        %v1641 = vmul.f32 %v1547, %v1625
        %v1642 = vmul.f32 %v1549, %v1626
        %v1643 = vmul.f32 %v1551, %v1627
        %v1644 = vmul.f32 %v1553, %v1628
        %v1645 = vmul.f32 %v1555, %v1629
        %v1646 = vmul.f32 %v1557, %v1630
        %v1647 = vmul.f32 %v1559, %v1631
        %v1648 = vmul.f32 %v1561, %v1632
        %v1649 = vmul.f32 %v1563, %v1633
        %v1650 = vmul.f32 %v1565, %v1634
        %v1651 = vmul.f32 %v1567, %v1635
        %v1652 = vmul.f32 %v1569, %v1636
        %v1653 = vmul.f32 %v1571, %v1637
        %v1654 = vmul.f32 %v1573, %v1638
        %v1655 = vmul.f32 %v1575, %v1639
        %v1656 = vcombine.low %v1640, %v1642
        %v1657 = vcombine.high %v1640, %v1642
        %v1659 = vunpack.c.l.s4 1983009808
        %v1660 = vunpack.c.0.s8 %v1659
        %v1661 = vlaneseq
        %v1662 = vshrl.u32 %v1661, 7
        %v1663 = vsub.s32 %v1660, %v1662
        %v1664 = vrot.slane %v1656, %v1663
        %v1666 = vunpack.c.l.s4 1983009808
        %v1667 = vunpack.c.0.s8 %v1666
        %v1668 = vlaneseq
        %v1669 = vshrl.u32 %v1668, 7
        %v1670 = vsub.s32 %v1667, %v1669
        %v1671 = vrot.slane %v1657, %v1670
        %v1672 = vcombine.low %v1641, %v1643
        %v1673 = vcombine.high %v1641, %v1643
        %v1675 = vunpack.c.l.s4 1983009808
        %v1676 = vunpack.c.0.s8 %v1675
        %v1677 = vlaneseq
        %v1678 = vshrl.u32 %v1677, 7
        %v1679 = vsub.s32 %v1676, %v1678
        %v1680 = vrot.slane %v1672, %v1679
        %v1682 = vunpack.c.l.s4 1983009808
        %v1683 = vunpack.c.0.s8 %v1682
        %v1684 = vlaneseq
        %v1685 = vshrl.u32 %v1684, 7
        %v1686 = vsub.s32 %v1683, %v1685
        %v1687 = vrot.slane %v1673, %v1686
        %v1688 = vcombine.low %v1644, %v1646
        %v1689 = vcombine.high %v1644, %v1646
        %v1691 = vunpack.c.l.s4 1983009808
        %v1692 = vunpack.c.0.s8 %v1691
        %v1693 = vlaneseq
        %v1694 = vshrl.u32 %v1693, 7
        %v1695 = vsub.s32 %v1692, %v1694
        %v1696 = vrot.slane %v1688, %v1695
        %v1698 = vunpack.c.l.s4 1983009808
        %v1699 = vunpack.c.0.s8 %v1698
        %v1700 = vlaneseq
        %v1701 = vshrl.u32 %v1700, 7
        %v1702 = vsub.s32 %v1699, %v1701
        %v1703 = vrot.slane %v1689, %v1702
        %v1704 = vcombine.low %v1645, %v1647
        %v1705 = vcombine.high %v1645, %v1647
        %v1707 = vunpack.c.l.s4 1983009808
        %v1708 = vunpack.c.0.s8 %v1707
        %v1709 = vlaneseq
        %v1710 = vshrl.u32 %v1709, 7
        %v1711 = vsub.s32 %v1708, %v1710
        %v1712 = vrot.slane %v1704, %v1711
        %v1714 = vunpack.c.l.s4 1983009808
        %v1715 = vunpack.c.0.s8 %v1714
        %v1716 = vlaneseq
        %v1717 = vshrl.u32 %v1716, 7
        %v1718 = vsub.s32 %v1715, %v1717
        %v1719 = vrot.slane %v1705, %v1718
        %v1720 = vcombine.low %v1664, %v1680
        %v1721 = vcombine.high %v1664, %v1680
        %v1723 = vunpack.c.l.s4 1934713408
        %v1724 = vunpack.c.0.s8 %v1723
        %v1725 = vlaneseq
        %v1726 = vshrl.u32 %v1725, 7
        %v1727 = vsub.s32 %v1724, %v1726
        %v1728 = vrot.slane %v1720, %v1727
        %v1730 = vunpack.c.l.s4 1934713408
        %v1731 = vunpack.c.0.s8 %v1730
        %v1732 = vlaneseq
        %v1733 = vshrl.u32 %v1732, 7
        %v1734 = vsub.s32 %v1731, %v1733
        %v1735 = vrot.slane %v1721, %v1734
        %v1736 = vcombine.low %v1671, %v1687
        %v1737 = vcombine.high %v1671, %v1687
        %v1739 = vunpack.c.l.s4 1934713408
        %v1740 = vunpack.c.0.s8 %v1739
        %v1741 = vlaneseq
        %v1742 = vshrl.u32 %v1741, 7
        %v1743 = vsub.s32 %v1740, %v1742
        %v1744 = vrot.slane %v1736, %v1743
        %v1746 = vunpack.c.l.s4 1934713408
        %v1747 = vunpack.c.0.s8 %v1746
        %v1748 = vlaneseq
        %v1749 = vshrl.u32 %v1748, 7
        %v1750 = vsub.s32 %v1747, %v1749
        %v1751 = vrot.slane %v1737, %v1750
        %v1752 = vcombine.low %v1696, %v1712
        %v1753 = vcombine.high %v1696, %v1712
        %v1755 = vunpack.c.l.s4 1934713408
        %v1756 = vunpack.c.0.s8 %v1755
        %v1757 = vlaneseq
        %v1758 = vshrl.u32 %v1757, 7
        %v1759 = vsub.s32 %v1756, %v1758
        %v1760 = vrot.slane %v1752, %v1759
        %v1762 = vunpack.c.l.s4 1934713408
        %v1763 = vunpack.c.0.s8 %v1762
        %v1764 = vlaneseq
        %v1765 = vshrl.u32 %v1764, 7
        %v1766 = vsub.s32 %v1763, %v1765
        %v1767 = vrot.slane %v1753, %v1766
        %v1768 = vcombine.low %v1703, %v1719
        %v1769 = vcombine.high %v1703, %v1719
        %v1771 = vunpack.c.l.s4 1934713408
        %v1772 = vunpack.c.0.s8 %v1771
        %v1773 = vlaneseq
        %v1774 = vshrl.u32 %v1773, 7
        %v1775 = vsub.s32 %v1772, %v1774
        %v1776 = vrot.slane %v1768, %v1775
        %v1778 = vunpack.c.l.s4 1934713408
        %v1779 = vunpack.c.0.s8 %v1778
        %v1780 = vlaneseq
        %v1781 = vshrl.u32 %v1780, 7
        %v1782 = vsub.s32 %v1779, %v1781
        %v1783 = vrot.slane %v1769, %v1782
        %v1784 = vcombine.low %v1728, %v1760
        %v1785 = vcombine.high %v1728, %v1760
        %v1786 = vcombine.low %v1735, %v1767
        %v1787 = vcombine.high %v1735, %v1767
        %v1788 = vcombine.low %v1744, %v1776
        %v1789 = vcombine.high %v1744, %v1776
        %v1790 = vcombine.low %v1751, %v1783
        %v1791 = vcombine.high %v1751, %v1783
        %v1792 = vcombine.low %v1648, %v1650
        %v1793 = vcombine.high %v1648, %v1650
        %v1795 = vunpack.c.l.s4 1983009808
        %v1796 = vunpack.c.0.s8 %v1795
        %v1797 = vlaneseq
        %v1798 = vshrl.u32 %v1797, 7
        %v1799 = vsub.s32 %v1796, %v1798
        %v1800 = vrot.slane %v1792, %v1799
        %v1802 = vunpack.c.l.s4 1983009808
        %v1803 = vunpack.c.0.s8 %v1802
        %v1804 = vlaneseq
        %v1805 = vshrl.u32 %v1804, 7
        %v1806 = vsub.s32 %v1803, %v1805
        %v1807 = vrot.slane %v1793, %v1806
        %v1808 = vcombine.low %v1649, %v1651
        %v1809 = vcombine.high %v1649, %v1651
        %v1811 = vunpack.c.l.s4 1983009808
        %v1812 = vunpack.c.0.s8 %v1811
        %v1813 = vlaneseq
        %v1814 = vshrl.u32 %v1813, 7
        %v1815 = vsub.s32 %v1812, %v1814
        %v1816 = vrot.slane %v1808, %v1815
        %v1818 = vunpack.c.l.s4 1983009808
        %v1819 = vunpack.c.0.s8 %v1818
        %v1820 = vlaneseq
        %v1821 = vshrl.u32 %v1820, 7
        %v1822 = vsub.s32 %v1819, %v1821
        %v1823 = vrot.slane %v1809, %v1822
        %v1824 = vcombine.low %v1652, %v1654
        %v1825 = vcombine.high %v1652, %v1654
        %v1827 = vunpack.c.l.s4 1983009808
        %v1828 = vunpack.c.0.s8 %v1827
        %v1829 = vlaneseq
        %v1830 = vshrl.u32 %v1829, 7
        %v1831 = vsub.s32 %v1828, %v1830
        %v1832 = vrot.slane %v1824, %v1831
        %v1834 = vunpack.c.l.s4 1983009808
        %v1835 = vunpack.c.0.s8 %v1834
        %v1836 = vlaneseq
        %v1837 = vshrl.u32 %v1836, 7
        %v1838 = vsub.s32 %v1835, %v1837
        %v1839 = vrot.slane %v1825, %v1838
        %v1840 = vcombine.low %v1653, %v1655
        %v1841 = vcombine.high %v1653, %v1655
        %v1843 = vunpack.c.l.s4 1983009808
        %v1844 = vunpack.c.0.s8 %v1843
        %v1845 = vlaneseq
        %v1846 = vshrl.u32 %v1845, 7
        %v1847 = vsub.s32 %v1844, %v1846
        %v1848 = vrot.slane %v1840, %v1847
        %v1850 = vunpack.c.l.s4 1983009808
        %v1851 = vunpack.c.0.s8 %v1850
        %v1852 = vlaneseq
        %v1853 = vshrl.u32 %v1852, 7
        %v1854 = vsub.s32 %v1851, %v1853
        %v1855 = vrot.slane %v1841, %v1854
        %v1856 = vcombine.low %v1800, %v1816
        %v1857 = vcombine.high %v1800, %v1816
        %v1859 = vunpack.c.l.s4 1934713408
        %v1860 = vunpack.c.0.s8 %v1859
        %v1861 = vlaneseq
        %v1862 = vshrl.u32 %v1861, 7
        %v1863 = vsub.s32 %v1860, %v1862
        %v1864 = vrot.slane %v1856, %v1863
        %v1866 = vunpack.c.l.s4 1934713408
        %v1867 = vunpack.c.0.s8 %v1866
        %v1868 = vlaneseq
        %v1869 = vshrl.u32 %v1868, 7
        %v1870 = vsub.s32 %v1867, %v1869
        %v1871 = vrot.slane %v1857, %v1870
        %v1872 = vcombine.low %v1807, %v1823
        %v1873 = vcombine.high %v1807, %v1823
        %v1875 = vunpack.c.l.s4 1934713408
        %v1876 = vunpack.c.0.s8 %v1875
        %v1877 = vlaneseq
        %v1878 = vshrl.u32 %v1877, 7
        %v1879 = vsub.s32 %v1876, %v1878
        %v1880 = vrot.slane %v1872, %v1879
        %v1882 = vunpack.c.l.s4 1934713408
        %v1883 = vunpack.c.0.s8 %v1882
        %v1884 = vlaneseq
        %v1885 = vshrl.u32 %v1884, 7
        %v1886 = vsub.s32 %v1883, %v1885
        %v1887 = vrot.slane %v1873, %v1886
        %v1888 = vcombine.low %v1832, %v1848
        %v1889 = vcombine.high %v1832, %v1848
        %v1891 = vunpack.c.l.s4 1934713408
        %v1892 = vunpack.c.0.s8 %v1891
        %v1893 = vlaneseq
        %v1894 = vshrl.u32 %v1893, 7
        %v1895 = vsub.s32 %v1892, %v1894
        %v1896 = vrot.slane %v1888, %v1895
        %v1898 = vunpack.c.l.s4 1934713408
        %v1899 = vunpack.c.0.s8 %v1898
        %v1900 = vlaneseq
        %v1901 = vshrl.u32 %v1900, 7
        %v1902 = vsub.s32 %v1899, %v1901
        %v1903 = vrot.slane %v1889, %v1902
        %v1904 = vcombine.low %v1839, %v1855
        %v1905 = vcombine.high %v1839, %v1855
        %v1907 = vunpack.c.l.s4 1934713408
        %v1908 = vunpack.c.0.s8 %v1907
        %v1909 = vlaneseq
        %v1910 = vshrl.u32 %v1909, 7
        %v1911 = vsub.s32 %v1908, %v1910
        %v1912 = vrot.slane %v1904, %v1911
        %v1914 = vunpack.c.l.s4 1934713408
        %v1915 = vunpack.c.0.s8 %v1914
        %v1916 = vlaneseq
        %v1917 = vshrl.u32 %v1916, 7
        %v1918 = vsub.s32 %v1915, %v1917
        %v1919 = vrot.slane %v1905, %v1918
        %v1920 = vcombine.low %v1864, %v1896
        %v1921 = vcombine.high %v1864, %v1896
        %v1922 = vcombine.low %v1871, %v1903
        %v1923 = vcombine.high %v1871, %v1903
        %v1924 = vcombine.low %v1880, %v1912
        %v1925 = vcombine.high %v1880, %v1912
        %v1926 = vcombine.low %v1887, %v1919
        %v1927 = vcombine.high %v1887, %v1919
        %1930 = vrot.lane.b32.xlu0 %v1785, 16
        %v1931 = vpop.permute.xlu0 %1930
        %1932 = vrot.lane.b32.xlu0 %v1921, 16
        %v1933 = vpop.permute.xlu0 %1932
        %1938 = vrot.lane.b32.xlu0 %v1786, 32
        %v1939 = vpop.permute.xlu0 %1938
        %1940 = vrot.lane.b32.xlu0 %v1922, 32
        %v1941 = vpop.permute.xlu0 %1940
        %1946 = vrot.lane.b32.xlu0 %v1787, 48
        %v1947 = vpop.permute.xlu0 %1946
        %1948 = vrot.lane.b32.xlu0 %v1923, 48
        %v1949 = vpop.permute.xlu0 %1948
        %1954 = vrot.lane.b32.xlu0 %v1788, 64
        %v1955 = vpop.permute.xlu0 %1954
        %1956 = vrot.lane.b32.xlu0 %v1924, 64
        %v1957 = vpop.permute.xlu0 %1956
        %1962 = vrot.lane.b32.xlu0 %v1789, 80
        %v1963 = vpop.permute.xlu0 %1962
        %1964 = vrot.lane.b32.xlu0 %v1925, 80
        %v1965 = vpop.permute.xlu0 %1964
        %1970 = vrot.lane.b32.xlu0 %v1790, 96
        %v1971 = vpop.permute.xlu0 %1970
        %1972 = vrot.lane.b32.xlu0 %v1926, 96
        %v1973 = vpop.permute.xlu0 %1972
        %1978 = vrot.lane.b32.xlu0 %v1791, 112
        %v1979 = vpop.permute.xlu0 %1978
        %1980 = vrot.lane.b32.xlu0 %v1927, 112
        %v1981 = vpop.permute.xlu0 %1980
        %v1984 = vsel %vm1479, %v1784, %v1931
        %v1985 = vsel %vm1479, %v1920, %v1933
        %vm1986 = vcmask 261120
        %v1987 = vsel %vm1986, %v1984, %v1939
        %v1988 = vsel %vm1986, %v1985, %v1941
        %vm1989 = vcmask 392192
        %v1990 = vsel %vm1989, %v1987, %v1947
        %v1991 = vsel %vm1989, %v1988, %v1949
        %vm1992 = vcmask 523264
        %v1993 = vsel %vm1992, %v1990, %v1955
        %v1994 = vsel %vm1992, %v1991, %v1957
        %vm1995 = vcmask 654336
        %v1996 = vsel %vm1995, %v1993, %v1963
        %v1997 = vsel %vm1995, %v1994, %v1965
        %vm1998 = vcmask 785408
        %v1999 = vsel %vm1998, %v1996, %v1971
        %v2000 = vsel %vm1998, %v1997, %v1973
        %vm2001 = vcmask 916480
        %v2002 = vsel %vm2001, %v1999, %v1979
        %v2003 = vsel %vm2001, %v2000, %v1981
        %2004 = vst [vmem:[%s268] sm:$0xff] %v2002
        %2005 = vst [vmem:[%s268 + $0x8] sm:$0xff] %v2003
        %v2007 = vsel %vm1479, %v1640, 0
        %2009 = vmatprep.subr.mxu0 0.0
        %2010 = vmatpush1.msra.mxu0 %v277
        %2011 = vmatprep.subr.mxu0 0.0
        %2012 = vmatpush1.msra.mxu0 %v278
        %2013 = vmatprep.subr.mxu0 0.0
        %2014 = vmatpush1.msra.mxu0 0.0
        %2015 = vmatprep.subr.mxu0 0.0
        %2016 = vmatpush1.msra.mxu0 0.0
        %2017 = vmatprep.subr.mxu0 0.0
        %2018 = vmatpush1.msra.mxu0 0.0
        %2019 = vmatprep.subr.mxu0 0.0
        %2020 = vmatpush1.msra.mxu0 0.0
        %2021 = vmatprep.subr.mxu0 0.0
        %2022 = vmatpush1.msra.mxu0 0.0
        %2023 = vmatprep.subr.mxu0 0.0
        %2024 = vmatpush1.msra.mxu0 0.0
        %2025 = vmatprep.subr.mxu0 0.0
        %2026 = vmatpush1.msra.mxu0 0.0
        %2027 = vmatprep.subr.mxu0 0.0
        %2028 = vmatpush1.msra.mxu0 0.0
        %2029 = vmatprep.subr.mxu0 0.0
        %2030 = vmatpush1.msra.mxu0 0.0
        %2031 = vmatprep.subr.mxu0 0.0
        %2032 = vmatpush1.msra.mxu0 0.0
        %2033 = vmatprep.subr.mxu0 0.0
        %2034 = vmatpush1.msra.mxu0 0.0
        %2035 = vmatprep.subr.mxu0 0.0
        %2036 = vmatpush1.msra.mxu0 0.0
        %2037 = vmatprep.subr.mxu0 0.0
        %2038 = vmatpush1.msra.mxu0 0.0
        %2039 = vmatprep.subr.mxu0 0.0
        %2040 = vmatpush1.msra.mxu0 0.0
        %2041 = vmatprep.subr.mxu0 0.0
        %2042 = vmatpush1.msra.mxu0 0.0
        %2043 = vmatprep.subr.mxu0 0.0
        %2044 = vmatpush1.msra.mxu0 0.0
        %2045 = vmatprep.subr.mxu0 0.0
        %2046 = vmatpush1.msra.mxu0 0.0
        %2047 = vmatprep.subr.mxu0 0.0
        %2048 = vmatpush1.msra.mxu0 0.0
        %2049 = vmatprep.subr.mxu0 0.0
        %2050 = vmatpush1.msra.mxu0 0.0
        %2051 = vmatprep.subr.mxu0 0.0
        %2052 = vmatpush1.msra.mxu0 0.0
        %2053 = vmatprep.subr.mxu0 0.0
        %2054 = vmatpush1.msra.mxu0 0.0
        %2055 = vmatprep.subr.mxu0 0.0
        %2056 = vmatpush1.msra.mxu0 0.0
        %2057 = vmatprep.subr.mxu0 0.0
        %2058 = vmatpush1.msra.mxu0 0.0
        %2059 = vmatprep.subr.mxu0 0.0
        %2060 = vmatpush1.msra.mxu0 0.0
        %2061 = vmatprep.subr.mxu0 0.0
        %2062 = vmatpush1.msra.mxu0 0.0
        %2063 = vmatprep.subr.mxu0 0.0
        %2064 = vmatpush1.msra.mxu0 0.0
        %2065 = vmatprep.subr.mxu0 0.0
        %2066 = vmatpush1.msra.mxu0 0.0
        %2067 = vmatprep.subr.mxu0 0.0
        %2068 = vmatpush1.msra.mxu0 0.0
        %2069 = vmatprep.subr.mxu0 0.0
        %2070 = vmatpush1.msra.mxu0 0.0
        %2071 = vmatprep.subr.mxu0 0.0
        %2072 = vmatpush1.msra.mxu0 0.0
        %2073 = vmatprep.mubr.f32.mxu0 0.0
        %2074 = vmatmul.mubr.f32.gmra.mrb[0].mxu0 %v2007
        %v2075 = vpop.f32.mrb[0].mxu0
        %v2076 = vadd.f32 0.0, %v2075
        %v2077 = vpop.f32.mrb[0].mxu0
        %2078 = vdwg.mxu0
        %v2080 = vsel %vm1479, %v1641, 0
        %2082 = vmatprep.subr.mxu0 0.0
        %2083 = vmatpush1.msra.mxu0 %v279
        %2084 = vmatprep.subr.mxu0 0.0
        %2085 = vmatpush1.msra.mxu0 %v280
        %2086 = vmatprep.subr.mxu0 0.0
        %2087 = vmatpush1.msra.mxu0 0.0
        %2088 = vmatprep.subr.mxu0 0.0
        %2089 = vmatpush1.msra.mxu0 0.0
        %2090 = vmatprep.subr.mxu0 0.0
        %2091 = vmatpush1.msra.mxu0 0.0
        %2092 = vmatprep.subr.mxu0 0.0
        %2093 = vmatpush1.msra.mxu0 0.0
        %2094 = vmatprep.subr.mxu0 0.0
        %2095 = vmatpush1.msra.mxu0 0.0
        %2096 = vmatprep.subr.mxu0 0.0
        %2097 = vmatpush1.msra.mxu0 0.0
        %2098 = vmatprep.subr.mxu0 0.0
        %2099 = vmatpush1.msra.mxu0 0.0
        %2100 = vmatprep.subr.mxu0 0.0
        %2101 = vmatpush1.msra.mxu0 0.0
        %2102 = vmatprep.subr.mxu0 0.0
        %2103 = vmatpush1.msra.mxu0 0.0
        %2104 = vmatprep.subr.mxu0 0.0
        %2105 = vmatpush1.msra.mxu0 0.0
        %2106 = vmatprep.subr.mxu0 0.0
        %2107 = vmatpush1.msra.mxu0 0.0
        %2108 = vmatprep.subr.mxu0 0.0
        %2109 = vmatpush1.msra.mxu0 0.0
        %2110 = vmatprep.subr.mxu0 0.0
        %2111 = vmatpush1.msra.mxu0 0.0
        %2112 = vmatprep.subr.mxu0 0.0
        %2113 = vmatpush1.msra.mxu0 0.0
        %2114 = vmatprep.subr.mxu0 0.0
        %2115 = vmatpush1.msra.mxu0 0.0
        %2116 = vmatprep.subr.mxu0 0.0
        %2117 = vmatpush1.msra.mxu0 0.0
        %2118 = vmatprep.subr.mxu0 0.0
        %2119 = vmatpush1.msra.mxu0 0.0
        %2120 = vmatprep.subr.mxu0 0.0
        %2121 = vmatpush1.msra.mxu0 0.0
        %2122 = vmatprep.subr.mxu0 0.0
        %2123 = vmatpush1.msra.mxu0 0.0
        %2124 = vmatprep.subr.mxu0 0.0
        %2125 = vmatpush1.msra.mxu0 0.0
        %2126 = vmatprep.subr.mxu0 0.0
        %2127 = vmatpush1.msra.mxu0 0.0
        %2128 = vmatprep.subr.mxu0 0.0
        %2129 = vmatpush1.msra.mxu0 0.0
        %2130 = vmatprep.subr.mxu0 0.0
        %2131 = vmatpush1.msra.mxu0 0.0
        %2132 = vmatprep.subr.mxu0 0.0
        %2133 = vmatpush1.msra.mxu0 0.0
        %2134 = vmatprep.subr.mxu0 0.0
        %2135 = vmatpush1.msra.mxu0 0.0
        %2136 = vmatprep.subr.mxu0 0.0
        %2137 = vmatpush1.msra.mxu0 0.0
        %2138 = vmatprep.subr.mxu0 0.0
        %2139 = vmatpush1.msra.mxu0 0.0
        %2140 = vmatprep.subr.mxu0 0.0
        %2141 = vmatpush1.msra.mxu0 0.0
        %2142 = vmatprep.subr.mxu0 0.0
        %2143 = vmatpush1.msra.mxu0 0.0
        %2144 = vmatprep.subr.mxu0 0.0
        %2145 = vmatpush1.msra.mxu0 0.0
        %2146 = vmatprep.mubr.f32.mxu0 0.0
        %2147 = vmatmul.mubr.f32.gmra.mrb[0].mxu0 %v2080
        %v2148 = vpop.f32.mrb[0].mxu0
        %v2149 = vadd.f32 0.0, %v2148
        %v2150 = vpop.f32.mrb[0].mxu0
        %2151 = vdwg.mxu0
        %v2153 = vsel %vm1479, %v1642, 0
        %2155 = vmatprep.subr.mxu0 0.0
        %2156 = vmatpush1.msra.mxu0 %v281
        %2157 = vmatprep.subr.mxu0 0.0
        %2158 = vmatpush1.msra.mxu0 %v282
        %2159 = vmatprep.subr.mxu0 0.0
        %2160 = vmatpush1.msra.mxu0 0.0
        %2161 = vmatprep.subr.mxu0 0.0
        %2162 = vmatpush1.msra.mxu0 0.0
        %2163 = vmatprep.subr.mxu0 0.0
        %2164 = vmatpush1.msra.mxu0 0.0
        %2165 = vmatprep.subr.mxu0 0.0
        %2166 = vmatpush1.msra.mxu0 0.0
        %2167 = vmatprep.subr.mxu0 0.0
        %2168 = vmatpush1.msra.mxu0 0.0
        %2169 = vmatprep.subr.mxu0 0.0
        %2170 = vmatpush1.msra.mxu0 0.0
        %2171 = vmatprep.subr.mxu0 0.0
        %2172 = vmatpush1.msra.mxu0 0.0
        %2173 = vmatprep.subr.mxu0 0.0
        %2174 = vmatpush1.msra.mxu0 0.0
        %2175 = vmatprep.subr.mxu0 0.0
        %2176 = vmatpush1.msra.mxu0 0.0
        %2177 = vmatprep.subr.mxu0 0.0
        %2178 = vmatpush1.msra.mxu0 0.0
        %2179 = vmatprep.subr.mxu0 0.0
        %2180 = vmatpush1.msra.mxu0 0.0
        %2181 = vmatprep.subr.mxu0 0.0
        %2182 = vmatpush1.msra.mxu0 0.0
        %2183 = vmatprep.subr.mxu0 0.0
        %2184 = vmatpush1.msra.mxu0 0.0
        %2185 = vmatprep.subr.mxu0 0.0
        %2186 = vmatpush1.msra.mxu0 0.0
        %2187 = vmatprep.subr.mxu0 0.0
        %2188 = vmatpush1.msra.mxu0 0.0
        %2189 = vmatprep.subr.mxu0 0.0
        %2190 = vmatpush1.msra.mxu0 0.0
        %2191 = vmatprep.subr.mxu0 0.0
        %2192 = vmatpush1.msra.mxu0 0.0
        %2193 = vmatprep.subr.mxu0 0.0
        %2194 = vmatpush1.msra.mxu0 0.0
        %2195 = vmatprep.subr.mxu0 0.0
        %2196 = vmatpush1.msra.mxu0 0.0
        %2197 = vmatprep.subr.mxu0 0.0
        %2198 = vmatpush1.msra.mxu0 0.0
        %2199 = vmatprep.subr.mxu0 0.0
        %2200 = vmatpush1.msra.mxu0 0.0
        %2201 = vmatprep.subr.mxu0 0.0
        %2202 = vmatpush1.msra.mxu0 0.0
        %2203 = vmatprep.subr.mxu0 0.0
        %2204 = vmatpush1.msra.mxu0 0.0
        %2205 = vmatprep.subr.mxu0 0.0
        %2206 = vmatpush1.msra.mxu0 0.0
        %2207 = vmatprep.subr.mxu0 0.0
        %2208 = vmatpush1.msra.mxu0 0.0
        %2209 = vmatprep.subr.mxu0 0.0
        %2210 = vmatpush1.msra.mxu0 0.0
        %2211 = vmatprep.subr.mxu0 0.0
        %2212 = vmatpush1.msra.mxu0 0.0
        %2213 = vmatprep.subr.mxu0 0.0
        %2214 = vmatpush1.msra.mxu0 0.0
        %2215 = vmatprep.subr.mxu0 0.0
        %2216 = vmatpush1.msra.mxu0 0.0
        %2217 = vmatprep.subr.mxu0 0.0
        %2218 = vmatpush1.msra.mxu0 0.0
        %2219 = vmatprep.mubr.f32.mxu0 0.0
        %2220 = vmatmul.mubr.f32.gmra.mrb[0].mxu0 %v2153
        %v2221 = vpop.f32.mrb[0].mxu0
        %v2222 = vadd.f32 0.0, %v2221
        %v2223 = vpop.f32.mrb[0].mxu0
        %2224 = vdwg.mxu0
        %v2226 = vsel %vm1479, %v1643, 0
        %2228 = vmatprep.subr.mxu0 0.0
        %2229 = vmatpush1.msra.mxu0 %v283
        %2230 = vmatprep.subr.mxu0 0.0
        %2231 = vmatpush1.msra.mxu0 %v284
        %2232 = vmatprep.subr.mxu0 0.0
        %2233 = vmatpush1.msra.mxu0 0.0
        %2234 = vmatprep.subr.mxu0 0.0
        %2235 = vmatpush1.msra.mxu0 0.0
        %2236 = vmatprep.subr.mxu0 0.0
        %2237 = vmatpush1.msra.mxu0 0.0
        %2238 = vmatprep.subr.mxu0 0.0
        %2239 = vmatpush1.msra.mxu0 0.0
        %2240 = vmatprep.subr.mxu0 0.0
        %2241 = vmatpush1.msra.mxu0 0.0
        %2242 = vmatprep.subr.mxu0 0.0
        %2243 = vmatpush1.msra.mxu0 0.0
        %2244 = vmatprep.subr.mxu0 0.0
        %2245 = vmatpush1.msra.mxu0 0.0
        %2246 = vmatprep.subr.mxu0 0.0
        %2247 = vmatpush1.msra.mxu0 0.0
        %2248 = vmatprep.subr.mxu0 0.0
        %2249 = vmatpush1.msra.mxu0 0.0
        %2250 = vmatprep.subr.mxu0 0.0
        %2251 = vmatpush1.msra.mxu0 0.0
        %2252 = vmatprep.subr.mxu0 0.0
        %2253 = vmatpush1.msra.mxu0 0.0
        %2254 = vmatprep.subr.mxu0 0.0
        %2255 = vmatpush1.msra.mxu0 0.0
        %2256 = vmatprep.subr.mxu0 0.0
        %2257 = vmatpush1.msra.mxu0 0.0
        %2258 = vmatprep.subr.mxu0 0.0
        %2259 = vmatpush1.msra.mxu0 0.0
        %2260 = vmatprep.subr.mxu0 0.0
        %2261 = vmatpush1.msra.mxu0 0.0
        %2262 = vmatprep.subr.mxu0 0.0
        %2263 = vmatpush1.msra.mxu0 0.0
        %2264 = vmatprep.subr.mxu0 0.0
        %2265 = vmatpush1.msra.mxu0 0.0
        %2266 = vmatprep.subr.mxu0 0.0
        %2267 = vmatpush1.msra.mxu0 0.0
        %2268 = vmatprep.subr.mxu0 0.0
        %2269 = vmatpush1.msra.mxu0 0.0
        %2270 = vmatprep.subr.mxu0 0.0
        %2271 = vmatpush1.msra.mxu0 0.0
        %2272 = vmatprep.subr.mxu0 0.0
        %2273 = vmatpush1.msra.mxu0 0.0
        %2274 = vmatprep.subr.mxu0 0.0
        %2275 = vmatpush1.msra.mxu0 0.0
        %2276 = vmatprep.subr.mxu0 0.0
        %2277 = vmatpush1.msra.mxu0 0.0
        %2278 = vmatprep.subr.mxu0 0.0
        %2279 = vmatpush1.msra.mxu0 0.0
        %2280 = vmatprep.subr.mxu0 0.0
        %2281 = vmatpush1.msra.mxu0 0.0
        %2282 = vmatprep.subr.mxu0 0.0
        %2283 = vmatpush1.msra.mxu0 0.0
        %2284 = vmatprep.subr.mxu0 0.0
        %2285 = vmatpush1.msra.mxu0 0.0
        %2286 = vmatprep.subr.mxu0 0.0
        %2287 = vmatpush1.msra.mxu0 0.0
        %2288 = vmatprep.subr.mxu0 0.0
        %2289 = vmatpush1.msra.mxu0 0.0
        %2290 = vmatprep.subr.mxu0 0.0
        %2291 = vmatpush1.msra.mxu0 0.0
        %2292 = vmatprep.mubr.f32.mxu0 0.0
        %2293 = vmatmul.mubr.f32.gmra.mrb[0].mxu0 %v2226
        %v2294 = vpop.f32.mrb[0].mxu0
        %v2295 = vadd.f32 0.0, %v2294
        %v2296 = vpop.f32.mrb[0].mxu0
        %2297 = vdwg.mxu0
        %v2299 = vsel %vm1479, %v1644, 0
        %2301 = vmatprep.subr.mxu0 0.0
        %2302 = vmatpush1.msra.mxu0 %v285
        %2303 = vmatprep.subr.mxu0 0.0
        %2304 = vmatpush1.msra.mxu0 %v286
        %2305 = vmatprep.subr.mxu0 0.0
        %2306 = vmatpush1.msra.mxu0 0.0
        %2307 = vmatprep.subr.mxu0 0.0
        %2308 = vmatpush1.msra.mxu0 0.0
        %2309 = vmatprep.subr.mxu0 0.0
        %2310 = vmatpush1.msra.mxu0 0.0
        %2311 = vmatprep.subr.mxu0 0.0
        %2312 = vmatpush1.msra.mxu0 0.0
        %2313 = vmatprep.subr.mxu0 0.0
        %2314 = vmatpush1.msra.mxu0 0.0
        %2315 = vmatprep.subr.mxu0 0.0
        %2316 = vmatpush1.msra.mxu0 0.0
        %2317 = vmatprep.subr.mxu0 0.0
        %2318 = vmatpush1.msra.mxu0 0.0
        %2319 = vmatprep.subr.mxu0 0.0
        %2320 = vmatpush1.msra.mxu0 0.0
        %2321 = vmatprep.subr.mxu0 0.0
        %2322 = vmatpush1.msra.mxu0 0.0
        %2323 = vmatprep.subr.mxu0 0.0
        %2324 = vmatpush1.msra.mxu0 0.0
        %2325 = vmatprep.subr.mxu0 0.0
        %2326 = vmatpush1.msra.mxu0 0.0
        %2327 = vmatprep.subr.mxu0 0.0
        %2328 = vmatpush1.msra.mxu0 0.0
        %2329 = vmatprep.subr.mxu0 0.0
        %2330 = vmatpush1.msra.mxu0 0.0
        %2331 = vmatprep.subr.mxu0 0.0
        %2332 = vmatpush1.msra.mxu0 0.0
        %2333 = vmatprep.subr.mxu0 0.0
        %2334 = vmatpush1.msra.mxu0 0.0
        %2335 = vmatprep.subr.mxu0 0.0
        %2336 = vmatpush1.msra.mxu0 0.0
        %2337 = vmatprep.subr.mxu0 0.0
        %2338 = vmatpush1.msra.mxu0 0.0
        %2339 = vmatprep.subr.mxu0 0.0
        %2340 = vmatpush1.msra.mxu0 0.0
        %2341 = vmatprep.subr.mxu0 0.0
        %2342 = vmatpush1.msra.mxu0 0.0
        %2343 = vmatprep.subr.mxu0 0.0
        %2344 = vmatpush1.msra.mxu0 0.0
        %2345 = vmatprep.subr.mxu0 0.0
        %2346 = vmatpush1.msra.mxu0 0.0
        %2347 = vmatprep.subr.mxu0 0.0
        %2348 = vmatpush1.msra.mxu0 0.0
        %2349 = vmatprep.subr.mxu0 0.0
        %2350 = vmatpush1.msra.mxu0 0.0
        %2351 = vmatprep.subr.mxu0 0.0
        %2352 = vmatpush1.msra.mxu0 0.0
        %2353 = vmatprep.subr.mxu0 0.0
        %2354 = vmatpush1.msra.mxu0 0.0
        %2355 = vmatprep.subr.mxu0 0.0
        %2356 = vmatpush1.msra.mxu0 0.0
        %2357 = vmatprep.subr.mxu0 0.0
        %2358 = vmatpush1.msra.mxu0 0.0
        %2359 = vmatprep.subr.mxu0 0.0
        %2360 = vmatpush1.msra.mxu0 0.0
        %2361 = vmatprep.subr.mxu0 0.0
        %2362 = vmatpush1.msra.mxu0 0.0
        %2363 = vmatprep.subr.mxu0 0.0
        %2364 = vmatpush1.msra.mxu0 0.0
        %2365 = vmatprep.mubr.f32.mxu0 0.0
        %2366 = vmatmul.mubr.f32.gmra.mrb[0].mxu0 %v2299
        %v2367 = vpop.f32.mrb[0].mxu0
        %v2368 = vadd.f32 0.0, %v2367
        %v2369 = vpop.f32.mrb[0].mxu0
        %2370 = vdwg.mxu0
        %v2372 = vsel %vm1479, %v1645, 0
        %2374 = vmatprep.subr.mxu0 0.0
        %2375 = vmatpush1.msra.mxu0 %v287
        %2376 = vmatprep.subr.mxu0 0.0
        %2377 = vmatpush1.msra.mxu0 %v288
        %2378 = vmatprep.subr.mxu0 0.0
        %2379 = vmatpush1.msra.mxu0 0.0
        %2380 = vmatprep.subr.mxu0 0.0
        %2381 = vmatpush1.msra.mxu0 0.0
        %2382 = vmatprep.subr.mxu0 0.0
        %2383 = vmatpush1.msra.mxu0 0.0
        %2384 = vmatprep.subr.mxu0 0.0
        %2385 = vmatpush1.msra.mxu0 0.0
        %2386 = vmatprep.subr.mxu0 0.0
        %2387 = vmatpush1.msra.mxu0 0.0
        %2388 = vmatprep.subr.mxu0 0.0
        %2389 = vmatpush1.msra.mxu0 0.0
        %2390 = vmatprep.subr.mxu0 0.0
        %2391 = vmatpush1.msra.mxu0 0.0
        %2392 = vmatprep.subr.mxu0 0.0
        %2393 = vmatpush1.msra.mxu0 0.0
        %2394 = vmatprep.subr.mxu0 0.0
        %2395 = vmatpush1.msra.mxu0 0.0
        %2396 = vmatprep.subr.mxu0 0.0
        %2397 = vmatpush1.msra.mxu0 0.0
        %2398 = vmatprep.subr.mxu0 0.0
        %2399 = vmatpush1.msra.mxu0 0.0
        %2400 = vmatprep.subr.mxu0 0.0
        %2401 = vmatpush1.msra.mxu0 0.0
        %2402 = vmatprep.subr.mxu0 0.0
        %2403 = vmatpush1.msra.mxu0 0.0
        %2404 = vmatprep.subr.mxu0 0.0
        %2405 = vmatpush1.msra.mxu0 0.0
        %2406 = vmatprep.subr.mxu0 0.0
        %2407 = vmatpush1.msra.mxu0 0.0
        %2408 = vmatprep.subr.mxu0 0.0
        %2409 = vmatpush1.msra.mxu0 0.0
        %2410 = vmatprep.subr.mxu0 0.0
        %2411 = vmatpush1.msra.mxu0 0.0
        %2412 = vmatprep.subr.mxu0 0.0
        %2413 = vmatpush1.msra.mxu0 0.0
        %2414 = vmatprep.subr.mxu0 0.0
        %2415 = vmatpush1.msra.mxu0 0.0
        %2416 = vmatprep.subr.mxu0 0.0
        %2417 = vmatpush1.msra.mxu0 0.0
        %2418 = vmatprep.subr.mxu0 0.0
        %2419 = vmatpush1.msra.mxu0 0.0
        %2420 = vmatprep.subr.mxu0 0.0
        %2421 = vmatpush1.msra.mxu0 0.0
        %2422 = vmatprep.subr.mxu0 0.0
        %2423 = vmatpush1.msra.mxu0 0.0
        %2424 = vmatprep.subr.mxu0 0.0
        %2425 = vmatpush1.msra.mxu0 0.0
        %2426 = vmatprep.subr.mxu0 0.0
        %2427 = vmatpush1.msra.mxu0 0.0
        %2428 = vmatprep.subr.mxu0 0.0
        %2429 = vmatpush1.msra.mxu0 0.0
        %2430 = vmatprep.subr.mxu0 0.0
        %2431 = vmatpush1.msra.mxu0 0.0
        %2432 = vmatprep.subr.mxu0 0.0
        %2433 = vmatpush1.msra.mxu0 0.0
        %2434 = vmatprep.subr.mxu0 0.0
        %2435 = vmatpush1.msra.mxu0 0.0
        %2436 = vmatprep.subr.mxu0 0.0
        %2437 = vmatpush1.msra.mxu0 0.0
        %2438 = vmatprep.mubr.f32.mxu0 0.0
        %2439 = vmatmul.mubr.f32.gmra.mrb[0].mxu0 %v2372
        %v2440 = vpop.f32.mrb[0].mxu0
        %v2441 = vadd.f32 0.0, %v2440
        %v2442 = vpop.f32.mrb[0].mxu0
        %2443 = vdwg.mxu0
        %v2445 = vsel %vm1479, %v1646, 0
        %2447 = vmatprep.subr.mxu0 0.0
        %2448 = vmatpush1.msra.mxu0 %v289
        %2449 = vmatprep.subr.mxu0 0.0
        %2450 = vmatpush1.msra.mxu0 %v290
        %2451 = vmatprep.subr.mxu0 0.0
        %2452 = vmatpush1.msra.mxu0 0.0
        %2453 = vmatprep.subr.mxu0 0.0
        %2454 = vmatpush1.msra.mxu0 0.0
        %2455 = vmatprep.subr.mxu0 0.0
        %2456 = vmatpush1.msra.mxu0 0.0
        %2457 = vmatprep.subr.mxu0 0.0
        %2458 = vmatpush1.msra.mxu0 0.0
        %2459 = vmatprep.subr.mxu0 0.0
        %2460 = vmatpush1.msra.mxu0 0.0
        %2461 = vmatprep.subr.mxu0 0.0
        %2462 = vmatpush1.msra.mxu0 0.0
        %2463 = vmatprep.subr.mxu0 0.0
        %2464 = vmatpush1.msra.mxu0 0.0
        %2465 = vmatprep.subr.mxu0 0.0
        %2466 = vmatpush1.msra.mxu0 0.0
        %2467 = vmatprep.subr.mxu0 0.0
        %2468 = vmatpush1.msra.mxu0 0.0
        %2469 = vmatprep.subr.mxu0 0.0
        %2470 = vmatpush1.msra.mxu0 0.0
        %2471 = vmatprep.subr.mxu0 0.0
        %2472 = vmatpush1.msra.mxu0 0.0
        %2473 = vmatprep.subr.mxu0 0.0
        %2474 = vmatpush1.msra.mxu0 0.0
        %2475 = vmatprep.subr.mxu0 0.0
        %2476 = vmatpush1.msra.mxu0 0.0
        %2477 = vmatprep.subr.mxu0 0.0
        %2478 = vmatpush1.msra.mxu0 0.0
        %2479 = vmatprep.subr.mxu0 0.0
        %2480 = vmatpush1.msra.mxu0 0.0
        %2481 = vmatprep.subr.mxu0 0.0
        %2482 = vmatpush1.msra.mxu0 0.0
        %2483 = vmatprep.subr.mxu0 0.0
        %2484 = vmatpush1.msra.mxu0 0.0
        %2485 = vmatprep.subr.mxu0 0.0
        %2486 = vmatpush1.msra.mxu0 0.0
        %2487 = vmatprep.subr.mxu0 0.0
        %2488 = vmatpush1.msra.mxu0 0.0
        %2489 = vmatprep.subr.mxu0 0.0
        %2490 = vmatpush1.msra.mxu0 0.0
        %2491 = vmatprep.subr.mxu0 0.0
        %2492 = vmatpush1.msra.mxu0 0.0
        %2493 = vmatprep.subr.mxu0 0.0
        %2494 = vmatpush1.msra.mxu0 0.0
        %2495 = vmatprep.subr.mxu0 0.0
        %2496 = vmatpush1.msra.mxu0 0.0
        %2497 = vmatprep.subr.mxu0 0.0
        %2498 = vmatpush1.msra.mxu0 0.0
        %2499 = vmatprep.subr.mxu0 0.0
        %2500 = vmatpush1.msra.mxu0 0.0
        %2501 = vmatprep.subr.mxu0 0.0
        %2502 = vmatpush1.msra.mxu0 0.0
        %2503 = vmatprep.subr.mxu0 0.0
        %2504 = vmatpush1.msra.mxu0 0.0
        %2505 = vmatprep.subr.mxu0 0.0
        %2506 = vmatpush1.msra.mxu0 0.0
        %2507 = vmatprep.subr.mxu0 0.0
        %2508 = vmatpush1.msra.mxu0 0.0
        %2509 = vmatprep.subr.mxu0 0.0
        %2510 = vmatpush1.msra.mxu0 0.0
        %2511 = vmatprep.mubr.f32.mxu0 0.0
        %2512 = vmatmul.mubr.f32.gmra.mrb[0].mxu0 %v2445
        %v2513 = vpop.f32.mrb[0].mxu0
        %v2514 = vadd.f32 0.0, %v2513
        %v2515 = vpop.f32.mrb[0].mxu0
        %2516 = vdwg.mxu0
        %v2518 = vsel %vm1479, %v1647, 0
        %2520 = vmatprep.subr.mxu0 0.0
        %2521 = vmatpush1.msra.mxu0 %v291
        %2522 = vmatprep.subr.mxu0 0.0
        %2523 = vmatpush1.msra.mxu0 %v292
        %2524 = vmatprep.subr.mxu0 0.0
        %2525 = vmatpush1.msra.mxu0 0.0
        %2526 = vmatprep.subr.mxu0 0.0
        %2527 = vmatpush1.msra.mxu0 0.0
        %2528 = vmatprep.subr.mxu0 0.0
        %2529 = vmatpush1.msra.mxu0 0.0
        %2530 = vmatprep.subr.mxu0 0.0
        %2531 = vmatpush1.msra.mxu0 0.0
        %2532 = vmatprep.subr.mxu0 0.0
        %2533 = vmatpush1.msra.mxu0 0.0
        %2534 = vmatprep.subr.mxu0 0.0
        %2535 = vmatpush1.msra.mxu0 0.0
        %2536 = vmatprep.subr.mxu0 0.0
        %2537 = vmatpush1.msra.mxu0 0.0
        %2538 = vmatprep.subr.mxu0 0.0
        %2539 = vmatpush1.msra.mxu0 0.0
        %2540 = vmatprep.subr.mxu0 0.0
        %2541 = vmatpush1.msra.mxu0 0.0
        %2542 = vmatprep.subr.mxu0 0.0
        %2543 = vmatpush1.msra.mxu0 0.0
        %2544 = vmatprep.subr.mxu0 0.0
        %2545 = vmatpush1.msra.mxu0 0.0
        %2546 = vmatprep.subr.mxu0 0.0
        %2547 = vmatpush1.msra.mxu0 0.0
        %2548 = vmatprep.subr.mxu0 0.0
        %2549 = vmatpush1.msra.mxu0 0.0
        %2550 = vmatprep.subr.mxu0 0.0
        %2551 = vmatpush1.msra.mxu0 0.0
        %2552 = vmatprep.subr.mxu0 0.0
        %2553 = vmatpush1.msra.mxu0 0.0
        %2554 = vmatprep.subr.mxu0 0.0
        %2555 = vmatpush1.msra.mxu0 0.0
        %2556 = vmatprep.subr.mxu0 0.0
        %2557 = vmatpush1.msra.mxu0 0.0
        %2558 = vmatprep.subr.mxu0 0.0
        %2559 = vmatpush1.msra.mxu0 0.0
        %2560 = vmatprep.subr.mxu0 0.0
        %2561 = vmatpush1.msra.mxu0 0.0
        %2562 = vmatprep.subr.mxu0 0.0
        %2563 = vmatpush1.msra.mxu0 0.0
        %2564 = vmatprep.subr.mxu0 0.0
        %2565 = vmatpush1.msra.mxu0 0.0
        %2566 = vmatprep.subr.mxu0 0.0
        %2567 = vmatpush1.msra.mxu0 0.0
        %2568 = vmatprep.subr.mxu0 0.0
        %2569 = vmatpush1.msra.mxu0 0.0
        %2570 = vmatprep.subr.mxu0 0.0
        %2571 = vmatpush1.msra.mxu0 0.0
        %2572 = vmatprep.subr.mxu0 0.0
        %2573 = vmatpush1.msra.mxu0 0.0
        %2574 = vmatprep.subr.mxu0 0.0
        %2575 = vmatpush1.msra.mxu0 0.0
        %2576 = vmatprep.subr.mxu0 0.0
        %2577 = vmatpush1.msra.mxu0 0.0
        %2578 = vmatprep.subr.mxu0 0.0
        %2579 = vmatpush1.msra.mxu0 0.0
        %2580 = vmatprep.subr.mxu0 0.0
        %2581 = vmatpush1.msra.mxu0 0.0
        %2582 = vmatprep.subr.mxu0 0.0
        %2583 = vmatpush1.msra.mxu0 0.0
        %2584 = vmatprep.mubr.f32.mxu0 0.0
        %2585 = vmatmul.mubr.f32.gmra.mrb[0].mxu0 %v2518
        %v2586 = vpop.f32.mrb[0].mxu0
        %v2587 = vadd.f32 0.0, %v2586
        %v2588 = vpop.f32.mrb[0].mxu0
        %2589 = vdwg.mxu0
        %v2591 = vsel %vm1479, %v1648, 0
        %2593 = vmatprep.subr.mxu0 0.0
        %2594 = vmatpush1.msra.mxu0 %v293
        %2595 = vmatprep.subr.mxu0 0.0
        %2596 = vmatpush1.msra.mxu0 %v294
        %2597 = vmatprep.subr.mxu0 0.0
        %2598 = vmatpush1.msra.mxu0 0.0
        %2599 = vmatprep.subr.mxu0 0.0
        %2600 = vmatpush1.msra.mxu0 0.0
        %2601 = vmatprep.subr.mxu0 0.0
        %2602 = vmatpush1.msra.mxu0 0.0
        %2603 = vmatprep.subr.mxu0 0.0
        %2604 = vmatpush1.msra.mxu0 0.0
        %2605 = vmatprep.subr.mxu0 0.0
        %2606 = vmatpush1.msra.mxu0 0.0
        %2607 = vmatprep.subr.mxu0 0.0
        %2608 = vmatpush1.msra.mxu0 0.0
        %2609 = vmatprep.subr.mxu0 0.0
        %2610 = vmatpush1.msra.mxu0 0.0
        %2611 = vmatprep.subr.mxu0 0.0
        %2612 = vmatpush1.msra.mxu0 0.0
        %2613 = vmatprep.subr.mxu0 0.0
        %2614 = vmatpush1.msra.mxu0 0.0
        %2615 = vmatprep.subr.mxu0 0.0
        %2616 = vmatpush1.msra.mxu0 0.0
        %2617 = vmatprep.subr.mxu0 0.0
        %2618 = vmatpush1.msra.mxu0 0.0
        %2619 = vmatprep.subr.mxu0 0.0
        %2620 = vmatpush1.msra.mxu0 0.0
        %2621 = vmatprep.subr.mxu0 0.0
        %2622 = vmatpush1.msra.mxu0 0.0
        %2623 = vmatprep.subr.mxu0 0.0
        %2624 = vmatpush1.msra.mxu0 0.0
        %2625 = vmatprep.subr.mxu0 0.0
        %2626 = vmatpush1.msra.mxu0 0.0
        %2627 = vmatprep.subr.mxu0 0.0
        %2628 = vmatpush1.msra.mxu0 0.0
        %2629 = vmatprep.subr.mxu0 0.0
        %2630 = vmatpush1.msra.mxu0 0.0
        %2631 = vmatprep.subr.mxu0 0.0
        %2632 = vmatpush1.msra.mxu0 0.0
        %2633 = vmatprep.subr.mxu0 0.0
        %2634 = vmatpush1.msra.mxu0 0.0
        %2635 = vmatprep.subr.mxu0 0.0
        %2636 = vmatpush1.msra.mxu0 0.0
        %2637 = vmatprep.subr.mxu0 0.0
        %2638 = vmatpush1.msra.mxu0 0.0
        %2639 = vmatprep.subr.mxu0 0.0
        %2640 = vmatpush1.msra.mxu0 0.0
        %2641 = vmatprep.subr.mxu0 0.0
        %2642 = vmatpush1.msra.mxu0 0.0
        %2643 = vmatprep.subr.mxu0 0.0
        %2644 = vmatpush1.msra.mxu0 0.0
        %2645 = vmatprep.subr.mxu0 0.0
        %2646 = vmatpush1.msra.mxu0 0.0
        %2647 = vmatprep.subr.mxu0 0.0
        %2648 = vmatpush1.msra.mxu0 0.0
        %2649 = vmatprep.subr.mxu0 0.0
        %2650 = vmatpush1.msra.mxu0 0.0
        %2651 = vmatprep.subr.mxu0 0.0
        %2652 = vmatpush1.msra.mxu0 0.0
        %2653 = vmatprep.subr.mxu0 0.0
        %2654 = vmatpush1.msra.mxu0 0.0
        %2655 = vmatprep.subr.mxu0 0.0
        %2656 = vmatpush1.msra.mxu0 0.0
        %2657 = vmatprep.mubr.f32.mxu0 0.0
        %2658 = vmatmul.mubr.f32.gmra.mrb[0].mxu0 %v2591
        %v2659 = vpop.f32.mrb[0].mxu0
        %v2660 = vadd.f32 0.0, %v2659
        %v2661 = vpop.f32.mrb[0].mxu0
        %2662 = vdwg.mxu0
        %v2664 = vsel %vm1479, %v1649, 0
        %2666 = vmatprep.subr.mxu0 0.0
        %2667 = vmatpush1.msra.mxu0 %v295
        %2668 = vmatprep.subr.mxu0 0.0
        %2669 = vmatpush1.msra.mxu0 %v296
        %2670 = vmatprep.subr.mxu0 0.0
        %2671 = vmatpush1.msra.mxu0 0.0
        %2672 = vmatprep.subr.mxu0 0.0
        %2673 = vmatpush1.msra.mxu0 0.0
        %2674 = vmatprep.subr.mxu0 0.0
        %2675 = vmatpush1.msra.mxu0 0.0
        %2676 = vmatprep.subr.mxu0 0.0
        %2677 = vmatpush1.msra.mxu0 0.0
        %2678 = vmatprep.subr.mxu0 0.0
        %2679 = vmatpush1.msra.mxu0 0.0
        %2680 = vmatprep.subr.mxu0 0.0
        %2681 = vmatpush1.msra.mxu0 0.0
        %2682 = vmatprep.subr.mxu0 0.0
        %2683 = vmatpush1.msra.mxu0 0.0
        %2684 = vmatprep.subr.mxu0 0.0
        %2685 = vmatpush1.msra.mxu0 0.0
        %2686 = vmatprep.subr.mxu0 0.0
        %2687 = vmatpush1.msra.mxu0 0.0
        %2688 = vmatprep.subr.mxu0 0.0
        %2689 = vmatpush1.msra.mxu0 0.0
        %2690 = vmatprep.subr.mxu0 0.0
        %2691 = vmatpush1.msra.mxu0 0.0
        %2692 = vmatprep.subr.mxu0 0.0
        %2693 = vmatpush1.msra.mxu0 0.0
        %2694 = vmatprep.subr.mxu0 0.0
        %2695 = vmatpush1.msra.mxu0 0.0
        %2696 = vmatprep.subr.mxu0 0.0
        %2697 = vmatpush1.msra.mxu0 0.0
        %2698 = vmatprep.subr.mxu0 0.0
        %2699 = vmatpush1.msra.mxu0 0.0
        %2700 = vmatprep.subr.mxu0 0.0
        %2701 = vmatpush1.msra.mxu0 0.0
        %2702 = vmatprep.subr.mxu0 0.0
        %2703 = vmatpush1.msra.mxu0 0.0
        %2704 = vmatprep.subr.mxu0 0.0
        %2705 = vmatpush1.msra.mxu0 0.0
        %2706 = vmatprep.subr.mxu0 0.0
        %2707 = vmatpush1.msra.mxu0 0.0
        %2708 = vmatprep.subr.mxu0 0.0
        %2709 = vmatpush1.msra.mxu0 0.0
        %2710 = vmatprep.subr.mxu0 0.0
        %2711 = vmatpush1.msra.mxu0 0.0
        %2712 = vmatprep.subr.mxu0 0.0
        %2713 = vmatpush1.msra.mxu0 0.0
        %2714 = vmatprep.subr.mxu0 0.0
        %2715 = vmatpush1.msra.mxu0 0.0
        %2716 = vmatprep.subr.mxu0 0.0
        %2717 = vmatpush1.msra.mxu0 0.0
        %2718 = vmatprep.subr.mxu0 0.0
        %2719 = vmatpush1.msra.mxu0 0.0
        %2720 = vmatprep.subr.mxu0 0.0
        %2721 = vmatpush1.msra.mxu0 0.0
        %2722 = vmatprep.subr.mxu0 0.0
        %2723 = vmatpush1.msra.mxu0 0.0
        %2724 = vmatprep.subr.mxu0 0.0
        %2725 = vmatpush1.msra.mxu0 0.0
        %2726 = vmatprep.subr.mxu0 0.0
        %2727 = vmatpush1.msra.mxu0 0.0
        %2728 = vmatprep.subr.mxu0 0.0
        %2729 = vmatpush1.msra.mxu0 0.0
        %2730 = vmatprep.mubr.f32.mxu0 0.0
        %2731 = vmatmul.mubr.f32.gmra.mrb[0].mxu0 %v2664
        %v2732 = vpop.f32.mrb[0].mxu0
        %v2733 = vadd.f32 0.0, %v2732
        %v2734 = vpop.f32.mrb[0].mxu0
        %2735 = vdwg.mxu0
        %v2737 = vsel %vm1479, %v1650, 0
        %2739 = vmatprep.subr.mxu0 0.0
        %2740 = vmatpush1.msra.mxu0 %v297
        %2741 = vmatprep.subr.mxu0 0.0
        %2742 = vmatpush1.msra.mxu0 %v298
        %2743 = vmatprep.subr.mxu0 0.0
        %2744 = vmatpush1.msra.mxu0 0.0
        %2745 = vmatprep.subr.mxu0 0.0
        %2746 = vmatpush1.msra.mxu0 0.0
        %2747 = vmatprep.subr.mxu0 0.0
        %2748 = vmatpush1.msra.mxu0 0.0
        %2749 = vmatprep.subr.mxu0 0.0
        %2750 = vmatpush1.msra.mxu0 0.0
        %2751 = vmatprep.subr.mxu0 0.0
        %2752 = vmatpush1.msra.mxu0 0.0
        %2753 = vmatprep.subr.mxu0 0.0
        %2754 = vmatpush1.msra.mxu0 0.0
        %2755 = vmatprep.subr.mxu0 0.0
        %2756 = vmatpush1.msra.mxu0 0.0
        %2757 = vmatprep.subr.mxu0 0.0
        %2758 = vmatpush1.msra.mxu0 0.0
        %2759 = vmatprep.subr.mxu0 0.0
        %2760 = vmatpush1.msra.mxu0 0.0
        %2761 = vmatprep.subr.mxu0 0.0
        %2762 = vmatpush1.msra.mxu0 0.0
        %2763 = vmatprep.subr.mxu0 0.0
        %2764 = vmatpush1.msra.mxu0 0.0
        %2765 = vmatprep.subr.mxu0 0.0
        %2766 = vmatpush1.msra.mxu0 0.0
        %2767 = vmatprep.subr.mxu0 0.0
        %2768 = vmatpush1.msra.mxu0 0.0
        %2769 = vmatprep.subr.mxu0 0.0
        %2770 = vmatpush1.msra.mxu0 0.0
        %2771 = vmatprep.subr.mxu0 0.0
        %2772 = vmatpush1.msra.mxu0 0.0
        %2773 = vmatprep.subr.mxu0 0.0
        %2774 = vmatpush1.msra.mxu0 0.0
        %2775 = vmatprep.subr.mxu0 0.0
        %2776 = vmatpush1.msra.mxu0 0.0
        %2777 = vmatprep.subr.mxu0 0.0
        %2778 = vmatpush1.msra.mxu0 0.0
        %2779 = vmatprep.subr.mxu0 0.0
        %2780 = vmatpush1.msra.mxu0 0.0
        %2781 = vmatprep.subr.mxu0 0.0
        %2782 = vmatpush1.msra.mxu0 0.0
        %2783 = vmatprep.subr.mxu0 0.0
        %2784 = vmatpush1.msra.mxu0 0.0
        %2785 = vmatprep.subr.mxu0 0.0
        %2786 = vmatpush1.msra.mxu0 0.0
        %2787 = vmatprep.subr.mxu0 0.0
        %2788 = vmatpush1.msra.mxu0 0.0
        %2789 = vmatprep.subr.mxu0 0.0
        %2790 = vmatpush1.msra.mxu0 0.0
        %2791 = vmatprep.subr.mxu0 0.0
        %2792 = vmatpush1.msra.mxu0 0.0
        %2793 = vmatprep.subr.mxu0 0.0
        %2794 = vmatpush1.msra.mxu0 0.0
        %2795 = vmatprep.subr.mxu0 0.0
        %2796 = vmatpush1.msra.mxu0 0.0
        %2797 = vmatprep.subr.mxu0 0.0
        %2798 = vmatpush1.msra.mxu0 0.0
        %2799 = vmatprep.subr.mxu0 0.0
        %2800 = vmatpush1.msra.mxu0 0.0
        %2801 = vmatprep.subr.mxu0 0.0
        %2802 = vmatpush1.msra.mxu0 0.0
        %2803 = vmatprep.mubr.f32.mxu0 0.0
        %2804 = vmatmul.mubr.f32.gmra.mrb[0].mxu0 %v2737
        %v2805 = vpop.f32.mrb[0].mxu0
        %v2806 = vadd.f32 0.0, %v2805
        %v2807 = vpop.f32.mrb[0].mxu0
        %2808 = vdwg.mxu0
        %v2810 = vsel %vm1479, %v1651, 0
        %2812 = vmatprep.subr.mxu0 0.0
        %2813 = vmatpush1.msra.mxu0 %v299
        %2814 = vmatprep.subr.mxu0 0.0
        %2815 = vmatpush1.msra.mxu0 %v300
        %2816 = vmatprep.subr.mxu0 0.0
        %2817 = vmatpush1.msra.mxu0 0.0
        %2818 = vmatprep.subr.mxu0 0.0
        %2819 = vmatpush1.msra.mxu0 0.0
        %2820 = vmatprep.subr.mxu0 0.0
        %2821 = vmatpush1.msra.mxu0 0.0
        %2822 = vmatprep.subr.mxu0 0.0
        %2823 = vmatpush1.msra.mxu0 0.0
        %2824 = vmatprep.subr.mxu0 0.0
        %2825 = vmatpush1.msra.mxu0 0.0
        %2826 = vmatprep.subr.mxu0 0.0
        %2827 = vmatpush1.msra.mxu0 0.0
        %2828 = vmatprep.subr.mxu0 0.0
        %2829 = vmatpush1.msra.mxu0 0.0
        %2830 = vmatprep.subr.mxu0 0.0
        %2831 = vmatpush1.msra.mxu0 0.0
        %2832 = vmatprep.subr.mxu0 0.0
        %2833 = vmatpush1.msra.mxu0 0.0
        %2834 = vmatprep.subr.mxu0 0.0
        %2835 = vmatpush1.msra.mxu0 0.0
        %2836 = vmatprep.subr.mxu0 0.0
        %2837 = vmatpush1.msra.mxu0 0.0
        %2838 = vmatprep.subr.mxu0 0.0
        %2839 = vmatpush1.msra.mxu0 0.0
        %2840 = vmatprep.subr.mxu0 0.0
        %2841 = vmatpush1.msra.mxu0 0.0
        %2842 = vmatprep.subr.mxu0 0.0
        %2843 = vmatpush1.msra.mxu0 0.0
        %2844 = vmatprep.subr.mxu0 0.0
        %2845 = vmatpush1.msra.mxu0 0.0
        %2846 = vmatprep.subr.mxu0 0.0
        %2847 = vmatpush1.msra.mxu0 0.0
        %2848 = vmatprep.subr.mxu0 0.0
        %2849 = vmatpush1.msra.mxu0 0.0
        %2850 = vmatprep.subr.mxu0 0.0
        %2851 = vmatpush1.msra.mxu0 0.0
        %2852 = vmatprep.subr.mxu0 0.0
        %2853 = vmatpush1.msra.mxu0 0.0
        %2854 = vmatprep.subr.mxu0 0.0
        %2855 = vmatpush1.msra.mxu0 0.0
        %2856 = vmatprep.subr.mxu0 0.0
        %2857 = vmatpush1.msra.mxu0 0.0
        %2858 = vmatprep.subr.mxu0 0.0
        %2859 = vmatpush1.msra.mxu0 0.0
        %2860 = vmatprep.subr.mxu0 0.0
        %2861 = vmatpush1.msra.mxu0 0.0
        %2862 = vmatprep.subr.mxu0 0.0
        %2863 = vmatpush1.msra.mxu0 0.0
        %2864 = vmatprep.subr.mxu0 0.0
        %2865 = vmatpush1.msra.mxu0 0.0
        %2866 = vmatprep.subr.mxu0 0.0
        %2867 = vmatpush1.msra.mxu0 0.0
        %2868 = vmatprep.subr.mxu0 0.0
        %2869 = vmatpush1.msra.mxu0 0.0
        %2870 = vmatprep.subr.mxu0 0.0
        %2871 = vmatpush1.msra.mxu0 0.0
        %2872 = vmatprep.subr.mxu0 0.0
        %2873 = vmatpush1.msra.mxu0 0.0
        %2874 = vmatprep.subr.mxu0 0.0
        %2875 = vmatpush1.msra.mxu0 0.0
        %2876 = vmatprep.mubr.f32.mxu0 0.0
        %2877 = vmatmul.mubr.f32.gmra.mrb[0].mxu0 %v2810
        %v2878 = vpop.f32.mrb[0].mxu0
        %v2879 = vadd.f32 0.0, %v2878
        %v2880 = vpop.f32.mrb[0].mxu0
        %2881 = vdwg.mxu0
        %v2883 = vsel %vm1479, %v1652, 0
        %2885 = vmatprep.subr.mxu0 0.0
        %2886 = vmatpush1.msra.mxu0 %v301
        %2887 = vmatprep.subr.mxu0 0.0
        %2888 = vmatpush1.msra.mxu0 %v302
        %2889 = vmatprep.subr.mxu0 0.0
        %2890 = vmatpush1.msra.mxu0 0.0
        %2891 = vmatprep.subr.mxu0 0.0
        %2892 = vmatpush1.msra.mxu0 0.0
        %2893 = vmatprep.subr.mxu0 0.0
        %2894 = vmatpush1.msra.mxu0 0.0
        %2895 = vmatprep.subr.mxu0 0.0
        %2896 = vmatpush1.msra.mxu0 0.0
        %2897 = vmatprep.subr.mxu0 0.0
        %2898 = vmatpush1.msra.mxu0 0.0
        %2899 = vmatprep.subr.mxu0 0.0
        %2900 = vmatpush1.msra.mxu0 0.0
        %2901 = vmatprep.subr.mxu0 0.0
        %2902 = vmatpush1.msra.mxu0 0.0
        %2903 = vmatprep.subr.mxu0 0.0
        %2904 = vmatpush1.msra.mxu0 0.0
        %2905 = vmatprep.subr.mxu0 0.0
        %2906 = vmatpush1.msra.mxu0 0.0
        %2907 = vmatprep.subr.mxu0 0.0
        %2908 = vmatpush1.msra.mxu0 0.0
        %2909 = vmatprep.subr.mxu0 0.0
        %2910 = vmatpush1.msra.mxu0 0.0
        %2911 = vmatprep.subr.mxu0 0.0
        %2912 = vmatpush1.msra.mxu0 0.0
        %2913 = vmatprep.subr.mxu0 0.0
        %2914 = vmatpush1.msra.mxu0 0.0
        %2915 = vmatprep.subr.mxu0 0.0
        %2916 = vmatpush1.msra.mxu0 0.0
        %2917 = vmatprep.subr.mxu0 0.0
        %2918 = vmatpush1.msra.mxu0 0.0
        %2919 = vmatprep.subr.mxu0 0.0
        %2920 = vmatpush1.msra.mxu0 0.0
        %2921 = vmatprep.subr.mxu0 0.0
        %2922 = vmatpush1.msra.mxu0 0.0
        %2923 = vmatprep.subr.mxu0 0.0
        %2924 = vmatpush1.msra.mxu0 0.0
        %2925 = vmatprep.subr.mxu0 0.0
        %2926 = vmatpush1.msra.mxu0 0.0
        %2927 = vmatprep.subr.mxu0 0.0
        %2928 = vmatpush1.msra.mxu0 0.0
        %2929 = vmatprep.subr.mxu0 0.0
        %2930 = vmatpush1.msra.mxu0 0.0
        %2931 = vmatprep.subr.mxu0 0.0
        %2932 = vmatpush1.msra.mxu0 0.0
        %2933 = vmatprep.subr.mxu0 0.0
        %2934 = vmatpush1.msra.mxu0 0.0
        %2935 = vmatprep.subr.mxu0 0.0
        %2936 = vmatpush1.msra.mxu0 0.0
        %2937 = vmatprep.subr.mxu0 0.0
        %2938 = vmatpush1.msra.mxu0 0.0
        %2939 = vmatprep.subr.mxu0 0.0
        %2940 = vmatpush1.msra.mxu0 0.0
        %2941 = vmatprep.subr.mxu0 0.0
        %2942 = vmatpush1.msra.mxu0 0.0
        %2943 = vmatprep.subr.mxu0 0.0
        %2944 = vmatpush1.msra.mxu0 0.0
        %2945 = vmatprep.subr.mxu0 0.0
        %2946 = vmatpush1.msra.mxu0 0.0
        %2947 = vmatprep.subr.mxu0 0.0
        %2948 = vmatpush1.msra.mxu0 0.0
        %2949 = vmatprep.mubr.f32.mxu0 0.0
        %2950 = vmatmul.mubr.f32.gmra.mrb[0].mxu0 %v2883
        %v2951 = vpop.f32.mrb[0].mxu0
        %v2952 = vadd.f32 0.0, %v2951
        %v2953 = vpop.f32.mrb[0].mxu0
        %2954 = vdwg.mxu0
        %v2956 = vsel %vm1479, %v1653, 0
        %2958 = vmatprep.subr.mxu0 0.0
        %2959 = vmatpush1.msra.mxu0 %v303
        %2960 = vmatprep.subr.mxu0 0.0
        %2961 = vmatpush1.msra.mxu0 %v304
        %2962 = vmatprep.subr.mxu0 0.0
        %2963 = vmatpush1.msra.mxu0 0.0
        %2964 = vmatprep.subr.mxu0 0.0
        %2965 = vmatpush1.msra.mxu0 0.0
        %2966 = vmatprep.subr.mxu0 0.0
        %2967 = vmatpush1.msra.mxu0 0.0
        %2968 = vmatprep.subr.mxu0 0.0
        %2969 = vmatpush1.msra.mxu0 0.0
        %2970 = vmatprep.subr.mxu0 0.0
        %2971 = vmatpush1.msra.mxu0 0.0
        %2972 = vmatprep.subr.mxu0 0.0
        %2973 = vmatpush1.msra.mxu0 0.0
        %2974 = vmatprep.subr.mxu0 0.0
        %2975 = vmatpush1.msra.mxu0 0.0
        %2976 = vmatprep.subr.mxu0 0.0
        %2977 = vmatpush1.msra.mxu0 0.0
        %2978 = vmatprep.subr.mxu0 0.0
        %2979 = vmatpush1.msra.mxu0 0.0
        %2980 = vmatprep.subr.mxu0 0.0
        %2981 = vmatpush1.msra.mxu0 0.0
        %2982 = vmatprep.subr.mxu0 0.0
        %2983 = vmatpush1.msra.mxu0 0.0
        %2984 = vmatprep.subr.mxu0 0.0
        %2985 = vmatpush1.msra.mxu0 0.0
        %2986 = vmatprep.subr.mxu0 0.0
        %2987 = vmatpush1.msra.mxu0 0.0
        %2988 = vmatprep.subr.mxu0 0.0
        %2989 = vmatpush1.msra.mxu0 0.0
        %2990 = vmatprep.subr.mxu0 0.0
        %2991 = vmatpush1.msra.mxu0 0.0
        %2992 = vmatprep.subr.mxu0 0.0
        %2993 = vmatpush1.msra.mxu0 0.0
        %2994 = vmatprep.subr.mxu0 0.0
        %2995 = vmatpush1.msra.mxu0 0.0
        %2996 = vmatprep.subr.mxu0 0.0
        %2997 = vmatpush1.msra.mxu0 0.0
        %2998 = vmatprep.subr.mxu0 0.0
        %2999 = vmatpush1.msra.mxu0 0.0
        %3000 = vmatprep.subr.mxu0 0.0
        %3001 = vmatpush1.msra.mxu0 0.0
        %3002 = vmatprep.subr.mxu0 0.0
        %3003 = vmatpush1.msra.mxu0 0.0
        %3004 = vmatprep.subr.mxu0 0.0
        %3005 = vmatpush1.msra.mxu0 0.0
        %3006 = vmatprep.subr.mxu0 0.0
        %3007 = vmatpush1.msra.mxu0 0.0
        %3008 = vmatprep.subr.mxu0 0.0
        %3009 = vmatpush1.msra.mxu0 0.0
        %3010 = vmatprep.subr.mxu0 0.0
        %3011 = vmatpush1.msra.mxu0 0.0
        %3012 = vmatprep.subr.mxu0 0.0
        %3013 = vmatpush1.msra.mxu0 0.0
        %3014 = vmatprep.subr.mxu0 0.0
        %3015 = vmatpush1.msra.mxu0 0.0
        %3016 = vmatprep.subr.mxu0 0.0
        %3017 = vmatpush1.msra.mxu0 0.0
        %3018 = vmatprep.subr.mxu0 0.0
        %3019 = vmatpush1.msra.mxu0 0.0
        %3020 = vmatprep.subr.mxu0 0.0
        %3021 = vmatpush1.msra.mxu0 0.0
        %3022 = vmatprep.mubr.f32.mxu0 0.0
        %3023 = vmatmul.mubr.f32.gmra.mrb[0].mxu0 %v2956
        %v3024 = vpop.f32.mrb[0].mxu0
        %v3025 = vadd.f32 0.0, %v3024
        %v3026 = vpop.f32.mrb[0].mxu0
        %3027 = vdwg.mxu0
        %v3029 = vsel %vm1479, %v1654, 0
        %3031 = vmatprep.subr.mxu0 0.0
        %3032 = vmatpush1.msra.mxu0 %v305
        %3033 = vmatprep.subr.mxu0 0.0
        %3034 = vmatpush1.msra.mxu0 %v306
        %3035 = vmatprep.subr.mxu0 0.0
        %3036 = vmatpush1.msra.mxu0 0.0
        %3037 = vmatprep.subr.mxu0 0.0
        %3038 = vmatpush1.msra.mxu0 0.0
        %3039 = vmatprep.subr.mxu0 0.0
        %3040 = vmatpush1.msra.mxu0 0.0
        %3041 = vmatprep.subr.mxu0 0.0
        %3042 = vmatpush1.msra.mxu0 0.0
        %3043 = vmatprep.subr.mxu0 0.0
        %3044 = vmatpush1.msra.mxu0 0.0
        %3045 = vmatprep.subr.mxu0 0.0
        %3046 = vmatpush1.msra.mxu0 0.0
        %3047 = vmatprep.subr.mxu0 0.0
        %3048 = vmatpush1.msra.mxu0 0.0
        %3049 = vmatprep.subr.mxu0 0.0
        %3050 = vmatpush1.msra.mxu0 0.0
        %3051 = vmatprep.subr.mxu0 0.0
        %3052 = vmatpush1.msra.mxu0 0.0
        %3053 = vmatprep.subr.mxu0 0.0
        %3054 = vmatpush1.msra.mxu0 0.0
        %3055 = vmatprep.subr.mxu0 0.0
        %3056 = vmatpush1.msra.mxu0 0.0
        %3057 = vmatprep.subr.mxu0 0.0
        %3058 = vmatpush1.msra.mxu0 0.0
        %3059 = vmatprep.subr.mxu0 0.0
        %3060 = vmatpush1.msra.mxu0 0.0
        %3061 = vmatprep.subr.mxu0 0.0
        %3062 = vmatpush1.msra.mxu0 0.0
        %3063 = vmatprep.subr.mxu0 0.0
        %3064 = vmatpush1.msra.mxu0 0.0
        %3065 = vmatprep.subr.mxu0 0.0
        %3066 = vmatpush1.msra.mxu0 0.0
        %3067 = vmatprep.subr.mxu0 0.0
        %3068 = vmatpush1.msra.mxu0 0.0
        %3069 = vmatprep.subr.mxu0 0.0
        %3070 = vmatpush1.msra.mxu0 0.0
        %3071 = vmatprep.subr.mxu0 0.0
        %3072 = vmatpush1.msra.mxu0 0.0
        %3073 = vmatprep.subr.mxu0 0.0
        %3074 = vmatpush1.msra.mxu0 0.0
        %3075 = vmatprep.subr.mxu0 0.0
        %3076 = vmatpush1.msra.mxu0 0.0
        %3077 = vmatprep.subr.mxu0 0.0
        %3078 = vmatpush1.msra.mxu0 0.0
        %3079 = vmatprep.subr.mxu0 0.0
        %3080 = vmatpush1.msra.mxu0 0.0
        %3081 = vmatprep.subr.mxu0 0.0
        %3082 = vmatpush1.msra.mxu0 0.0
        %3083 = vmatprep.subr.mxu0 0.0
        %3084 = vmatpush1.msra.mxu0 0.0
        %3085 = vmatprep.subr.mxu0 0.0
        %3086 = vmatpush1.msra.mxu0 0.0
        %3087 = vmatprep.subr.mxu0 0.0
        %3088 = vmatpush1.msra.mxu0 0.0
        %3089 = vmatprep.subr.mxu0 0.0
        %3090 = vmatpush1.msra.mxu0 0.0
        %3091 = vmatprep.subr.mxu0 0.0
        %3092 = vmatpush1.msra.mxu0 0.0
        %3093 = vmatprep.subr.mxu0 0.0
        %3094 = vmatpush1.msra.mxu0 0.0
        %3095 = vmatprep.mubr.f32.mxu0 0.0
        %3096 = vmatmul.mubr.f32.gmra.mrb[0].mxu0 %v3029
        %v3097 = vpop.f32.mrb[0].mxu0
        %v3098 = vadd.f32 0.0, %v3097
        %v3099 = vpop.f32.mrb[0].mxu0
        %3100 = vdwg.mxu0
        %v3102 = vsel %vm1479, %v1655, 0
        %3104 = vmatprep.subr.mxu0 0.0
        %3105 = vmatpush1.msra.mxu0 %v307
        %3106 = vmatprep.subr.mxu0 0.0
        %3107 = vmatpush1.msra.mxu0 %v308
        %3108 = vmatprep.subr.mxu0 0.0
        %3109 = vmatpush1.msra.mxu0 0.0
        %3110 = vmatprep.subr.mxu0 0.0
        %3111 = vmatpush1.msra.mxu0 0.0
        %3112 = vmatprep.subr.mxu0 0.0
        %3113 = vmatpush1.msra.mxu0 0.0
        %3114 = vmatprep.subr.mxu0 0.0
        %3115 = vmatpush1.msra.mxu0 0.0
        %3116 = vmatprep.subr.mxu0 0.0
        %3117 = vmatpush1.msra.mxu0 0.0
        %3118 = vmatprep.subr.mxu0 0.0
        %3119 = vmatpush1.msra.mxu0 0.0
        %3120 = vmatprep.subr.mxu0 0.0
        %3121 = vmatpush1.msra.mxu0 0.0
        %3122 = vmatprep.subr.mxu0 0.0
        %3123 = vmatpush1.msra.mxu0 0.0
        %3124 = vmatprep.subr.mxu0 0.0
        %3125 = vmatpush1.msra.mxu0 0.0
        %3126 = vmatprep.subr.mxu0 0.0
        %3127 = vmatpush1.msra.mxu0 0.0
        %3128 = vmatprep.subr.mxu0 0.0
        %3129 = vmatpush1.msra.mxu0 0.0
        %3130 = vmatprep.subr.mxu0 0.0
        %3131 = vmatpush1.msra.mxu0 0.0
        %3132 = vmatprep.subr.mxu0 0.0
        %3133 = vmatpush1.msra.mxu0 0.0
        %3134 = vmatprep.subr.mxu0 0.0
        %3135 = vmatpush1.msra.mxu0 0.0
        %3136 = vmatprep.subr.mxu0 0.0
        %3137 = vmatpush1.msra.mxu0 0.0
        %3138 = vmatprep.subr.mxu0 0.0
        %3139 = vmatpush1.msra.mxu0 0.0
        %3140 = vmatprep.subr.mxu0 0.0
        %3141 = vmatpush1.msra.mxu0 0.0
        %3142 = vmatprep.subr.mxu0 0.0
        %3143 = vmatpush1.msra.mxu0 0.0
        %3144 = vmatprep.subr.mxu0 0.0
        %3145 = vmatpush1.msra.mxu0 0.0
        %3146 = vmatprep.subr.mxu0 0.0
        %3147 = vmatpush1.msra.mxu0 0.0
        %3148 = vmatprep.subr.mxu0 0.0
        %3149 = vmatpush1.msra.mxu0 0.0
        %3150 = vmatprep.subr.mxu0 0.0
        %3151 = vmatpush1.msra.mxu0 0.0
        %3152 = vmatprep.subr.mxu0 0.0
        %3153 = vmatpush1.msra.mxu0 0.0
        %3154 = vmatprep.subr.mxu0 0.0
        %3155 = vmatpush1.msra.mxu0 0.0
        %3156 = vmatprep.subr.mxu0 0.0
        %3157 = vmatpush1.msra.mxu0 0.0
        %3158 = vmatprep.subr.mxu0 0.0
        %3159 = vmatpush1.msra.mxu0 0.0
        %3160 = vmatprep.subr.mxu0 0.0
        %3161 = vmatpush1.msra.mxu0 0.0
        %3162 = vmatprep.subr.mxu0 0.0
        %3163 = vmatpush1.msra.mxu0 0.0
        %3164 = vmatprep.subr.mxu0 0.0
        %3165 = vmatpush1.msra.mxu0 0.0
        %3166 = vmatprep.subr.mxu0 0.0
        %3167 = vmatpush1.msra.mxu0 0.0
        %3168 = vmatprep.mubr.f32.mxu0 0.0
        %3169 = vmatmul.mubr.f32.gmra.mrb[0].mxu0 %v3102
        %v3170 = vpop.f32.mrb[0].mxu0
        %v3171 = vadd.f32 0.0, %v3170
        %v3172 = vpop.f32.mrb[0].mxu0
        %3173 = vdwg.mxu0
        %v3174 = vcombine.low %v2076, %v2222
        %v3175 = vcombine.high %v2076, %v2222
        %v3177 = vunpack.c.l.s4 1983009808
        %v3178 = vunpack.c.0.s8 %v3177
        %v3179 = vlaneseq
        %v3180 = vshrl.u32 %v3179, 7
        %v3181 = vsub.s32 %v3178, %v3180
        %v3182 = vrot.slane %v3174, %v3181
        %v3184 = vunpack.c.l.s4 1983009808
        %v3185 = vunpack.c.0.s8 %v3184
        %v3186 = vlaneseq
        %v3187 = vshrl.u32 %v3186, 7
        %v3188 = vsub.s32 %v3185, %v3187
        %v3189 = vrot.slane %v3175, %v3188
        %v3190 = vcombine.low %v2149, %v2295
        %v3191 = vcombine.high %v2149, %v2295
        %v3193 = vunpack.c.l.s4 1983009808
        %v3194 = vunpack.c.0.s8 %v3193
        %v3195 = vlaneseq
        %v3196 = vshrl.u32 %v3195, 7
        %v3197 = vsub.s32 %v3194, %v3196
        %v3198 = vrot.slane %v3190, %v3197
        %v3200 = vunpack.c.l.s4 1983009808
        %v3201 = vunpack.c.0.s8 %v3200
        %v3202 = vlaneseq
        %v3203 = vshrl.u32 %v3202, 7
        %v3204 = vsub.s32 %v3201, %v3203
        %v3205 = vrot.slane %v3191, %v3204
        %v3206 = vcombine.low %v2368, %v2514
        %v3207 = vcombine.high %v2368, %v2514
        %v3209 = vunpack.c.l.s4 1983009808
        %v3210 = vunpack.c.0.s8 %v3209
        %v3211 = vlaneseq
        %v3212 = vshrl.u32 %v3211, 7
        %v3213 = vsub.s32 %v3210, %v3212
        %v3214 = vrot.slane %v3206, %v3213
        %v3216 = vunpack.c.l.s4 1983009808
        %v3217 = vunpack.c.0.s8 %v3216
        %v3218 = vlaneseq
        %v3219 = vshrl.u32 %v3218, 7
        %v3220 = vsub.s32 %v3217, %v3219
        %v3221 = vrot.slane %v3207, %v3220
        %v3222 = vcombine.low %v2441, %v2587
        %v3223 = vcombine.high %v2441, %v2587
        %v3225 = vunpack.c.l.s4 1983009808
        %v3226 = vunpack.c.0.s8 %v3225
        %v3227 = vlaneseq
        %v3228 = vshrl.u32 %v3227, 7
        %v3229 = vsub.s32 %v3226, %v3228
        %v3230 = vrot.slane %v3222, %v3229
        %v3232 = vunpack.c.l.s4 1983009808
        %v3233 = vunpack.c.0.s8 %v3232
        %v3234 = vlaneseq
        %v3235 = vshrl.u32 %v3234, 7
        %v3236 = vsub.s32 %v3233, %v3235
        %v3237 = vrot.slane %v3223, %v3236
        %v3238 = vcombine.low %v3182, %v3198
        %v3239 = vcombine.high %v3182, %v3198
        %v3241 = vunpack.c.l.s4 1934713408
        %v3242 = vunpack.c.0.s8 %v3241
        %v3243 = vlaneseq
        %v3244 = vshrl.u32 %v3243, 7
        %v3245 = vsub.s32 %v3242, %v3244
        %v3246 = vrot.slane %v3238, %v3245
        %v3248 = vunpack.c.l.s4 1934713408
        %v3249 = vunpack.c.0.s8 %v3248
        %v3250 = vlaneseq
        %v3251 = vshrl.u32 %v3250, 7
        %v3252 = vsub.s32 %v3249, %v3251
        %v3253 = vrot.slane %v3239, %v3252
        %v3254 = vcombine.low %v3189, %v3205
        %v3255 = vcombine.high %v3189, %v3205
        %v3257 = vunpack.c.l.s4 1934713408
        %v3258 = vunpack.c.0.s8 %v3257
        %v3259 = vlaneseq
        %v3260 = vshrl.u32 %v3259, 7
        %v3261 = vsub.s32 %v3258, %v3260
        %v3262 = vrot.slane %v3254, %v3261
        %v3264 = vunpack.c.l.s4 1934713408
        %v3265 = vunpack.c.0.s8 %v3264
        %v3266 = vlaneseq
        %v3267 = vshrl.u32 %v3266, 7
        %v3268 = vsub.s32 %v3265, %v3267
        %v3269 = vrot.slane %v3255, %v3268
        %v3270 = vcombine.low %v3214, %v3230
        %v3271 = vcombine.high %v3214, %v3230
        %v3273 = vunpack.c.l.s4 1934713408
        %v3274 = vunpack.c.0.s8 %v3273
        %v3275 = vlaneseq
        %v3276 = vshrl.u32 %v3275, 7
        %v3277 = vsub.s32 %v3274, %v3276
        %v3278 = vrot.slane %v3270, %v3277
        %v3280 = vunpack.c.l.s4 1934713408
        %v3281 = vunpack.c.0.s8 %v3280
        %v3282 = vlaneseq
        %v3283 = vshrl.u32 %v3282, 7
        %v3284 = vsub.s32 %v3281, %v3283
        %v3285 = vrot.slane %v3271, %v3284
        %v3286 = vcombine.low %v3221, %v3237
        %v3287 = vcombine.high %v3221, %v3237
        %v3289 = vunpack.c.l.s4 1934713408
        %v3290 = vunpack.c.0.s8 %v3289
        %v3291 = vlaneseq
        %v3292 = vshrl.u32 %v3291, 7
        %v3293 = vsub.s32 %v3290, %v3292
        %v3294 = vrot.slane %v3286, %v3293
        %v3296 = vunpack.c.l.s4 1934713408
        %v3297 = vunpack.c.0.s8 %v3296
        %v3298 = vlaneseq
        %v3299 = vshrl.u32 %v3298, 7
        %v3300 = vsub.s32 %v3297, %v3299
        %v3301 = vrot.slane %v3287, %v3300
        %v3302 = vcombine.low %v3246, %v3278
        %v3303 = vcombine.high %v3246, %v3278
        %v3304 = vcombine.low %v3253, %v3285
        %v3305 = vcombine.high %v3253, %v3285
        %v3306 = vcombine.low %v3262, %v3294
        %v3307 = vcombine.high %v3262, %v3294
        %v3308 = vcombine.low %v3269, %v3301
        %v3309 = vcombine.high %v3269, %v3301
        %v3310 = vcombine.low %v2660, %v2806
        %v3311 = vcombine.high %v2660, %v2806
        %v3313 = vunpack.c.l.s4 1983009808
        %v3314 = vunpack.c.0.s8 %v3313
        %v3315 = vlaneseq
        %v3316 = vshrl.u32 %v3315, 7
        %v3317 = vsub.s32 %v3314, %v3316
        %v3318 = vrot.slane %v3310, %v3317
        %v3320 = vunpack.c.l.s4 1983009808
        %v3321 = vunpack.c.0.s8 %v3320
        %v3322 = vlaneseq
        %v3323 = vshrl.u32 %v3322, 7
        %v3324 = vsub.s32 %v3321, %v3323
        %v3325 = vrot.slane %v3311, %v3324
        %v3326 = vcombine.low %v2733, %v2879
        %v3327 = vcombine.high %v2733, %v2879
        %v3329 = vunpack.c.l.s4 1983009808
        %v3330 = vunpack.c.0.s8 %v3329
        %v3331 = vlaneseq
        %v3332 = vshrl.u32 %v3331, 7
        %v3333 = vsub.s32 %v3330, %v3332
        %v3334 = vrot.slane %v3326, %v3333
        %v3336 = vunpack.c.l.s4 1983009808
        %v3337 = vunpack.c.0.s8 %v3336
        %v3338 = vlaneseq
        %v3339 = vshrl.u32 %v3338, 7
        %v3340 = vsub.s32 %v3337, %v3339
        %v3341 = vrot.slane %v3327, %v3340
        %v3342 = vcombine.low %v2952, %v3098
        %v3343 = vcombine.high %v2952, %v3098
        %v3345 = vunpack.c.l.s4 1983009808
        %v3346 = vunpack.c.0.s8 %v3345
        %v3347 = vlaneseq
        %v3348 = vshrl.u32 %v3347, 7
        %v3349 = vsub.s32 %v3346, %v3348
        %v3350 = vrot.slane %v3342, %v3349
        %v3352 = vunpack.c.l.s4 1983009808
        %v3353 = vunpack.c.0.s8 %v3352
        %v3354 = vlaneseq
        %v3355 = vshrl.u32 %v3354, 7
        %v3356 = vsub.s32 %v3353, %v3355
        %v3357 = vrot.slane %v3343, %v3356
        %v3358 = vcombine.low %v3025, %v3171
        %v3359 = vcombine.high %v3025, %v3171
        %v3361 = vunpack.c.l.s4 1983009808
        %v3362 = vunpack.c.0.s8 %v3361
        %v3363 = vlaneseq
        %v3364 = vshrl.u32 %v3363, 7
        %v3365 = vsub.s32 %v3362, %v3364
        %v3366 = vrot.slane %v3358, %v3365
        %v3368 = vunpack.c.l.s4 1983009808
        %v3369 = vunpack.c.0.s8 %v3368
        %v3370 = vlaneseq
        %v3371 = vshrl.u32 %v3370, 7
        %v3372 = vsub.s32 %v3369, %v3371
        %v3373 = vrot.slane %v3359, %v3372
        %v3374 = vcombine.low %v3318, %v3334
        %v3375 = vcombine.high %v3318, %v3334
        %v3377 = vunpack.c.l.s4 1934713408
        %v3378 = vunpack.c.0.s8 %v3377
        %v3379 = vlaneseq
        %v3380 = vshrl.u32 %v3379, 7
        %v3381 = vsub.s32 %v3378, %v3380
        %v3382 = vrot.slane %v3374, %v3381
        %v3384 = vunpack.c.l.s4 1934713408
        %v3385 = vunpack.c.0.s8 %v3384
        %v3386 = vlaneseq
        %v3387 = vshrl.u32 %v3386, 7
        %v3388 = vsub.s32 %v3385, %v3387
        %v3389 = vrot.slane %v3375, %v3388
        %v3390 = vcombine.low %v3325, %v3341
        %v3391 = vcombine.high %v3325, %v3341
        %v3393 = vunpack.c.l.s4 1934713408
        %v3394 = vunpack.c.0.s8 %v3393
        %v3395 = vlaneseq
        %v3396 = vshrl.u32 %v3395, 7
        %v3397 = vsub.s32 %v3394, %v3396
        %v3398 = vrot.slane %v3390, %v3397
        %v3400 = vunpack.c.l.s4 1934713408
        %v3401 = vunpack.c.0.s8 %v3400
        %v3402 = vlaneseq
        %v3403 = vshrl.u32 %v3402, 7
        %v3404 = vsub.s32 %v3401, %v3403
        %v3405 = vrot.slane %v3391, %v3404
        %v3406 = vcombine.low %v3350, %v3366
        %v3407 = vcombine.high %v3350, %v3366
        %v3409 = vunpack.c.l.s4 1934713408
        %v3410 = vunpack.c.0.s8 %v3409
        %v3411 = vlaneseq
        %v3412 = vshrl.u32 %v3411, 7
        %v3413 = vsub.s32 %v3410, %v3412
        %v3414 = vrot.slane %v3406, %v3413
        %v3416 = vunpack.c.l.s4 1934713408
        %v3417 = vunpack.c.0.s8 %v3416
        %v3418 = vlaneseq
        %v3419 = vshrl.u32 %v3418, 7
        %v3420 = vsub.s32 %v3417, %v3419
        %v3421 = vrot.slane %v3407, %v3420
        %v3422 = vcombine.low %v3357, %v3373
        %v3423 = vcombine.high %v3357, %v3373
        %v3425 = vunpack.c.l.s4 1934713408
        %v3426 = vunpack.c.0.s8 %v3425
        %v3427 = vlaneseq
        %v3428 = vshrl.u32 %v3427, 7
        %v3429 = vsub.s32 %v3426, %v3428
        %v3430 = vrot.slane %v3422, %v3429
        %v3432 = vunpack.c.l.s4 1934713408
        %v3433 = vunpack.c.0.s8 %v3432
        %v3434 = vlaneseq
        %v3435 = vshrl.u32 %v3434, 7
        %v3436 = vsub.s32 %v3433, %v3435
        %v3437 = vrot.slane %v3423, %v3436
        %v3438 = vcombine.low %v3382, %v3414
        %v3439 = vcombine.high %v3382, %v3414
        %v3440 = vcombine.low %v3389, %v3421
        %v3441 = vcombine.high %v3389, %v3421
        %v3442 = vcombine.low %v3398, %v3430
        %v3443 = vcombine.high %v3398, %v3430
        %v3444 = vcombine.low %v3405, %v3437
        %v3445 = vcombine.high %v3405, %v3437
        %3446 = vst [vmem:[%s261] sm:$0xff] %v3302
        %3447 = vst [vmem:[%s261 + $0x8] sm:$0xff] %v3303
        %3448 = vst [vmem:[%s261 + $0x10] sm:$0xff] %v3304
        %3449 = vst [vmem:[%s261 + $0x18] sm:$0xff] %v3305
        %3450 = vst [vmem:[%s261 + $0x20] sm:$0xff] %v3306
        %3451 = vst [vmem:[%s261 + $0x28] sm:$0xff] %v3307
        %3452 = vst [vmem:[%s261 + $0x30] sm:$0xff] %v3308
        %3453 = vst [vmem:[%s261 + $0x38] sm:$0xff] %v3309
        %3454 = vst [vmem:[%s261 + $0x40] sm:$0xff] %v3438
        %3455 = vst [vmem:[%s261 + $0x48] sm:$0xff] %v3439
        %3456 = vst [vmem:[%s261 + $0x50] sm:$0xff] %v3440
        %3457 = vst [vmem:[%s261 + $0x58] sm:$0xff] %v3441
        %3458 = vst [vmem:[%s261 + $0x60] sm:$0xff] %v3442
        %3459 = vst [vmem:[%s261 + $0x68] sm:$0xff] %v3443
        %3460 = vst [vmem:[%s261 + $0x70] sm:$0xff] %v3444
        %3461 = vst [vmem:[%s261 + $0x78] sm:$0xff] %v3445
        %s3462 = sand.u32 %s128, 1
        %s3463 = scalar_lea.sflag [#allocation4], %s3462
        %s3464 = sand.u32 %s128, 1
        %s3465 = smul.addr %s3464, 128
        %s3466 = scalar_lea.vmem [#allocation5], %s3465
        %s3467 = sand.u32 %s154, 1
        %s3468 = scalar_lea.sflag [#allocation7], %s3467
        %s3469 = sand.u32 %s154, 1
        %s3470 = smul.addr %s3469, 16
        %s3471 = scalar_lea.vmem [#allocation6], %s3470
        // Predicated region
        $region41: #{tpu_custom_call.1} parent=35 // pred_check
          %p3472 = pneg %p138
        $region42: #{tpu_custom_call.1} parent=35 // pred_check_branch
          %3474 = sbr.rel (%p3472) target = $region44
        $region43: #{tpu_custom_call.1} parent=35 // pred_region
          %s3475 = smul.u32 2, %s26
          %s3477 = ssub.s32 2048, 2048
          %3478 = vsyncadd %s3463, %s3477
          %s3479 = smul.addr %s3475, 8
          %s3480 = smul.addr %s3479, 128
          %s3481 = scalar_lea.hbm %s4, %s3480
          %s3482 = sshll.u32 %s3466, 4
          %s3483 = int_to_ptr.vmem [resolvable:$true] %s3482
          %3488 = dma.vmem_to_hbm [thread:$0]  %s3483, 2048, %s3481, %s3463, 1024, 1024, 64
        $region44: #{tpu_custom_call.1} parent=35 // pred_fallthru
          _
        // Predicated region
        $region45: #{tpu_custom_call.1} parent=35 // pred_check
          %p3489 = pneg %p164
        $region46: #{tpu_custom_call.1} parent=35 // pred_check_branch
          %3491 = sbr.rel (%p3489) target = $region48
        $region47: #{tpu_custom_call.1} parent=35 // pred_region
          %s3492 = smul.u32 2, %s26
          %s3494 = ssub.s32 256, 256
          %3495 = vsyncadd %s3468, %s3494
          %s3496 = smul.addr %s3492, 128
          %s3497 = scalar_lea.hbm %s5, %s3496
          %s3498 = sshll.u32 %s3471, 4
          %s3499 = int_to_ptr.vmem [resolvable:$true] %s3498
          %3504 = dma.vmem_to_hbm [thread:$0]  %s3499, 256, %s3497, %s3468, 128, 128, 8
        $region48: #{tpu_custom_call.1} parent=35 // pred_fallthru
          _
      $region36: #{tpu_custom_call.1} parent=5 // pred_fallthru
        _
      %p3505 = scmp.le.s32.totalorder 2, %s21
      // Predicated region
      $region49: #{tpu_custom_call.1} parent=5 // pred_check
        %p3506 = pneg %p3505
      $region50: #{tpu_custom_call.1} parent=5 // pred_check_branch
        %3508 = sbr.rel (%p3506) target = $region52
      $region51: #{tpu_custom_call.1} parent=5 // pred_region
        %s3509 = ssub.s32 %s21, 2
        // Predicated region
        $region53: #{tpu_custom_call.1} parent=51 // pred_check
          %p3510 = pneg %p144
        $region54: #{tpu_custom_call.1} parent=51 // pred_check_branch
          %3512 = sbr.rel (%p3510) target = $region56
        $region55: #{tpu_custom_call.1} parent=51 // pred_region
          %s3513 = sand.u32 %s129, 1
          %s3514 = scalar_lea.sflag [#allocation4], %s3513
          %s3515 = sand.u32 %s129, 1
          %s3516 = smul.addr %s3515, 128
          %s3517 = scalar_lea.vmem [#allocation5], %s3516
          %3518 = dma.done %s3514, 2048
        $region56: #{tpu_custom_call.1} parent=51 // pred_fallthru
          _
        // Predicated region
        $region57: #{tpu_custom_call.1} parent=51 // pred_check
          %p3519 = pneg %p170
        $region58: #{tpu_custom_call.1} parent=51 // pred_check_branch
          %3521 = sbr.rel (%p3519) target = $region60
        $region59: #{tpu_custom_call.1} parent=51 // pred_region
          %s3522 = sand.u32 %s155, 1
          %s3523 = scalar_lea.sflag [#allocation7], %s3522
          %s3524 = sand.u32 %s155, 1
          %s3525 = smul.addr %s3524, 16
          %s3526 = scalar_lea.vmem [#allocation6], %s3525
          %3527 = dma.done %s3523, 256
        $region60: #{tpu_custom_call.1} parent=51 // pred_fallthru
          _
      $region52: #{tpu_custom_call.1} parent=5 // pred_fallthru
        _
    $region6: #{tpu_custom_call.1} parent=1 // loop_footer
      %s25 = sadd.s32 1, %s21
    $region7: #{tpu_custom_call.1} parent=1 // loop_footer_branch
      %20 = sbr.rel target = $region3
    $region8: #{tpu_custom_call.1} parent=1 // loop_exit
      _
    %3528 = vsyncpa [#allocation3], 1
    %s3529 = scalar_lea.sflag [#allocation3], 1
    %3530 = vsyncpa %s3529, 1
    %3531 = vsyncpa [#allocation4], 1
    %s3532 = scalar_lea.sflag [#allocation4], 1
    %3533 = vsyncpa %s3532, 1
    %3534 = vsyncpa [#allocation7], 1
    %s3535 = scalar_lea.sflag [#allocation7], 1
    %3536 = vsyncpa %s3535, 1

</llo_original>
